<compile_context>
chip_gen: v6e
topology: v6e:2x2x1
jax: 0.10.0
libtpu: 0.0.40
codegen_flags: <defaults>
</compile_context>

<pallas_src>
import functools

import jax
import jax.numpy as jnp
from jax import lax
from jax.experimental import pallas as pl
from jax.experimental.pallas import tpu as pltpu

_TAPS = tuple((dy, dx) for dy in (-1, 0, 1) for dx in (-1, 0, 1))
_SUBLANE = {4: 8, 2: 16, 1: 32}  # itemsize -> sublane packing


def _round_up(x, m):
    return (x + m - 1) // m * m


def _shift_flat(x, s, allow_roll):
    """y[..., p] ~= x[..., p + s] for a static int s.

    Positions whose source lies outside [0, P) hold either the wrapped value
    (roll path) or zero (zero-fill path).  Both are equally correct here: every
    such position is either masked by the width-boundary masks or lives in the
    sacrificial first/last window row that the kernel never consumes.
    """
    if s == 0:
        return x
    P = x.shape[-1]
    if allow_roll and P % 128 == 0:
        # XLU rotate: frees the vld/vst + VALU work of the zero-fill shift.
        return pltpu.roll(x, (-s) % P, x.ndim - 1)
    pad = jnp.zeros(x.shape[:-1] + (abs(s),), x.dtype)
    if s > 0:
        return jnp.concatenate([x[..., s:], pad], axis=-1)
    return jnp.concatenate([pad, x[..., :P + s]], axis=-1)


def _conv3x3(x_f32, w_ref, W, mask_l, mask_r, *, im2col, compute_dtype, allow_roll):
    """3x3 same-padding conv on a flattened (rows * W) window.

    x_f32 : (C_in, win) f32,  win = (R + 4) * W
    w_ref : (C_out, 9*C_in) if im2col else (9, C_out, C_in)   [compute_dtype]
    Returns (C_out, win) f32.  Window rows 0 and R+3 of the result are garbage
    (their taps read outside the window) and must never be consumed.
    """
    rows = []
    acc = None
    for t, (dy, dx) in enumerate(_TAPS):
        sh = _shift_flat(x_f32, dy * W + dx, allow_roll)
        if dx == -1:
            sh = jnp.where(mask_l, sh, 0.0)
        elif dx == 1:
            sh = jnp.where(mask_r, sh, 0.0)
        if im2col:
            rows.append(sh)
        else:
            y = jnp.dot(w_ref[t], sh.astype(compute_dtype),
                        preferred_element_type=jnp.float32)
            acc = y if acc is None else acc + y
    if im2col:
        pat = jnp.concatenate(rows, axis=0).astype(compute_dtype)   # (9*C_in, win)
        return jnp.dot(w_ref[...], pat, preferred_element_type=jnp.float32)
    return acc


def _double_conv_kernel(xu_ref, xc_ref, xd_ref, w1_ref, b1_ref, w2_ref, b2_ref,
                        o_ref, *, W, R, conv1_im2col, conv2_im2col,
                        compute_dtype, allow_roll):
    """One (image, row-tile) pair per grid step.

    xu/xc/xd_ref : (Cin_p, R*W)  previous / current / next row block of the image
    w1_ref       : (Cout, 9*Cin_p) or (9, Cout, Cin_p)   BN scale folded in
    b1_ref       : (Cout, 1) f32 folded bias
    w2_ref, b2_ref : same for conv2
    o_ref        : (Cout, R*W)
    """
    win = (R + 4) * W
    r = pl.program_id(1)
    nr = pl.num_programs(1)
    is_first = r == 0
    is_last = r == nr - 1

    # Flat-position helpers (hoisted; shared by both convs).
    pos = lax.broadcasted_iota(jnp.int32, (1, win), 1)
    col = pos % W
    mask_l = col >= 1           # dx = -1 tap reads column w-1 -> invalid at w == 0
    mask_r = col <= W - 2       # dx = +1 tap reads column w+1 -> invalid at w == W-1
    # h1 rows that lie outside the image (conv2's zero padding) must be forced to 0:
    # window row 1  == image row r*R - 1 (only outside when this is the first tile),
    # window row R+2 == image row r*R + R (only outside when this is the last tile).
    top_pad = (pos >= W) & (pos < 2 * W)
    bot_pad = (pos >= (R + 2) * W) & (pos < (R + 3) * W)
    kill = (is_first & top_pad) | (is_last & bot_pad)

    # Assemble the (R+4)-row input window: 2-row halos from the neighbouring row
    # blocks, zeroed at the image top / bottom (conv1's zero padding).
    f32 = jnp.float32
    top = xu_ref[:, pl.ds((R - 2) * W, 2 * W)].astype(f32)
    bot = xd_ref[:, pl.ds(0, 2 * W)].astype(f32)
    top = jnp.where(is_first, 0.0, top)
    bot = jnp.where(is_last, 0.0, bot)
    xw = jnp.concatenate([top, xc_ref[...].astype(f32), bot], axis=-1)   # (Cin_p, win)

    # ---- conv1 (BN scale folded into weights) -> +bias -> ReLU --------------
    y1 = _conv3x3(xw, w1_ref, W, mask_l, mask_r, im2col=conv1_im2col,
                  compute_dtype=compute_dtype, allow_roll=allow_roll)
    h1 = jnp.maximum(y1 + b1_ref[...], 0.0)
    h1 = jnp.where(kill, 0.0, h1)            # conv2's zero padding rows

    # ---- conv2 -> +bias -> ReLU; window rows 2 .. R+1 are the output rows ----
    y2 = _conv3x3(h1, w2_ref, W, mask_l, mask_r, im2col=conv2_im2col,
                  compute_dtype=compute_dtype, allow_roll=allow_roll)
    out = jnp.maximum(y2 + b2_ref[...], 0.0)
    o_ref[...] = out[:, 2 * W:(R + 2) * W].astype(o_ref.dtype)


def _vmem_capacity_bytes():
    try:
        cap = getattr(pltpu.get_tpu_info(), "vmem_capacity_bytes", None)
        if cap:
            return int(cap)
    except Exception:
        pass
    return 64 * 1024 * 1024   # v7x per-TensorCore VMEM; safe lower bound


def _estimate_vmem_bytes(Cin_p, Cout, W, R, csz, osz, c1_im2col, c2_im2col):
    win = (R + 4) * W
    f32 = 4
    blocks = 2 * (3 * Cin_p * R * W * csz + Cout * R * W * osz)   # double-buffered I/O
    weights = 2 * 9 * (Cin_p + Cout) * Cout * csz + 4 * Cout * f32
    xw = Cin_p * win * f32
    c1 = 9 * Cin_p * win * (f32 + csz) if c1_im2col else (Cin_p + Cout) * win * f32
    c2 = 9 * Cout * win * (f32 + csz) if c2_im2col else 2 * Cout * win * f32
    h1 = Cout * win * f32
    tail = Cout * win * f32
    return blocks + weights + xw + h1 + tail + max(c1, c2)


def _pick_row_block(H, W, est_fn, budget):
    cands = [d for d in range(H, 1, -1)
             if H % d == 0 and (d == H or (d * W) % 128 == 0)]
    if not cands:
        cands = [H]
    for d in cands:
        if est_fn(d) <= budget:
            return d
    return cands[-1]


def double_conv_pallas(x_nchw, params, *, compute_dtype=jnp.bfloat16,
                       out_dtype=jnp.float32, row_block=None,
                       im2col_max_channels=32, allow_roll=True,
                       vmem_budget_frac=0.6):
    """Fused DoubleConv forward.  x_nchw: (B, Cin, H, W); returns (B, Cout, H, W)."""
    (w1, cb1, g1, be1, m1, v1, w2, cb2, g2, be2, m2, v2) = params
    eps = 1e-5
    B, Cin, H, W = x_nchw.shape
    Cout = w1.shape[0]
    assert H >= 2, "H >= 2 required"

    csz = jnp.dtype(compute_dtype).itemsize
    osz = jnp.dtype(out_dtype).itemsize
    Cin_p = _round_up(Cin, _SUBLANE.get(csz, 8))

    conv1_im2col = Cin_p <= im2col_max_channels
    conv2_im2col = Cout <= im2col_max_channels

    cap = _vmem_capacity_bytes()
    est = lambda rb: _estimate_vmem_bytes(Cin_p, Cout, W, rb, csz, osz,
                                          conv1_im2col, conv2_im2col)
    if row_block is None:
        row_block = _pick_row_block(H, W, est, int(cap * vmem_budget_frac))
    if (H % row_block) or row_block < 2 or not (row_block == H or (row_block * W) % 128 == 0):
        raise ValueError(f"invalid row_block={row_block} for H={H}, W={W}")
    R = row_block
    nr = H // R
    vmem_limit = int(min(0.9 * cap, max(2 * est(R), 32 * 2 ** 20)))

    # ---- parameter folding (f32), weight layout, channel padding -------------
    s1 = g1 / jnp.sqrt(v1 + eps)
    s2 = g2 / jnp.sqrt(v2 + eps)
    b1 = ((cb1 - m1) * s1 + be1).astype(jnp.float32).reshape(Cout, 1)
    b2 = ((cb2 - m2) * s2 + be2).astype(jnp.float32).reshape(Cout, 1)
    w1f = (w1 * s1[:, None, None, None]).astype(jnp.float32)   # BN scale folded in
    w2f = (w2 * s2[:, None, None, None]).astype(jnp.float32)
    if Cin_p != Cin:
        w1f = jnp.pad(w1f, ((0, 0), (0, Cin_p - Cin), (0, 0), (0, 0)))

    def prep(wf, im2col):
        if im2col:   # (Cout, 9*Cin) with K ordered (tap, channel)
            return jnp.transpose(wf, (0, 2, 3, 1)).reshape(wf.shape[0], -1).astype(compute_dtype)
        return jnp.transpose(wf, (2, 3, 0, 1)).reshape(9, wf.shape[0], wf.shape[1]).astype(compute_dtype)

    w1m = prep(w1f, conv1_im2col)
    w2m = prep(w2f, conv2_im2col)

    x = x_nchw.reshape(B, Cin, H * W)
    if Cin_p != Cin:
        x = jnp.pad(x, ((0, 0), (0, Cin_p - Cin), (0, 0)))
    x = x.astype(compute_dtype)

    kernel = functools.partial(
        _double_conv_kernel, W=W, R=R, conv1_im2col=conv1_im2col,
        conv2_im2col=conv2_im2col, compute_dtype=compute_dtype,
        allow_roll=allow_roll)

    xblk = (None, Cin_p, R * W)
    up = lambda b, r: (b, 0, jnp.maximum(r - 1, 0))
    ce = lambda b, r: (b, 0, r)
    dn = lambda b, r: (b, 0, jnp.minimum(r + 1, nr - 1))

    def full(shape):
        return pl.BlockSpec(shape, lambda b, r: (0,) * len(shape))

    out = pl.pallas_call(
        kernel,
        out_shape=jax.ShapeDtypeStruct((B, Cout, H * W), out_dtype),
        grid=(B, nr),
        in_specs=[
            pl.BlockSpec(xblk, up),      # previous row block (top halo source)
            pl.BlockSpec(xblk, ce),      # current row block
            pl.BlockSpec(xblk, dn),      # next row block (bottom halo source)
            full(w1m.shape),
            full((Cout, 1)),
            full(w2m.shape),
            full((Cout, 1)),
        ],
        out_specs=pl.BlockSpec((None, Cout, R * W), lambda b, r: (b, 0, r)),
        compiler_params=pltpu.CompilerParams(
            dimension_semantics=("parallel", "parallel"),
            vmem_limit_bytes=vmem_limit),
    )(x, x, x, w1m, b1, w2m, b2)

    return out.reshape(B, Cout, H, W)


def double_conv_reference(x_nchw, params):
    """Pure-JAX reference (matches PyTorch eval-mode forward)."""
    (w1, cb1, g1, be1, m1, v1, w2, cb2, g2, be2, m2, v2) = params
    eps = 1e-5

    def conv(x, w, b):
        y = lax.conv_general_dilated(
            x, w, window_strides=(1, 1), padding=((1, 1), (1, 1)),
            dimension_numbers=("NCHW", "OIHW", "NCHW"))
        return y + b[None, :, None, None]

    def bn(x, g, be, m, v):
        return (x - m[None, :, None, None]) / jnp.sqrt(v[None, :, None, None] + eps) \
               * g[None, :, None, None] + be[None, :, None, None]

    h = jax.nn.relu(bn(conv(x_nchw, w1, cb1), g1, be1, m1, v1))
    return jax.nn.relu(bn(conv(h, w2, cb2), g2, be2, m2, v2))


def make_params(key, in_channels, out_channels):
    ks = jax.random.split(key, 8)
    w1 = 0.1 * jax.random.normal(ks[0], (out_channels, in_channels, 3, 3), jnp.float32)
    cb1 = 0.05 * jax.random.normal(ks[1], (out_channels,), jnp.float32)
    g1 = 1.0 + 0.1 * jax.random.normal(ks[2], (out_channels,), jnp.float32)
    be1 = 0.1 * jax.random.normal(ks[3], (out_channels,), jnp.float32)
    m1 = 0.05 * jax.random.normal(ks[4], (out_channels,), jnp.float32)
    v1 = 1.0 + 0.1 * jnp.abs(jax.random.normal(ks[5], (out_channels,), jnp.float32))

    w2 = 0.1 * jax.random.normal(ks[6], (out_channels, out_channels, 3, 3), jnp.float32)
    cb2 = 0.05 * jax.random.normal(ks[7], (out_channels,), jnp.float32)
    k2 = jax.random.split(ks[7], 4)
    g2 = 1.0 + 0.1 * jax.random.normal(k2[0], (out_channels,), jnp.float32)
    be2 = 0.1 * jax.random.normal(k2[1], (out_channels,), jnp.float32)
    m2 = 0.05 * jax.random.normal(k2[2], (out_channels,), jnp.float32)
    v2 = 1.0 + 0.1 * jnp.abs(jax.random.normal(k2[3], (out_channels,), jnp.float32))

    return (w1, cb1, g1, be1, m1, v1, w2, cb2, g2, be2, m2, v2)


if __name__ == "__main__":

    def run_suite(allow_roll):
        # Config A: lane-aligned windows (W=128 -> pltpu.roll path), Cin=3 padding,
        # two row tiles; checked in f32 with both the im2col and per-tap conv paths.
        kx, kp = jax.random.split(jax.random.PRNGKey(0))
        xa = jax.random.normal(kx, (1, 3, 8, 128), jnp.float32)
        pa = make_params(kp, 3, 8)
        refa = jax.block_until_ready(double_conv_reference(xa, pa))
        oa1 = jax.block_until_ready(double_conv_pallas(
            xa, pa, compute_dtype=jnp.float32, row_block=4, allow_roll=allow_roll))
        assert oa1.shape == refa.shape
        assert jnp.allclose(oa1, refa, atol=1e-4, rtol=1e-4), "config A im2col mismatch"
        oa2 = jax.block_until_ready(double_conv_pallas(
            xa, pa, compute_dtype=jnp.float32, row_block=4,
            im2col_max_channels=0, allow_roll=allow_roll))
        assert jnp.allclose(oa2, refa, atol=1e-4, rtol=1e-4), "config A per-tap mismatch"

        # Config B: the spec-sized example (B=2, Cin=4, Cout=8, 16x16).
        kx, kp = jax.random.split(jax.random.PRNGKey(1))
        xb = jax.random.normal(kx, (2, 4, 16, 16), jnp.float32)
        pb = make_params(kp, 4, 8)
        refb = jax.block_until_ready(double_conv_reference(xb, pb))

        # f32 MXU operands, auto row tile (single tile): tight check.
        o1 = jax.block_until_ready(double_conv_pallas(
            xb, pb, compute_dtype=jnp.float32, allow_roll=allow_roll))
        assert o1.shape == (2, 8, 16, 16)
        assert jnp.allclose(o1, refb, atol=1e-4, rtol=1e-4), "f32 mismatch vs reference"

        # Row-tiled grid (two row tiles -> exercises the 2-row halo + padding logic).
        o2 = jax.block_until_ready(double_conv_pallas(
            xb, pb, compute_dtype=jnp.float32, row_block=8, allow_roll=allow_roll))
        assert jnp.allclose(o2, refb, atol=1e-4, rtol=1e-4), "row-tiled mismatch"

        # Per-tap accumulating-matmul path (forced), row-tiled.
        o3 = jax.block_until_ready(double_conv_pallas(
            xb, pb, compute_dtype=jnp.float32, row_block=8,
            im2col_max_channels=0, allow_roll=allow_roll))
        assert jnp.allclose(o3, refb, atol=1e-4, rtol=1e-4), "per-tap mismatch"

        # Default fast path: bf16 MXU operands (f32 accumulation), bf16 output.
        o4 = jax.block_until_ready(double_conv_pallas(
            xb, pb, compute_dtype=jnp.bfloat16, out_dtype=jnp.bfloat16,
            row_block=8, allow_roll=allow_roll))
        assert o4.dtype == jnp.bfloat16
        assert jnp.allclose(o4.astype(jnp.float32), refb, atol=5e-2, rtol=5e-2), \
            "bf16 mismatch vs reference"

    try:
        run_suite(allow_roll=True)
    except Exception:  # noqa: BLE001
        # pltpu.roll lowering unavailable/failed for this backend/shape: rerun with
        # the zero-fill shift (identical semantics, perf-only difference).  Any
        # genuine bug still fails here and propagates.
        run_suite(allow_roll=False)

    print("KERNEL_OK")
</pallas_src>

<mosaic_0001>
module attributes {stable_mosaic.version = 11 : i64} {
  func.func @_double_conv_kernel(%arg0: i32, %arg1: i32, %arg2: memref<1x8x512xf32, #tpu.memory_space<vmem>>, %arg3: memref<1x8x512xf32, #tpu.memory_space<vmem>>, %arg4: memref<1x8x512xf32, #tpu.memory_space<vmem>>, %arg5: memref<8x72xf32, #tpu.memory_space<vmem>>, %arg6: memref<8x1xf32, #tpu.memory_space<vmem>>, %arg7: memref<8x72xf32, #tpu.memory_space<vmem>>, %arg8: memref<8x1xf32, #tpu.memory_space<vmem>>, %arg9: memref<1x8x512xf32, #tpu.memory_space<vmem>>) attributes {dimension_semantics = [#tpu.dimension_semantics<parallel>, #tpu.dimension_semantics<parallel>], iteration_bounds = array<i64: 1, 2>, scalar_prefetch = 0 : i64, scratch_operands = 0 : i64, tpu.core_type = #tpu.core_type<tc>, window_params = [{transform_indices = @transform_0, window_bounds = array<i64: 1, 8, 512>}, {transform_indices = @transform_1, window_bounds = array<i64: 1, 8, 512>}, {transform_indices = @transform_2, window_bounds = array<i64: 1, 8, 512>}, {pipeline_mode = #tpu.pipeline_mode<synchronous>, transform_indices = @transform_3, window_bounds = array<i64: 8, 72>}, {pipeline_mode = #tpu.pipeline_mode<synchronous>, transform_indices = @transform_4, window_bounds = array<i64: 8, 1>}, {pipeline_mode = #tpu.pipeline_mode<synchronous>, transform_indices = @transform_5, window_bounds = array<i64: 8, 72>}, {pipeline_mode = #tpu.pipeline_mode<synchronous>, transform_indices = @transform_6, window_bounds = array<i64: 8, 1>}, {transform_indices = @transform_7, window_bounds = array<i64: 1, 8, 512>}]} {
    %c0_i32 = arith.constant 0 : i32
    %0 = arith.cmpi eq, %arg1, %c0_i32 : i32
    %c1_i32 = arith.constant 1 : i32
    %1 = arith.cmpi eq, %arg1, %c1_i32 : i32
    %2 = tpu.iota {dimensions = array<i32: 1>} : vector<1x1024xi32>
    %c128_i32 = arith.constant 128 : i32
    %c0_i32_0 = arith.constant 0 : i32
    %3 = arith.cmpi eq, %c128_i32, %c0_i32_0 : i32
    %c1_i32_1 = arith.constant 1 : i32
    %4 = arith.select %3, %c1_i32_1, %c128_i32 : i32
    %5 = vector.broadcast %4 : i32 to vector<1x1024xi32>
    %6 = arith.remsi %2, %5 : vector<1x1024xi32>
    %c0_i32_2 = arith.constant 0 : i32
    %7 = vector.broadcast %c0_i32_2 : i32 to vector<1x1024xi32>
    %8 = arith.cmpi ne, %6, %7 : vector<1x1024xi32>
    %c0_i32_3 = arith.constant 0 : i32
    %9 = vector.broadcast %c0_i32_3 : i32 to vector<1x1024xi32>
    %10 = arith.cmpi slt, %6, %9 : vector<1x1024xi32>
    %c0_i32_4 = arith.constant 0 : i32
    %11 = arith.cmpi slt, %4, %c0_i32_4 : i32
    %12 = vector.broadcast %11 : i1 to vector<1x1024xi1>
    %13 = vector.broadcast %12 : vector<1x1024xi1> to vector<1x1024xi1>
    %14 = arith.xori %10, %13 : vector<1x1024xi1>
    %15 = arith.andi %14, %8 : vector<1x1024xi1>
    %16 = vector.broadcast %4 : i32 to vector<1x1024xi32>
    %17 = arith.addi %6, %16 : vector<1x1024xi32>
    %18 = arith.select %15, %17, %6 : vector<1x1024xi1>, vector<1x1024xi32>
    %c1_i32_5 = arith.constant 1 : i32
    %19 = vector.broadcast %c1_i32_5 : i32 to vector<1x1024xi32>
    %20 = arith.cmpi sge, %18, %19 : vector<1x1024xi32>
    %c126_i32 = arith.constant 126 : i32
    %21 = vector.broadcast %c126_i32 : i32 to vector<1x1024xi32>
    %22 = arith.cmpi sle, %18, %21 : vector<1x1024xi32>
    %c128_i32_6 = arith.constant 128 : i32
    %23 = vector.broadcast %c128_i32_6 : i32 to vector<1x1024xi32>
    %24 = arith.cmpi sge, %2, %23 : vector<1x1024xi32>
    %c256_i32 = arith.constant 256 : i32
    %25 = vector.broadcast %c256_i32 : i32 to vector<1x1024xi32>
    %26 = arith.cmpi slt, %2, %25 : vector<1x1024xi32>
    %27 = arith.andi %24, %26 : vector<1x1024xi1>
    %c768_i32 = arith.constant 768 : i32
    %28 = vector.broadcast %c768_i32 : i32 to vector<1x1024xi32>
    %29 = arith.cmpi sge, %2, %28 : vector<1x1024xi32>
    %c896_i32 = arith.constant 896 : i32
    %30 = vector.broadcast %c896_i32 : i32 to vector<1x1024xi32>
    %31 = arith.cmpi slt, %2, %30 : vector<1x1024xi32>
    %32 = arith.andi %29, %31 : vector<1x1024xi1>
    %33 = vector.broadcast %0 : i1 to vector<1x1024xi1>
    %34 = arith.andi %33, %27 : vector<1x1024xi1>
    %35 = vector.broadcast %1 : i1 to vector<1x1024xi1>
    %36 = arith.andi %35, %32 : vector<1x1024xi1>
    %37 = arith.ori %34, %36 : vector<1x1024xi1>
    %c0 = arith.constant 0 : index
    %c0_7 = arith.constant 0 : index
    %c256 = arith.constant 256 : index
    %38 = vector.load %arg2[%c0, %c0_7, %c256] : memref<1x8x512xf32, #tpu.memory_space<vmem>>, vector<1x8x256xf32>
    %39 = vector.shape_cast %38 : vector<1x8x256xf32> to vector<8x256xf32>
    %c0_8 = arith.constant 0 : index
    %c0_9 = arith.constant 0 : index
    %c0_10 = arith.constant 0 : index
    %40 = vector.load %arg4[%c0_8, %c0_9, %c0_10] : memref<1x8x512xf32, #tpu.memory_space<vmem>>, vector<1x8x256xf32>
    %41 = vector.shape_cast %40 : vector<1x8x256xf32> to vector<8x256xf32>
    %cst = arith.constant 0.000000e+00 : f32
    %42 = vector.broadcast %cst : f32 to vector<8x256xf32>
    %43 = arith.select %0, %42, %39 : vector<8x256xf32>
    %cst_11 = arith.constant 0.000000e+00 : f32
    %44 = vector.broadcast %cst_11 : f32 to vector<8x256xf32>
    %45 = arith.select %1, %44, %41 : vector<8x256xf32>
    %c0_12 = arith.constant 0 : index
    %c0_13 = arith.constant 0 : index
    %c0_14 = arith.constant 0 : index
    %46 = vector.load %arg3[%c0_12, %c0_13, %c0_14] : memref<1x8x512xf32, #tpu.memory_space<vmem>>, vector<1x8x512xf32>
    %47 = vector.shape_cast %46 : vector<1x8x512xf32> to vector<8x512xf32>
    %48 = tpu.concatenate %43, %47, %45 in 1 : vector<8x256xf32>, vector<8x512xf32>, vector<8x256xf32> -> vector<8x1024xf32>
    %c129_i32 = arith.constant 129 : i32
    %49 = tpu.dynamic_rotate %48 by %c129_i32 dim 1 : vector<8x1024xf32>, i32 -> vector<8x1024xf32>
    %cst_15 = arith.constant 0.000000e+00 : f32
    %50 = vector.shape_cast %20 : vector<1x1024xi1> to vector<1x1024xi1>
    %51 = vector.broadcast %50 : vector<1x1024xi1> to vector<8x1024xi1>
    %52 = vector.broadcast %cst_15 : f32 to vector<8x1024xf32>
    %53 = arith.select %51, %49, %52 : vector<8x1024xi1>, vector<8x1024xf32>
    %c128_i32_16 = arith.constant 128 : i32
    %54 = tpu.dynamic_rotate %48 by %c128_i32_16 dim 1 : vector<8x1024xf32>, i32 -> vector<8x1024xf32>
    %c127_i32 = arith.constant 127 : i32
    %55 = tpu.dynamic_rotate %48 by %c127_i32 dim 1 : vector<8x1024xf32>, i32 -> vector<8x1024xf32>
    %cst_17 = arith.constant 0.000000e+00 : f32
    %56 = vector.shape_cast %22 : vector<1x1024xi1> to vector<1x1024xi1>
    %57 = vector.broadcast %56 : vector<1x1024xi1> to vector<8x1024xi1>
    %58 = vector.broadcast %cst_17 : f32 to vector<8x1024xf32>
    %59 = arith.select %57, %55, %58 : vector<8x1024xi1>, vector<8x1024xf32>
    %c1_i32_18 = arith.constant 1 : i32
    %60 = tpu.dynamic_rotate %48 by %c1_i32_18 dim 1 : vector<8x1024xf32>, i32 -> vector<8x1024xf32>
    %cst_19 = arith.constant 0.000000e+00 : f32
    %61 = vector.shape_cast %20 : vector<1x1024xi1> to vector<1x1024xi1>
    %62 = vector.broadcast %61 : vector<1x1024xi1> to vector<8x1024xi1>
    %63 = vector.broadcast %cst_19 : f32 to vector<8x1024xf32>
    %64 = arith.select %62, %60, %63 : vector<8x1024xi1>, vector<8x1024xf32>
    %c1023_i32 = arith.constant 1023 : i32
    %65 = tpu.dynamic_rotate %48 by %c1023_i32 dim 1 : vector<8x1024xf32>, i32 -> vector<8x1024xf32>
    %cst_20 = arith.constant 0.000000e+00 : f32
    %66 = vector.shape_cast %22 : vector<1x1024xi1> to vector<1x1024xi1>
    %67 = vector.broadcast %66 : vector<1x1024xi1> to vector<8x1024xi1>
    %68 = vector.broadcast %cst_20 : f32 to vector<8x1024xf32>
    %69 = arith.select %67, %65, %68 : vector<8x1024xi1>, vector<8x1024xf32>
    %c897_i32 = arith.constant 897 : i32
    %70 = tpu.dynamic_rotate %48 by %c897_i32 dim 1 : vector<8x1024xf32>, i32 -> vector<8x1024xf32>
    %cst_21 = arith.constant 0.000000e+00 : f32
    %71 = vector.shape_cast %20 : vector<1x1024xi1> to vector<1x1024xi1>
    %72 = vector.broadcast %71 : vector<1x1024xi1> to vector<8x1024xi1>
    %73 = vector.broadcast %cst_21 : f32 to vector<8x1024xf32>
    %74 = arith.select %72, %70, %73 : vector<8x1024xi1>, vector<8x1024xf32>
    %c896_i32_22 = arith.constant 896 : i32
    %75 = tpu.dynamic_rotate %48 by %c896_i32_22 dim 1 : vector<8x1024xf32>, i32 -> vector<8x1024xf32>
    %c895_i32 = arith.constant 895 : i32
    %76 = tpu.dynamic_rotate %48 by %c895_i32 dim 1 : vector<8x1024xf32>, i32 -> vector<8x1024xf32>
    %cst_23 = arith.constant 0.000000e+00 : f32
    %77 = vector.shape_cast %22 : vector<1x1024xi1> to vector<1x1024xi1>
    %78 = vector.broadcast %77 : vector<1x1024xi1> to vector<8x1024xi1>
    %79 = vector.broadcast %cst_23 : f32 to vector<8x1024xf32>
    %80 = arith.select %78, %76, %79 : vector<8x1024xi1>, vector<8x1024xf32>
    %81 = tpu.concatenate %53, %54, %59, %64, %48, %69, %74, %75, %80 in 0 : vector<8x1024xf32>, vector<8x1024xf32>, vector<8x1024xf32>, vector<8x1024xf32>, vector<8x1024xf32>, vector<8x1024xf32>, vector<8x1024xf32>, vector<8x1024xf32>, vector<8x1024xf32> -> vector<72x1024xf32>
    %c0_24 = arith.constant 0 : index
    %c0_25 = arith.constant 0 : index
    %82 = vector.load %arg5[%c0_24, %c0_25] : memref<8x72xf32, #tpu.memory_space<vmem>>, vector<8x72xf32>
    %cst_26 = arith.constant dense<0.000000e+00> : vector<8x1024xf32>
    %83 = tpu.matmul %82, %81, %cst_26 {dimension_numbers = #tpu.dot_dimension_numbers<[1], [0], [0], [1], [0, 0, 1, 1], [], []>} : vector<8x72xf32>, vector<72x1024xf32>, vector<8x1024xf32> -> vector<8x1024xf32>
    %c0_27 = arith.constant 0 : index
    %c0_28 = arith.constant 0 : index
    %84 = vector.load %arg6[%c0_27, %c0_28] : memref<8x1xf32, #tpu.memory_space<vmem>>, vector<8x1xf32>
    %85 = vector.broadcast %84 : vector<8x1xf32> to vector<8x1024xf32>
    %86 = arith.addf %83, %85 : vector<8x1024xf32>
    %cst_29 = arith.constant 0.000000e+00 : f32
    %87 = vector.broadcast %cst_29 : f32 to vector<8x1024xf32>
    %88 = arith.maximumf %86, %87 : vector<8x1024xf32>
    %cst_30 = arith.constant 0.000000e+00 : f32
    %89 = vector.shape_cast %37 : vector<1x1024xi1> to vector<1x1024xi1>
    %90 = vector.broadcast %89 : vector<1x1024xi1> to vector<8x1024xi1>
    %91 = vector.broadcast %cst_30 : f32 to vector<8x1024xf32>
    %92 = arith.select %90, %91, %88 : vector<8x1024xi1>, vector<8x1024xf32>
    %c129_i32_31 = arith.constant 129 : i32
    %93 = tpu.dynamic_rotate %92 by %c129_i32_31 dim 1 : vector<8x1024xf32>, i32 -> vector<8x1024xf32>
    %cst_32 = arith.constant 0.000000e+00 : f32
    %94 = vector.shape_cast %20 : vector<1x1024xi1> to vector<1x1024xi1>
    %95 = vector.broadcast %94 : vector<1x1024xi1> to vector<8x1024xi1>
    %96 = vector.broadcast %cst_32 : f32 to vector<8x1024xf32>
    %97 = arith.select %95, %93, %96 : vector<8x1024xi1>, vector<8x1024xf32>
    %c128_i32_33 = arith.constant 128 : i32
    %98 = tpu.dynamic_rotate %92 by %c128_i32_33 dim 1 : vector<8x1024xf32>, i32 -> vector<8x1024xf32>
    %c127_i32_34 = arith.constant 127 : i32
    %99 = tpu.dynamic_rotate %92 by %c127_i32_34 dim 1 : vector<8x1024xf32>, i32 -> vector<8x1024xf32>
    %cst_35 = arith.constant 0.000000e+00 : f32
    %100 = vector.shape_cast %22 : vector<1x1024xi1> to vector<1x1024xi1>
    %101 = vector.broadcast %100 : vector<1x1024xi1> to vector<8x1024xi1>
    %102 = vector.broadcast %cst_35 : f32 to vector<8x1024xf32>
    %103 = arith.select %101, %99, %102 : vector<8x1024xi1>, vector<8x1024xf32>
    %c1_i32_36 = arith.constant 1 : i32
    %104 = tpu.dynamic_rotate %92 by %c1_i32_36 dim 1 : vector<8x1024xf32>, i32 -> vector<8x1024xf32>
    %cst_37 = arith.constant 0.000000e+00 : f32
    %105 = vector.shape_cast %20 : vector<1x1024xi1> to vector<1x1024xi1>
    %106 = vector.broadcast %105 : vector<1x1024xi1> to vector<8x1024xi1>
    %107 = vector.broadcast %cst_37 : f32 to vector<8x1024xf32>
    %108 = arith.select %106, %104, %107 : vector<8x1024xi1>, vector<8x1024xf32>
    %c1023_i32_38 = arith.constant 1023 : i32
    %109 = tpu.dynamic_rotate %92 by %c1023_i32_38 dim 1 : vector<8x1024xf32>, i32 -> vector<8x1024xf32>
    %cst_39 = arith.constant 0.000000e+00 : f32
    %110 = vector.shape_cast %22 : vector<1x1024xi1> to vector<1x1024xi1>
    %111 = vector.broadcast %110 : vector<1x1024xi1> to vector<8x1024xi1>
    %112 = vector.broadcast %cst_39 : f32 to vector<8x1024xf32>
    %113 = arith.select %111, %109, %112 : vector<8x1024xi1>, vector<8x1024xf32>
    %c897_i32_40 = arith.constant 897 : i32
    %114 = tpu.dynamic_rotate %92 by %c897_i32_40 dim 1 : vector<8x1024xf32>, i32 -> vector<8x1024xf32>
    %cst_41 = arith.constant 0.000000e+00 : f32
    %115 = vector.shape_cast %20 : vector<1x1024xi1> to vector<1x1024xi1>
    %116 = vector.broadcast %115 : vector<1x1024xi1> to vector<8x1024xi1>
    %117 = vector.broadcast %cst_41 : f32 to vector<8x1024xf32>
    %118 = arith.select %116, %114, %117 : vector<8x1024xi1>, vector<8x1024xf32>
    %c896_i32_42 = arith.constant 896 : i32
    %119 = tpu.dynamic_rotate %92 by %c896_i32_42 dim 1 : vector<8x1024xf32>, i32 -> vector<8x1024xf32>
    %c895_i32_43 = arith.constant 895 : i32
    %120 = tpu.dynamic_rotate %92 by %c895_i32_43 dim 1 : vector<8x1024xf32>, i32 -> vector<8x1024xf32>
    %cst_44 = arith.constant 0.000000e+00 : f32
    %121 = vector.shape_cast %22 : vector<1x1024xi1> to vector<1x1024xi1>
    %122 = vector.broadcast %121 : vector<1x1024xi1> to vector<8x1024xi1>
    %123 = vector.broadcast %cst_44 : f32 to vector<8x1024xf32>
    %124 = arith.select %122, %120, %123 : vector<8x1024xi1>, vector<8x1024xf32>
    %125 = tpu.concatenate %97, %98, %103, %108, %92, %113, %118, %119, %124 in 0 : vector<8x1024xf32>, vector<8x1024xf32>, vector<8x1024xf32>, vector<8x1024xf32>, vector<8x1024xf32>, vector<8x1024xf32>, vector<8x1024xf32>, vector<8x1024xf32>, vector<8x1024xf32> -> vector<72x1024xf32>
    %c0_45 = arith.constant 0 : index
    %c0_46 = arith.constant 0 : index
    %126 = vector.load %arg7[%c0_45, %c0_46] : memref<8x72xf32, #tpu.memory_space<vmem>>, vector<8x72xf32>
    %cst_47 = arith.constant dense<0.000000e+00> : vector<8x1024xf32>
    %127 = tpu.matmul %126, %125, %cst_47 {dimension_numbers = #tpu.dot_dimension_numbers<[1], [0], [0], [1], [0, 0, 1, 1], [], []>} : vector<8x72xf32>, vector<72x1024xf32>, vector<8x1024xf32> -> vector<8x1024xf32>
    %c0_48 = arith.constant 0 : index
    %c0_49 = arith.constant 0 : index
    %128 = vector.load %arg8[%c0_48, %c0_49] : memref<8x1xf32, #tpu.memory_space<vmem>>, vector<8x1xf32>
    %129 = vector.broadcast %128 : vector<8x1xf32> to vector<8x1024xf32>
    %130 = arith.addf %127, %129 : vector<8x1024xf32>
    %cst_50 = arith.constant 0.000000e+00 : f32
    %131 = vector.broadcast %cst_50 : f32 to vector<8x1024xf32>
    %132 = arith.maximumf %130, %131 : vector<8x1024xf32>
    %133 = vector.extract_strided_slice %132 {offsets = [0, 256], sizes = [8, 512], strides = [1, 1]} : vector<8x1024xf32> to vector<8x512xf32>
    %c0_51 = arith.constant 0 : index
    %c0_52 = arith.constant 0 : index
    %c0_53 = arith.constant 0 : index
    %134 = vector.load %arg9[%c0_51, %c0_52, %c0_53] : memref<1x8x512xf32, #tpu.memory_space<vmem>>, vector<1x8x512xf32>
    %135 = vector.shape_cast %134 : vector<1x8x512xf32> to vector<8x512xf32>
    %136 = vector.shape_cast %133 : vector<8x512xf32> to vector<1x8x512xf32>
    tpu.vector_store %arg9[%c0_51, %c0_52, %c0_53], %136 {strides = array<i32>} : memref<1x8x512xf32, #tpu.memory_space<vmem>>, vector<1x8x512xf32>,
    return
  }
  func.func @transform_0(%arg0: i32, %arg1: i32) -> (i32, i32, i32) {
    %c1_i32 = arith.constant 1 : i32
    %0 = arith.subi %arg1, %c1_i32 : i32
    %c0_i32 = arith.constant 0 : i32
    %1 = arith.maxsi %0, %c0_i32 : i32
    %c0_i32_0 = arith.constant 0 : i32
    %c0_i32_1 = arith.constant 0 : i32
    return %arg0, %c0_i32_0, %1 : i32, i32, i32
  }
  func.func @transform_1(%arg0: i32, %arg1: i32) -> (i32, i32, i32) {
    %c0_i32 = arith.constant 0 : i32
    %c0_i32_0 = arith.constant 0 : i32
    return %arg0, %c0_i32, %arg1 : i32, i32, i32
  }
  func.func @transform_2(%arg0: i32, %arg1: i32) -> (i32, i32, i32) {
    %c1_i32 = arith.constant 1 : i32
    %0 = arith.addi %arg1, %c1_i32 : i32
    %c1_i32_0 = arith.constant 1 : i32
    %1 = arith.minsi %0, %c1_i32_0 : i32
    %c0_i32 = arith.constant 0 : i32
    %c0_i32_1 = arith.constant 0 : i32
    return %arg0, %c0_i32, %1 : i32, i32, i32
  }
  func.func @transform_3(%arg0: i32, %arg1: i32) -> (i32, i32) {
    %c0_i32 = arith.constant 0 : i32
    %c0_i32_0 = arith.constant 0 : i32
    %c0_i32_1 = arith.constant 0 : i32
    return %c0_i32, %c0_i32_0 : i32, i32
  }
  func.func @transform_4(%arg0: i32, %arg1: i32) -> (i32, i32) {
    %c0_i32 = arith.constant 0 : i32
    %c0_i32_0 = arith.constant 0 : i32
    %c0_i32_1 = arith.constant 0 : i32
    return %c0_i32, %c0_i32_0 : i32, i32
  }
  func.func @transform_5(%arg0: i32, %arg1: i32) -> (i32, i32) {
    %c0_i32 = arith.constant 0 : i32
    %c0_i32_0 = arith.constant 0 : i32
    %c0_i32_1 = arith.constant 0 : i32
    return %c0_i32, %c0_i32_0 : i32, i32
  }
  func.func @transform_6(%arg0: i32, %arg1: i32) -> (i32, i32) {
    %c0_i32 = arith.constant 0 : i32
    %c0_i32_0 = arith.constant 0 : i32
    %c0_i32_1 = arith.constant 0 : i32
    return %c0_i32, %c0_i32_0 : i32, i32
  }
  func.func @transform_7(%arg0: i32, %arg1: i32) -> (i32, i32, i32) {
    %c0_i32 = arith.constant 0 : i32
    %c0_i32_0 = arith.constant 0 : i32
    return %arg0, %c0_i32, %arg1 : i32, i32, i32
  }
}

module attributes {stable_mosaic.version = 11 : i64} {
  func.func @_double_conv_kernel(%arg0: i32, %arg1: i32, %arg2: memref<1x8x512xf32, #tpu.memory_space<vmem>>, %arg3: memref<1x8x512xf32, #tpu.memory_space<vmem>>, %arg4: memref<1x8x512xf32, #tpu.memory_space<vmem>>, %arg5: memref<8x72xf32, #tpu.memory_space<vmem>>, %arg6: memref<8x1xf32, #tpu.memory_space<vmem>>, %arg7: memref<8x72xf32, #tpu.memory_space<vmem>>, %arg8: memref<8x1xf32, #tpu.memory_space<vmem>>, %arg9: memref<1x8x512xf32, #tpu.memory_space<vmem>>) attributes {dimension_semantics = [#tpu.dimension_semantics<parallel>, #tpu.dimension_semantics<parallel>], iteration_bounds = array<i64: 1, 2>, scalar_prefetch = 0 : i64, scratch_operands = 0 : i64, tpu.core_type = #tpu.core_type<tc>, window_params = [{transform_indices = @transform_0, window_bounds = array<i64: 1, 8, 512>}, {transform_indices = @transform_1, window_bounds = array<i64: 1, 8, 512>}, {transform_indices = @transform_2, window_bounds = array<i64: 1, 8, 512>}, {pipeline_mode = #tpu.pipeline_mode<synchronous>, transform_indices = @transform_3, window_bounds = array<i64: 8, 72>}, {pipeline_mode = #tpu.pipeline_mode<synchronous>, transform_indices = @transform_4, window_bounds = array<i64: 8, 1>}, {pipeline_mode = #tpu.pipeline_mode<synchronous>, transform_indices = @transform_5, window_bounds = array<i64: 8, 72>}, {pipeline_mode = #tpu.pipeline_mode<synchronous>, transform_indices = @transform_6, window_bounds = array<i64: 8, 1>}, {transform_indices = @transform_7, window_bounds = array<i64: 1, 8, 512>}]} {
    %c0_i32 = arith.constant 0 : i32
    %0 = arith.cmpi eq, %arg1, %c0_i32 : i32
    %c1_i32 = arith.constant 1 : i32
    %1 = arith.cmpi eq, %arg1, %c1_i32 : i32
    %2 = tpu.iota {dimensions = array<i32: 1>} : vector<1x1024xi32>
    %c128_i32 = arith.constant 128 : i32
    %c0_i32_0 = arith.constant 0 : i32
    %3 = arith.cmpi eq, %c128_i32, %c0_i32_0 : i32
    %c1_i32_1 = arith.constant 1 : i32
    %4 = arith.select %3, %c1_i32_1, %c128_i32 : i32
    %5 = vector.broadcast %4 : i32 to vector<1x1024xi32>
    %6 = arith.remsi %2, %5 : vector<1x1024xi32>
    %c0_i32_2 = arith.constant 0 : i32
    %7 = vector.broadcast %c0_i32_2 : i32 to vector<1x1024xi32>
    %8 = arith.cmpi ne, %6, %7 : vector<1x1024xi32>
    %c0_i32_3 = arith.constant 0 : i32
    %9 = vector.broadcast %c0_i32_3 : i32 to vector<1x1024xi32>
    %10 = arith.cmpi slt, %6, %9 : vector<1x1024xi32>
    %c0_i32_4 = arith.constant 0 : i32
    %11 = arith.cmpi slt, %4, %c0_i32_4 : i32
    %12 = vector.broadcast %11 : i1 to vector<1x1024xi1>
    %13 = vector.broadcast %12 : vector<1x1024xi1> to vector<1x1024xi1>
    %14 = arith.xori %10, %13 : vector<1x1024xi1>
    %15 = arith.andi %14, %8 : vector<1x1024xi1>
    %16 = vector.broadcast %4 : i32 to vector<1x1024xi32>
    %17 = arith.addi %6, %16 : vector<1x1024xi32>
    %18 = arith.select %15, %17, %6 : vector<1x1024xi1>, vector<1x1024xi32>
    %c1_i32_5 = arith.constant 1 : i32
    %19 = vector.broadcast %c1_i32_5 : i32 to vector<1x1024xi32>
    %20 = arith.cmpi sge, %18, %19 : vector<1x1024xi32>
    %c126_i32 = arith.constant 126 : i32
    %21 = vector.broadcast %c126_i32 : i32 to vector<1x1024xi32>
    %22 = arith.cmpi sle, %18, %21 : vector<1x1024xi32>
    %c128_i32_6 = arith.constant 128 : i32
    %23 = vector.broadcast %c128_i32_6 : i32 to vector<1x1024xi32>
    %24 = arith.cmpi sge, %2, %23 : vector<1x1024xi32>
    %c256_i32 = arith.constant 256 : i32
    %25 = vector.broadcast %c256_i32 : i32 to vector<1x1024xi32>
    %26 = arith.cmpi slt, %2, %25 : vector<1x1024xi32>
    %27 = arith.andi %24, %26 : vector<1x1024xi1>
    %c768_i32 = arith.constant 768 : i32
    %28 = vector.broadcast %c768_i32 : i32 to vector<1x1024xi32>
    %29 = arith.cmpi sge, %2, %28 : vector<1x1024xi32>
    %c896_i32 = arith.constant 896 : i32
    %30 = vector.broadcast %c896_i32 : i32 to vector<1x1024xi32>
    %31 = arith.cmpi slt, %2, %30 : vector<1x1024xi32>
    %32 = arith.andi %29, %31 : vector<1x1024xi1>
    %33 = vector.broadcast %0 : i1 to vector<1x1024xi1>
    %34 = arith.andi %33, %27 : vector<1x1024xi1>
    %35 = vector.broadcast %1 : i1 to vector<1x1024xi1>
    %36 = arith.andi %35, %32 : vector<1x1024xi1>
    %37 = arith.ori %34, %36 : vector<1x1024xi1>
    %c0 = arith.constant 0 : index
    %c0_7 = arith.constant 0 : index
    %c256 = arith.constant 256 : index
    %38 = vector.load %arg2[%c0, %c0_7, %c256] : memref<1x8x512xf32, #tpu.memory_space<vmem>>, vector<1x8x256xf32>
    %39 = vector.shape_cast %38 : vector<1x8x256xf32> to vector<8x256xf32>
    %c0_8 = arith.constant 0 : index
    %c0_9 = arith.constant 0 : index
    %c0_10 = arith.constant 0 : index
    %40 = vector.load %arg4[%c0_8, %c0_9, %c0_10] : memref<1x8x512xf32, #tpu.memory_space<vmem>>, vector<1x8x256xf32>
    %41 = vector.shape_cast %40 : vector<1x8x256xf32> to vector<8x256xf32>
    %cst = arith.constant 0.000000e+00 : f32
    %42 = vector.broadcast %cst : f32 to vector<8x256xf32>
    %43 = arith.select %0, %42, %39 : vector<8x256xf32>
    %cst_11 = arith.constant 0.000000e+00 : f32
    %44 = vector.broadcast %cst_11 : f32 to vector<8x256xf32>
    %45 = arith.select %1, %44, %41 : vector<8x256xf32>
    %c0_12 = arith.constant 0 : index
    %c0_13 = arith.constant 0 : index
    %c0_14 = arith.constant 0 : index
    %46 = vector.load %arg3[%c0_12, %c0_13, %c0_14] : memref<1x8x512xf32, #tpu.memory_space<vmem>>, vector<1x8x512xf32>
    %47 = vector.shape_cast %46 : vector<1x8x512xf32> to vector<8x512xf32>
    %48 = tpu.concatenate %43, %47, %45 in 1 : vector<8x256xf32>, vector<8x512xf32>, vector<8x256xf32> -> vector<8x1024xf32>
    %cst_15 = arith.constant 0.000000e+00 : f32
    %49 = vector.broadcast %cst_15 : f32 to vector<8x129xf32>
    %50 = vector.extract_strided_slice %48 {offsets = [0, 0], sizes = [8, 895], strides = [1, 1]} : vector<8x1024xf32> to vector<8x895xf32>
    %51 = tpu.concatenate %49, %50 in 1 : vector<8x129xf32>, vector<8x895xf32> -> vector<8x1024xf32>
    %cst_16 = arith.constant 0.000000e+00 : f32
    %52 = vector.shape_cast %20 : vector<1x1024xi1> to vector<1x1024xi1>
    %53 = vector.broadcast %52 : vector<1x1024xi1> to vector<8x1024xi1>
    %54 = vector.broadcast %cst_16 : f32 to vector<8x1024xf32>
    %55 = arith.select %53, %51, %54 : vector<8x1024xi1>, vector<8x1024xf32>
    %cst_17 = arith.constant 0.000000e+00 : f32
    %56 = vector.broadcast %cst_17 : f32 to vector<8x128xf32>
    %57 = vector.extract_strided_slice %48 {offsets = [0, 0], sizes = [8, 896], strides = [1, 1]} : vector<8x1024xf32> to vector<8x896xf32>
    %58 = tpu.concatenate %56, %57 in 1 : vector<8x128xf32>, vector<8x896xf32> -> vector<8x1024xf32>
    %cst_18 = arith.constant 0.000000e+00 : f32
    %59 = vector.broadcast %cst_18 : f32 to vector<8x127xf32>
    %60 = vector.extract_strided_slice %48 {offsets = [0, 0], sizes = [8, 897], strides = [1, 1]} : vector<8x1024xf32> to vector<8x897xf32>
    %61 = tpu.concatenate %59, %60 in 1 : vector<8x127xf32>, vector<8x897xf32> -> vector<8x1024xf32>
    %cst_19 = arith.constant 0.000000e+00 : f32
    %62 = vector.shape_cast %22 : vector<1x1024xi1> to vector<1x1024xi1>
    %63 = vector.broadcast %62 : vector<1x1024xi1> to vector<8x1024xi1>
    %64 = vector.broadcast %cst_19 : f32 to vector<8x1024xf32>
    %65 = arith.select %63, %61, %64 : vector<8x1024xi1>, vector<8x1024xf32>
    %cst_20 = arith.constant 0.000000e+00 : f32
    %66 = vector.broadcast %cst_20 : f32 to vector<8x1xf32>
    %67 = vector.extract_strided_slice %48 {offsets = [0, 0], sizes = [8, 1023], strides = [1, 1]} : vector<8x1024xf32> to vector<8x1023xf32>
    %68 = tpu.concatenate %66, %67 in 1 : vector<8x1xf32>, vector<8x1023xf32> -> vector<8x1024xf32>
    %cst_21 = arith.constant 0.000000e+00 : f32
    %69 = vector.shape_cast %20 : vector<1x1024xi1> to vector<1x1024xi1>
    %70 = vector.broadcast %69 : vector<1x1024xi1> to vector<8x1024xi1>
    %71 = vector.broadcast %cst_21 : f32 to vector<8x1024xf32>
    %72 = arith.select %70, %68, %71 : vector<8x1024xi1>, vector<8x1024xf32>
    %cst_22 = arith.constant 0.000000e+00 : f32
    %73 = vector.broadcast %cst_22 : f32 to vector<8x1xf32>
    %74 = vector.extract_strided_slice %48 {offsets = [0, 1], sizes = [8, 1023], strides = [1, 1]} : vector<8x1024xf32> to vector<8x1023xf32>
    %75 = tpu.concatenate %74, %73 in 1 : vector<8x1023xf32>, vector<8x1xf32> -> vector<8x1024xf32>
    %cst_23 = arith.constant 0.000000e+00 : f32
    %76 = vector.shape_cast %22 : vector<1x1024xi1> to vector<1x1024xi1>
    %77 = vector.broadcast %76 : vector<1x1024xi1> to vector<8x1024xi1>
    %78 = vector.broadcast %cst_23 : f32 to vector<8x1024xf32>
    %79 = arith.select %77, %75, %78 : vector<8x1024xi1>, vector<8x1024xf32>
    %cst_24 = arith.constant 0.000000e+00 : f32
    %80 = vector.broadcast %cst_24 : f32 to vector<8x127xf32>
    %81 = vector.extract_strided_slice %48 {offsets = [0, 127], sizes = [8, 897], strides = [1, 1]} : vector<8x1024xf32> to vector<8x897xf32>
    %82 = tpu.concatenate %81, %80 in 1 : vector<8x897xf32>, vector<8x127xf32> -> vector<8x1024xf32>
    %cst_25 = arith.constant 0.000000e+00 : f32
    %83 = vector.shape_cast %20 : vector<1x1024xi1> to vector<1x1024xi1>
    %84 = vector.broadcast %83 : vector<1x1024xi1> to vector<8x1024xi1>
    %85 = vector.broadcast %cst_25 : f32 to vector<8x1024xf32>
    %86 = arith.select %84, %82, %85 : vector<8x1024xi1>, vector<8x1024xf32>
    %cst_26 = arith.constant 0.000000e+00 : f32
    %87 = vector.broadcast %cst_26 : f32 to vector<8x128xf32>
    %88 = vector.extract_strided_slice %48 {offsets = [0, 128], sizes = [8, 896], strides = [1, 1]} : vector<8x1024xf32> to vector<8x896xf32>
    %89 = tpu.concatenate %88, %87 in 1 : vector<8x896xf32>, vector<8x128xf32> -> vector<8x1024xf32>
    %cst_27 = arith.constant 0.000000e+00 : f32
    %90 = vector.broadcast %cst_27 : f32 to vector<8x129xf32>
    %91 = vector.extract_strided_slice %48 {offsets = [0, 129], sizes = [8, 895], strides = [1, 1]} : vector<8x1024xf32> to vector<8x895xf32>
    %92 = tpu.concatenate %91, %90 in 1 : vector<8x895xf32>, vector<8x129xf32> -> vector<8x1024xf32>
    %cst_28 = arith.constant 0.000000e+00 : f32
    %93 = vector.shape_cast %22 : vector<1x1024xi1> to vector<1x1024xi1>
    %94 = vector.broadcast %93 : vector<1x1024xi1> to vector<8x1024xi1>
    %95 = vector.broadcast %cst_28 : f32 to vector<8x1024xf32>
    %96 = arith.select %94, %92, %95 : vector<8x1024xi1>, vector<8x1024xf32>
    %97 = tpu.concatenate %55, %58, %65, %72, %48, %79, %86, %89, %96 in 0 : vector<8x1024xf32>, vector<8x1024xf32>, vector<8x1024xf32>, vector<8x1024xf32>, vector<8x1024xf32>, vector<8x1024xf32>, vector<8x1024xf32>, vector<8x1024xf32>, vector<8x1024xf32> -> vector<72x1024xf32>
    %c0_29 = arith.constant 0 : index
    %c0_30 = arith.constant 0 : index
    %98 = vector.load %arg5[%c0_29, %c0_30] : memref<8x72xf32, #tpu.memory_space<vmem>>, vector<8x72xf32>
    %cst_31 = arith.constant dense<0.000000e+00> : vector<8x1024xf32>
    %99 = tpu.matmul %98, %97, %cst_31 {dimension_numbers = #tpu.dot_dimension_numbers<[1], [0], [0], [1], [0, 0, 1, 1], [], []>} : vector<8x72xf32>, vector<72x1024xf32>, vector<8x1024xf32> -> vector<8x1024xf32>
    %c0_32 = arith.constant 0 : index
    %c0_33 = arith.constant 0 : index
    %100 = vector.load %arg6[%c0_32, %c0_33] : memref<8x1xf32, #tpu.memory_space<vmem>>, vector<8x1xf32>
    %101 = vector.broadcast %100 : vector<8x1xf32> to vector<8x1024xf32>
    %102 = arith.addf %99, %101 : vector<8x1024xf32>
    %cst_34 = arith.constant 0.000000e+00 : f32
    %103 = vector.broadcast %cst_34 : f32 to vector<8x1024xf32>
    %104 = arith.maximumf %102, %103 : vector<8x1024xf32>
    %cst_35 = arith.constant 0.000000e+00 : f32
    %105 = vector.shape_cast %37 : vector<1x1024xi1> to vector<1x1024xi1>
    %106 = vector.broadcast %105 : vector<1x1024xi1> to vector<8x1024xi1>
    %107 = vector.broadcast %cst_35 : f32 to vector<8x1024xf32>
    %108 = arith.select %106, %107, %104 : vector<8x1024xi1>, vector<8x1024xf32>
    %cst_36 = arith.constant 0.000000e+00 : f32
    %109 = vector.broadcast %cst_36 : f32 to vector<8x129xf32>
    %110 = vector.extract_strided_slice %108 {offsets = [0, 0], sizes = [8, 895], strides = [1, 1]} : vector<8x1024xf32> to vector<8x895xf32>
    %111 = tpu.concatenate %109, %110 in 1 : vector<8x129xf32>, vector<8x895xf32> -> vector<8x1024xf32>
    %cst_37 = arith.constant 0.000000e+00 : f32
    %112 = vector.shape_cast %20 : vector<1x1024xi1> to vector<1x1024xi1>
    %113 = vector.broadcast %112 : vector<1x1024xi1> to vector<8x1024xi1>
    %114 = vector.broadcast %cst_37 : f32 to vector<8x1024xf32>
    %115 = arith.select %113, %111, %114 : vector<8x1024xi1>, vector<8x1024xf32>
    %cst_38 = arith.constant 0.000000e+00 : f32
    %116 = vector.broadcast %cst_38 : f32 to vector<8x128xf32>
    %117 = vector.extract_strided_slice %108 {offsets = [0, 0], sizes = [8, 896], strides = [1, 1]} : vector<8x1024xf32> to vector<8x896xf32>
    %118 = tpu.concatenate %116, %117 in 1 : vector<8x128xf32>, vector<8x896xf32> -> vector<8x1024xf32>
    %cst_39 = arith.constant 0.000000e+00 : f32
    %119 = vector.broadcast %cst_39 : f32 to vector<8x127xf32>
    %120 = vector.extract_strided_slice %108 {offsets = [0, 0], sizes = [8, 897], strides = [1, 1]} : vector<8x1024xf32> to vector<8x897xf32>
    %121 = tpu.concatenate %119, %120 in 1 : vector<8x127xf32>, vector<8x897xf32> -> vector<8x1024xf32>
    %cst_40 = arith.constant 0.000000e+00 : f32
    %122 = vector.shape_cast %22 : vector<1x1024xi1> to vector<1x1024xi1>
    %123 = vector.broadcast %122 : vector<1x1024xi1> to vector<8x1024xi1>
    %124 = vector.broadcast %cst_40 : f32 to vector<8x1024xf32>
    %125 = arith.select %123, %121, %124 : vector<8x1024xi1>, vector<8x1024xf32>
    %cst_41 = arith.constant 0.000000e+00 : f32
    %126 = vector.broadcast %cst_41 : f32 to vector<8x1xf32>
    %127 = vector.extract_strided_slice %108 {offsets = [0, 0], sizes = [8, 1023], strides = [1, 1]} : vector<8x1024xf32> to vector<8x1023xf32>
    %128 = tpu.concatenate %126, %127 in 1 : vector<8x1xf32>, vector<8x1023xf32> -> vector<8x1024xf32>
    %cst_42 = arith.constant 0.000000e+00 : f32
    %129 = vector.shape_cast %20 : vector<1x1024xi1> to vector<1x1024xi1>
    %130 = vector.broadcast %129 : vector<1x1024xi1> to vector<8x1024xi1>
    %131 = vector.broadcast %cst_42 : f32 to vector<8x1024xf32>
    %132 = arith.select %130, %128, %131 : vector<8x1024xi1>, vector<8x1024xf32>
    %cst_43 = arith.constant 0.000000e+00 : f32
    %133 = vector.broadcast %cst_43 : f32 to vector<8x1xf32>
    %134 = vector.extract_strided_slice %108 {offsets = [0, 1], sizes = [8, 1023], strides = [1, 1]} : vector<8x1024xf32> to vector<8x1023xf32>
    %135 = tpu.concatenate %134, %133 in 1 : vector<8x1023xf32>, vector<8x1xf32> -> vector<8x1024xf32>
    %cst_44 = arith.constant 0.000000e+00 : f32
    %136 = vector.shape_cast %22 : vector<1x1024xi1> to vector<1x1024xi1>
    %137 = vector.broadcast %136 : vector<1x1024xi1> to vector<8x1024xi1>
    %138 = vector.broadcast %cst_44 : f32 to vector<8x1024xf32>
    %139 = arith.select %137, %135, %138 : vector<8x1024xi1>, vector<8x1024xf32>
    %cst_45 = arith.constant 0.000000e+00 : f32
    %140 = vector.broadcast %cst_45 : f32 to vector<8x127xf32>
    %141 = vector.extract_strided_slice %108 {offsets = [0, 127], sizes = [8, 897], strides = [1, 1]} : vector<8x1024xf32> to vector<8x897xf32>
    %142 = tpu.concatenate %141, %140 in 1 : vector<8x897xf32>, vector<8x127xf32> -> vector<8x1024xf32>
    %cst_46 = arith.constant 0.000000e+00 : f32
    %143 = vector.shape_cast %20 : vector<1x1024xi1> to vector<1x1024xi1>
    %144 = vector.broadcast %143 : vector<1x1024xi1> to vector<8x1024xi1>
    %145 = vector.broadcast %cst_46 : f32 to vector<8x1024xf32>
    %146 = arith.select %144, %142, %145 : vector<8x1024xi1>, vector<8x1024xf32>
    %cst_47 = arith.constant 0.000000e+00 : f32
    %147 = vector.broadcast %cst_47 : f32 to vector<8x128xf32>
    %148 = vector.extract_strided_slice %108 {offsets = [0, 128], sizes = [8, 896], strides = [1, 1]} : vector<8x1024xf32> to vector<8x896xf32>
    %149 = tpu.concatenate %148, %147 in 1 : vector<8x896xf32>, vector<8x128xf32> -> vector<8x1024xf32>
    %cst_48 = arith.constant 0.000000e+00 : f32
    %150 = vector.broadcast %cst_48 : f32 to vector<8x129xf32>
    %151 = vector.extract_strided_slice %108 {offsets = [0, 129], sizes = [8, 895], strides = [1, 1]} : vector<8x1024xf32> to vector<8x895xf32>
    %152 = tpu.concatenate %151, %150 in 1 : vector<8x895xf32>, vector<8x129xf32> -> vector<8x1024xf32>
    %cst_49 = arith.constant 0.000000e+00 : f32
    %153 = vector.shape_cast %22 : vector<1x1024xi1> to vector<1x1024xi1>
    %154 = vector.broadcast %153 : vector<1x1024xi1> to vector<8x1024xi1>
    %155 = vector.broadcast %cst_49 : f32 to vector<8x1024xf32>
    %156 = arith.select %154, %152, %155 : vector<8x1024xi1>, vector<8x1024xf32>
    %157 = tpu.concatenate %115, %118, %125, %132, %108, %139, %146, %149, %156 in 0 : vector<8x1024xf32>, vector<8x1024xf32>, vector<8x1024xf32>, vector<8x1024xf32>, vector<8x1024xf32>, vector<8x1024xf32>, vector<8x1024xf32>, vector<8x1024xf32>, vector<8x1024xf32> -> vector<72x1024xf32>
    %c0_50 = arith.constant 0 : index
    %c0_51 = arith.constant 0 : index
    %158 = vector.load %arg7[%c0_50, %c0_51] : memref<8x72xf32, #tpu.memory_space<vmem>>, vector<8x72xf32>
    %cst_52 = arith.constant dense<0.000000e+00> : vector<8x1024xf32>
    %159 = tpu.matmul %158, %157, %cst_52 {dimension_numbers = #tpu.dot_dimension_numbers<[1], [0], [0], [1], [0, 0, 1, 1], [], []>} : vector<8x72xf32>, vector<72x1024xf32>, vector<8x1024xf32> -> vector<8x1024xf32>
    %c0_53 = arith.constant 0 : index
    %c0_54 = arith.constant 0 : index
    %160 = vector.load %arg8[%c0_53, %c0_54] : memref<8x1xf32, #tpu.memory_space<vmem>>, vector<8x1xf32>
    %161 = vector.broadcast %160 : vector<8x1xf32> to vector<8x1024xf32>
    %162 = arith.addf %159, %161 : vector<8x1024xf32>
    %cst_55 = arith.constant 0.000000e+00 : f32
    %163 = vector.broadcast %cst_55 : f32 to vector<8x1024xf32>
    %164 = arith.maximumf %162, %163 : vector<8x1024xf32>
    %165 = vector.extract_strided_slice %164 {offsets = [0, 256], sizes = [8, 512], strides = [1, 1]} : vector<8x1024xf32> to vector<8x512xf32>
    %c0_56 = arith.constant 0 : index
    %c0_57 = arith.constant 0 : index
    %c0_58 = arith.constant 0 : index
    %166 = vector.load %arg9[%c0_56, %c0_57, %c0_58] : memref<1x8x512xf32, #tpu.memory_space<vmem>>, vector<1x8x512xf32>
    %167 = vector.shape_cast %166 : vector<1x8x512xf32> to vector<8x512xf32>
    %168 = vector.shape_cast %165 : vector<8x512xf32> to vector<1x8x512xf32>
    tpu.vector_store %arg9[%c0_56, %c0_57, %c0_58], %168 {strides = array<i32>} : memref<1x8x512xf32, #tpu.memory_space<vmem>>, vector<1x8x512xf32>,
    return
  }
  func.func @transform_0(%arg0: i32, %arg1: i32) -> (i32, i32, i32) {
    %c1_i32 = arith.constant 1 : i32
    %0 = arith.subi %arg1, %c1_i32 : i32
    %c0_i32 = arith.constant 0 : i32
    %1 = arith.maxsi %0, %c0_i32 : i32
    %c0_i32_0 = arith.constant 0 : i32
    %c0_i32_1 = arith.constant 0 : i32
    return %arg0, %c0_i32_0, %1 : i32, i32, i32
  }
  func.func @transform_1(%arg0: i32, %arg1: i32) -> (i32, i32, i32) {
    %c0_i32 = arith.constant 0 : i32
    %c0_i32_0 = arith.constant 0 : i32
    return %arg0, %c0_i32, %arg1 : i32, i32, i32
  }
  func.func @transform_2(%arg0: i32, %arg1: i32) -> (i32, i32, i32) {
    %c1_i32 = arith.constant 1 : i32
    %0 = arith.addi %arg1, %c1_i32 : i32
    %c1_i32_0 = arith.constant 1 : i32
    %1 = arith.minsi %0, %c1_i32_0 : i32
    %c0_i32 = arith.constant 0 : i32
    %c0_i32_1 = arith.constant 0 : i32
    return %arg0, %c0_i32, %1 : i32, i32, i32
  }
  func.func @transform_3(%arg0: i32, %arg1: i32) -> (i32, i32) {
    %c0_i32 = arith.constant 0 : i32
    %c0_i32_0 = arith.constant 0 : i32
    %c0_i32_1 = arith.constant 0 : i32
    return %c0_i32, %c0_i32_0 : i32, i32
  }
  func.func @transform_4(%arg0: i32, %arg1: i32) -> (i32, i32) {
    %c0_i32 = arith.constant 0 : i32
    %c0_i32_0 = arith.constant 0 : i32
    %c0_i32_1 = arith.constant 0 : i32
    return %c0_i32, %c0_i32_0 : i32, i32
  }
  func.func @transform_5(%arg0: i32, %arg1: i32) -> (i32, i32) {
    %c0_i32 = arith.constant 0 : i32
    %c0_i32_0 = arith.constant 0 : i32
    %c0_i32_1 = arith.constant 0 : i32
    return %c0_i32, %c0_i32_0 : i32, i32
  }
  func.func @transform_6(%arg0: i32, %arg1: i32) -> (i32, i32) {
    %c0_i32 = arith.constant 0 : i32
    %c0_i32_0 = arith.constant 0 : i32
    %c0_i32_1 = arith.constant 0 : i32
    return %c0_i32, %c0_i32_0 : i32, i32
  }
  func.func @transform_7(%arg0: i32, %arg1: i32) -> (i32, i32, i32) {
    %c0_i32 = arith.constant 0 : i32
    %c0_i32_0 = arith.constant 0 : i32
    return %arg0, %c0_i32, %arg1 : i32, i32, i32
  }
}

</mosaic_0001>

<llo_original>
// kernel: tpu_custom_call.1
$region0: #{tpu_custom_call.1}
  #allocation0 [shape = 'u32[]', space=smem, size = 0x4, offset = 0x4, fixed_abs, tag = 'smem constant byte address 0x4 - core index']
  #allocation1 [shape = 'u32[144,128]{1,0:T(1,128)}', space=vmem, size = 0x12000, scoped, tag = 'internal scratch']
  %s0 = inlined_call_operand.hbm [shape: f32[1,8,1024], index: 0, kind: input, shape index: {}]
  %s1 = inlined_call_operand.hbm [shape: f32[1,8,1024], index: 1, kind: input, shape index: {}]
  %s2 = inlined_call_operand.hbm [shape: f32[1,8,1024], index: 2, kind: input, shape index: {}]
  %s3 = inlined_call_operand.vmem [shape: f32[8,72], index: 3, kind: input, shape index: {}]
  %s4 = inlined_call_operand.vmem [shape: f32[8,1], index: 4, kind: input, shape index: {}]
  %s5 = inlined_call_operand.vmem [shape: f32[8,72], index: 5, kind: input, shape index: {}]
  %s6 = inlined_call_operand.vmem [shape: f32[8,1], index: 6, kind: input, shape index: {}]
  %s7 = inlined_call_operand.hbm [shape: f32[1,8,1024], index: 7, kind: output, shape index: {}]
  %s8 = sld [smem:[#allocation0]]
  $region73: #{tpu_custom_call.1} parent=0
    _
  %s10 = ssub.s32 1, %s8
  %s11 = scalar_select 0, %s10, %s8
  $region1: #{tpu_custom_call.1} parent=0
    #allocation2 [shape = 'u8[32768]{0}', space=vmem, size = 0x8000, scoped, tag = 'input window, operand 0']
    #allocation3 [shape = 's32[2]{0}', space=sflag, size = 0x8, scoped, tag = 'scoped memory for tpu_custom_call.1']
    #allocation4 [shape = 's32[2]{0}', space=sflag, size = 0x8, scoped, tag = 'scoped memory for tpu_custom_call.1']
    #allocation5 [shape = 'u8[32768]{0}', space=vmem, size = 0x8000, scoped, tag = 'input window, operand 1']
    #allocation6 [shape = 's32[2]{0}', space=sflag, size = 0x8, scoped, tag = 'scoped memory for tpu_custom_call.1']
    #allocation7 [shape = 'u8[32768]{0}', space=vmem, size = 0x8000, scoped, tag = 'input window, operand 2']
    #allocation8 [shape = 'u8[32768]{0}', space=vmem, size = 0x8000, scoped, tag = 'output window, operand 0']
    %12 = vsyncpa [#allocation3], 0
    %s13 = scalar_lea.sflag [#allocation3], 1
    %14 = vsyncpa %s13, 0
    %15 = vsyncpa [#allocation6], 0
    %s16 = scalar_lea.sflag [#allocation6], 1
    %17 = vsyncpa %s16, 0
    %18 = vsyncpa [#allocation4], 0
    %s19 = scalar_lea.sflag [#allocation4], 1
    %20 = vsyncpa %s19, 0
    loop: start=0, step=1, limit=4
    $region2: #{tpu_custom_call.1} parent=1 // loop_pre_header
      _
    $region3: #{tpu_custom_call.1} parent=1 // loop_header
      %s22 = sphi 0, %s26
      %p23 = scmp.ge.s32.totalorder %s22, 4
      %s29 = sphi 0, %s41
      %s30 = sphi 0, %s37
      %s31 = sphi 0, %s29
      %s32 = sphi 0, %s30
      %s33 = sphi 0, %s31
      %s34 = sphi 0, %s32
      %s52 = sphi 0, %s54
      %s55 = sphi 0, %s52
      %s56 = sphi 0, %s55
      %s72 = sphi 0, %s56
      %s80 = sphi 0, %s82
      %s83 = sphi 0, %s80
      %s84 = sphi 0, %s83
      %s100 = sphi 0, %s84
      %s114 = sphi 0, %s116
      %s117 = sphi 0, %s114
      %s118 = sphi 0, %s117
      %s134 = sphi 0, %s118
      %s138 = sphi 0, %s138
      %s140 = sphi 0, %s138
      %s141 = sphi 0, %s140
      %s155 = sphi 0, %s141
      %s159 = sphi 0, %s159
      %s161 = sphi 0, %s159
      %s162 = sphi 0, %s161
      %s176 = sphi 0, %s162
      %s180 = sphi 0, %s180
      %s182 = sphi 0, %s180
      %s183 = sphi 0, %s182
      %s197 = sphi 0, %s183
      %s201 = sphi 0, %s201
      %s203 = sphi 0, %s201
      %s204 = sphi 0, %s203
      %s218 = sphi 0, %s204
      %s226 = sphi 0, %s228
      %s229 = sphi 0, %s226
      %s230 = sphi 0, %s229
      %s246 = sphi 0, %s230
    $region4: #{tpu_custom_call.1} parent=1 // loop_header_branch
      %25 = sbr.rel (%p23) target = $region8
    $region5: #{tpu_custom_call.1} parent=1 // loop_body
      %s27 = ssub.s32 %s22, 1
      %s28 = ssub.s32 %s22, 2
      %s35 = sadd.s32 1, %s30
      %p36 = scmp.ge.s32.totalorder %s35, 2
      %s37 = scalar_select %p36, 0, %s35
      %s38 = sadd.s32 1, %s29
      %s39 = scalar_select %p36, %s38, %s29
      %p40 = scmp.ge.s32.totalorder %s39, 1
      %s41 = scalar_select %p40, 0, %s39
      %s42 = ssub.s32 %s30, 1
      %p43 = scmp.gt.s32.totalorder %s42, 0
      %s44 = scalar_select %p43, %s42, 0
      %s45 = ssub.s32 %s37, 1
      %p46 = scmp.gt.s32.totalorder %s45, 0
      %s47 = scalar_select %p46, %s45, 0
      %s48 = ssub.s32 %s29, %s41
      %s49 = ssub.s32 %s44, %s47
      %s50 = sor.u32 %s48, %s49
      %p51 = scmp.eq.s32.totalorder %s50, 0
      %s53 = sadd.s32 %s52, 1
      %s54 = scalar_select %p51, %s52, %s53
      %p57 = pneg %p51
      %p58 = scmp.eq.s32.totalorder %s22, 1
      %p59 = por %p57, %p58
      %p60 = scmp.ne.s32.totalorder %s52, %s55
      %p61 = scmp.eq.s32.totalorder %s22, 0
      %p62 = por %p60, %p61
      %p63 = scmp.ne.s32.totalorder %s52, %s55
      %p64 = scmp.eq.s32.totalorder %s27, 1
      %p65 = por %p63, %p64
      %p66 = scmp.ne.s32.totalorder %s55, %s56
      %p67 = scmp.eq.s32.totalorder %s27, 0
      %p68 = por %p66, %p67
      %p69 = scmp.ne.s32.totalorder %s55, %s56
      %p70 = scmp.eq.s32.totalorder %s28, 1
      %p71 = por %p69, %p70
      %p73 = scmp.ne.s32.totalorder %s56, %s72
      %p74 = scmp.eq.s32.totalorder %s28, 0
      %p75 = por %p73, %p74
      %s76 = ssub.s32 %s29, %s41
      %s77 = ssub.s32 %s30, %s37
      %s78 = sor.u32 %s76, %s77
      %p79 = scmp.eq.s32.totalorder %s78, 0
      %s81 = sadd.s32 %s80, 1
      %s82 = scalar_select %p79, %s80, %s81
      %p85 = pneg %p79
      %p86 = scmp.eq.s32.totalorder %s22, 1
      %p87 = por %p85, %p86
      %p88 = scmp.ne.s32.totalorder %s80, %s83
      %p89 = scmp.eq.s32.totalorder %s22, 0
      %p90 = por %p88, %p89
      %p91 = scmp.ne.s32.totalorder %s80, %s83
      %p92 = scmp.eq.s32.totalorder %s27, 1
      %p93 = por %p91, %p92
      %p94 = scmp.ne.s32.totalorder %s83, %s84
      %p95 = scmp.eq.s32.totalorder %s27, 0
      %p96 = por %p94, %p95
      %p97 = scmp.ne.s32.totalorder %s83, %s84
      %p98 = scmp.eq.s32.totalorder %s28, 1
      %p99 = por %p97, %p98
      %p101 = scmp.ne.s32.totalorder %s84, %s100
      %p102 = scmp.eq.s32.totalorder %s28, 0
      %p103 = por %p101, %p102
      %s104 = sadd.s32 %s30, 1
      %p105 = scmp.lt.s32.totalorder %s104, 1
      %s106 = scalar_select %p105, %s104, 1
      %s107 = sadd.s32 %s37, 1
      %p108 = scmp.lt.s32.totalorder %s107, 1
      %s109 = scalar_select %p108, %s107, 1
      %s110 = ssub.s32 %s29, %s41
      %s111 = ssub.s32 %s106, %s109
      %s112 = sor.u32 %s110, %s111
      %p113 = scmp.eq.s32.totalorder %s112, 0
      %s115 = sadd.s32 %s114, 1
      %s116 = scalar_select %p113, %s114, %s115
      %p119 = pneg %p113
      %p120 = scmp.eq.s32.totalorder %s22, 1
      %p121 = por %p119, %p120
      %p122 = scmp.ne.s32.totalorder %s114, %s117
      %p123 = scmp.eq.s32.totalorder %s22, 0
      %p124 = por %p122, %p123
      %p125 = scmp.ne.s32.totalorder %s114, %s117
      %p126 = scmp.eq.s32.totalorder %s27, 1
      %p127 = por %p125, %p126
      %p128 = scmp.ne.s32.totalorder %s117, %s118
      %p129 = scmp.eq.s32.totalorder %s27, 0
      %p130 = por %p128, %p129
      %p131 = scmp.ne.s32.totalorder %s117, %s118
      %p132 = scmp.eq.s32.totalorder %s28, 1
      %p133 = por %p131, %p132
      %p135 = scmp.ne.s32.totalorder %s118, %s134
      %p136 = scmp.eq.s32.totalorder %s28, 0
      %p137 = por %p135, %p136
      %s139 = sadd.s32 %s138, 1
      %p142 = scmp.eq.s32.totalorder %s22, 1
      %p143 = scmp.ne.s32.totalorder %s138, %s140
      %p144 = scmp.eq.s32.totalorder %s22, 0
      %p145 = por %p143, %p144
      %p146 = scmp.ne.s32.totalorder %s138, %s140
      %p147 = scmp.eq.s32.totalorder %s27, 1
      %p148 = por %p146, %p147
      %p149 = scmp.ne.s32.totalorder %s140, %s141
      %p150 = scmp.eq.s32.totalorder %s27, 0
      %p151 = por %p149, %p150
      %p152 = scmp.ne.s32.totalorder %s140, %s141
      %p153 = scmp.eq.s32.totalorder %s28, 1
      %p154 = por %p152, %p153
      %p156 = scmp.ne.s32.totalorder %s141, %s155
      %p157 = scmp.eq.s32.totalorder %s28, 0
      %p158 = por %p156, %p157
      %s160 = sadd.s32 %s159, 1
      %p163 = scmp.eq.s32.totalorder %s22, 1
      %p164 = scmp.ne.s32.totalorder %s159, %s161
      %p165 = scmp.eq.s32.totalorder %s22, 0
      %p166 = por %p164, %p165
      %p167 = scmp.ne.s32.totalorder %s159, %s161
      %p168 = scmp.eq.s32.totalorder %s27, 1
      %p169 = por %p167, %p168
      %p170 = scmp.ne.s32.totalorder %s161, %s162
      %p171 = scmp.eq.s32.totalorder %s27, 0
      %p172 = por %p170, %p171
      %p173 = scmp.ne.s32.totalorder %s161, %s162
      %p174 = scmp.eq.s32.totalorder %s28, 1
      %p175 = por %p173, %p174
      %p177 = scmp.ne.s32.totalorder %s162, %s176
      %p178 = scmp.eq.s32.totalorder %s28, 0
      %p179 = por %p177, %p178
      %s181 = sadd.s32 %s180, 1
      %p184 = scmp.eq.s32.totalorder %s22, 1
      %p185 = scmp.ne.s32.totalorder %s180, %s182
      %p186 = scmp.eq.s32.totalorder %s22, 0
      %p187 = por %p185, %p186
      %p188 = scmp.ne.s32.totalorder %s180, %s182
      %p189 = scmp.eq.s32.totalorder %s27, 1
      %p190 = por %p188, %p189
      %p191 = scmp.ne.s32.totalorder %s182, %s183
      %p192 = scmp.eq.s32.totalorder %s27, 0
      %p193 = por %p191, %p192
      %p194 = scmp.ne.s32.totalorder %s182, %s183
      %p195 = scmp.eq.s32.totalorder %s28, 1
      %p196 = por %p194, %p195
      %p198 = scmp.ne.s32.totalorder %s183, %s197
      %p199 = scmp.eq.s32.totalorder %s28, 0
      %p200 = por %p198, %p199
      %s202 = sadd.s32 %s201, 1
      %p205 = scmp.eq.s32.totalorder %s22, 1
      %p206 = scmp.ne.s32.totalorder %s201, %s203
      %p207 = scmp.eq.s32.totalorder %s22, 0
      %p208 = por %p206, %p207
      %p209 = scmp.ne.s32.totalorder %s201, %s203
      %p210 = scmp.eq.s32.totalorder %s27, 1
      %p211 = por %p209, %p210
      %p212 = scmp.ne.s32.totalorder %s203, %s204
      %p213 = scmp.eq.s32.totalorder %s27, 0
      %p214 = por %p212, %p213
      %p215 = scmp.ne.s32.totalorder %s203, %s204
      %p216 = scmp.eq.s32.totalorder %s28, 1
      %p217 = por %p215, %p216
      %p219 = scmp.ne.s32.totalorder %s204, %s218
      %p220 = scmp.eq.s32.totalorder %s28, 0
      %p221 = por %p219, %p220
      %s222 = ssub.s32 %s29, %s41
      %s223 = ssub.s32 %s30, %s37
      %s224 = sor.u32 %s222, %s223
      %p225 = scmp.eq.s32.totalorder %s224, 0
      %s227 = sadd.s32 %s226, 1
      %s228 = scalar_select %p225, %s226, %s227
      %p231 = pneg %p225
      %p232 = scmp.eq.s32.totalorder %s22, 1
      %p233 = por %p231, %p232
      %p234 = scmp.ne.s32.totalorder %s226, %s229
      %p235 = scmp.eq.s32.totalorder %s22, 0
      %p236 = por %p234, %p235
      %p237 = scmp.ne.s32.totalorder %s226, %s229
      %p238 = scmp.eq.s32.totalorder %s27, 1
      %p239 = por %p237, %p238
      %p240 = scmp.ne.s32.totalorder %s229, %s230
      %p241 = scmp.eq.s32.totalorder %s27, 0
      %p242 = por %p240, %p241
      %p243 = scmp.ne.s32.totalorder %s229, %s230
      %p244 = scmp.eq.s32.totalorder %s28, 1
      %p245 = por %p243, %p244
      %p247 = scmp.ne.s32.totalorder %s230, %s246
      %p248 = scmp.eq.s32.totalorder %s28, 0
      %p249 = por %p247, %p248
      %p250 = scmp.le.s32.totalorder 1, %s22
      %p251 = scmp.lt.s32.totalorder %s22, 3
      %p252 = pnand %p250, %p251
      %p253 = pneg %p252
      // Predicated region
      $region9: #{tpu_custom_call.1} parent=5 // pred_check
        _
      $region10: #{tpu_custom_call.1} parent=5 // pred_check_branch
        %255 = sbr.rel (%p252) target = $region12
      $region11: #{tpu_custom_call.1} parent=5 // pred_region
        %s256 = ssub.s32 %s22, 1
        // Predicated region
        $region13: #{tpu_custom_call.1} parent=11 // pred_check
          %p257 = pneg %p151
        $region14: #{tpu_custom_call.1} parent=11 // pred_check_branch
          %259 = sbr.rel (%p257) target = $region16
        $region15: #{tpu_custom_call.1} parent=11 // pred_region
          _
        $region16: #{tpu_custom_call.1} parent=11 // pred_fallthru
          _
        // Predicated region
        $region17: #{tpu_custom_call.1} parent=11 // pred_check
          %p260 = pneg %p172
        $region18: #{tpu_custom_call.1} parent=11 // pred_check_branch
          %262 = sbr.rel (%p260) target = $region20
        $region19: #{tpu_custom_call.1} parent=11 // pred_region
          _
        $region20: #{tpu_custom_call.1} parent=11 // pred_fallthru
          _
        // Predicated region
        $region21: #{tpu_custom_call.1} parent=11 // pred_check
          %p263 = pneg %p193
        $region22: #{tpu_custom_call.1} parent=11 // pred_check_branch
          %265 = sbr.rel (%p263) target = $region24
        $region23: #{tpu_custom_call.1} parent=11 // pred_region
          _
        $region24: #{tpu_custom_call.1} parent=11 // pred_fallthru
          _
        // Predicated region
        $region25: #{tpu_custom_call.1} parent=11 // pred_check
          %p266 = pneg %p214
        $region26: #{tpu_custom_call.1} parent=11 // pred_check_branch
          %268 = sbr.rel (%p266) target = $region28
        $region27: #{tpu_custom_call.1} parent=11 // pred_region
          _
        $region28: #{tpu_custom_call.1} parent=11 // pred_fallthru
          _
      $region12: #{tpu_custom_call.1} parent=5 // pred_fallthru
        _
      %p269 = scmp.lt.s32.totalorder %s22, 2
      // Predicated region
      $region29: #{tpu_custom_call.1} parent=5 // pred_check
        %p270 = pneg %p269
      $region30: #{tpu_custom_call.1} parent=5 // pred_check_branch
        %272 = sbr.rel (%p270) target = $region32
      $region31: #{tpu_custom_call.1} parent=5 // pred_region
        // Predicated region
        $region33: #{tpu_custom_call.1} parent=31 // pred_check
          %p273 = pneg %p62
        $region34: #{tpu_custom_call.1} parent=31 // pred_check_branch
          %275 = sbr.rel (%p273) target = $region36
        $region35: #{tpu_custom_call.1} parent=31 // pred_region
          %s276 = sand.u32 %s52, 1
          %s277 = scalar_lea.sflag [#allocation3], %s276
          %s278 = sand.u32 %s52, 1
          %s279 = smul.addr %s278, 32
          %s280 = scalar_lea.vmem [#allocation2], %s279
          %s281 = ssub.s32 %s30, 1
          %p282 = scmp.gt.s32.totalorder %s281, 0
          %s283 = scalar_select %p282, %s281, 0
          %s284 = smul.u32 4, %s283
          %s286 = ssub.s32 512, 512
          %287 = vsyncadd %s277, %s286
          %s288 = smul.addr %s29, 8
          %s289 = sadd.s32 %s284, %s288
          %s290 = smul.addr %s289, 128
          %s291 = scalar_lea.hbm %s0, %s290
          %s293 = sshll.u32 %s280, 4
          %s294 = int_to_ptr.vmem [resolvable:$true] %s293
          %296 = dma.hbm_to_vmem [thread:$0]  %s291, 512, %s294, %s277
        $region36: #{tpu_custom_call.1} parent=31 // pred_fallthru
          _
        // Predicated region
        $region37: #{tpu_custom_call.1} parent=31 // pred_check
          %p297 = pneg %p90
        $region38: #{tpu_custom_call.1} parent=31 // pred_check_branch
          %299 = sbr.rel (%p297) target = $region40
        $region39: #{tpu_custom_call.1} parent=31 // pred_region
          %s300 = sand.u32 %s22, 1
          %s301 = scalar_lea.sflag [#allocation6], %s300
          %s302 = sand.u32 %s80, 1
          %s303 = smul.addr %s302, 32
          %s304 = scalar_lea.vmem [#allocation5], %s303
          %s305 = smul.u32 4, %s30
          %s307 = ssub.s32 512, 512
          %308 = vsyncadd %s301, %s307
          %s309 = smul.addr %s29, 8
          %s310 = sadd.s32 %s305, %s309
          %s311 = smul.addr %s310, 128
          %s312 = scalar_lea.hbm %s1, %s311
          %s314 = sshll.u32 %s304, 4
          %s315 = int_to_ptr.vmem [resolvable:$true] %s314
          %317 = dma.hbm_to_vmem [thread:$0]  %s312, 512, %s315, %s301
        $region40: #{tpu_custom_call.1} parent=31 // pred_fallthru
          _
        // Predicated region
        $region41: #{tpu_custom_call.1} parent=31 // pred_check
          %p318 = pneg %p124
        $region42: #{tpu_custom_call.1} parent=31 // pred_check_branch
          %320 = sbr.rel (%p318) target = $region44
        $region43: #{tpu_custom_call.1} parent=31 // pred_region
          %s321 = sand.u32 %s22, 1
          %s322 = scalar_lea.sflag [#allocation6], %s321
          %s323 = sand.u32 %s114, 1
          %s324 = smul.addr %s323, 32
          %s325 = scalar_lea.vmem [#allocation7], %s324
          %s326 = sadd.s32 %s30, 1
          %p327 = scmp.lt.s32.totalorder %s326, 1
          %s328 = scalar_select %p327, %s326, 1
          %s329 = smul.u32 4, %s328
          %s331 = ssub.s32 512, 512
          %332 = vsyncadd %s322, %s331
          %s333 = smul.addr %s29, 8
          %s334 = sadd.s32 %s329, %s333
          %s335 = smul.addr %s334, 128
          %s336 = scalar_lea.hbm %s2, %s335
          %s338 = sshll.u32 %s325, 4
          %s339 = int_to_ptr.vmem [resolvable:$true] %s338
          %341 = dma.hbm_to_vmem [thread:$0]  %s336, 512, %s339, %s322
        $region44: #{tpu_custom_call.1} parent=31 // pred_fallthru
          _
      $region32: #{tpu_custom_call.1} parent=5 // pred_fallthru
        _
      %p342 = scmp.le.s32.totalorder 1, %s22
      %p343 = scmp.lt.s32.totalorder %s22, 3
      %p344 = pnand %p342, %p343
      %p345 = pneg %p344
      // Predicated region
      $region45: #{tpu_custom_call.1} parent=5 // pred_check
        _
      $region46: #{tpu_custom_call.1} parent=5 // pred_check_branch
        %347 = sbr.rel (%p344) target = $region48
      $region47: #{tpu_custom_call.1} parent=5 // pred_region
        %s348 = ssub.s32 %s22, 1
        %s349 = sand.u32 %s55, 1
        %s350 = scalar_lea.sflag [#allocation3], %s349
        %s351 = sand.u32 %s55, 1
        %s352 = smul.addr %s351, 32
        %s353 = scalar_lea.vmem [#allocation2], %s352
        // Predicated region
        $region49: #{tpu_custom_call.1} parent=47 // pred_check
          %p354 = pneg %p68
        $region50: #{tpu_custom_call.1} parent=47 // pred_check_branch
          %356 = sbr.rel (%p354) target = $region52
        $region51: #{tpu_custom_call.1} parent=47 // pred_region
          %357 = dma.done %s350, 512
        $region52: #{tpu_custom_call.1} parent=47 // pred_fallthru
          _
        %s358 = sand.u32 %s27, 1
        %s359 = scalar_lea.sflag [#allocation6], %s358
        %s360 = sand.u32 %s83, 1
        %s361 = smul.addr %s360, 32
        %s362 = scalar_lea.vmem [#allocation5], %s361
        // Predicated region
        $region53: #{tpu_custom_call.1} parent=47 // pred_check
          %p363 = pneg %p96
        $region54: #{tpu_custom_call.1} parent=47 // pred_check_branch
          %365 = sbr.rel (%p363) target = $region56
        $region55: #{tpu_custom_call.1} parent=47 // pred_region
          %366 = dma.done %s359, 512
        $region56: #{tpu_custom_call.1} parent=47 // pred_fallthru
          _
        %s367 = sand.u32 %s27, 1
        %s368 = scalar_lea.sflag [#allocation6], %s367
        %s369 = sand.u32 %s117, 1
        %s370 = smul.addr %s369, 32
        %s371 = scalar_lea.vmem [#allocation7], %s370
        // Predicated region
        $region57: #{tpu_custom_call.1} parent=47 // pred_check
          %p372 = pneg %p130
        $region58: #{tpu_custom_call.1} parent=47 // pred_check_branch
          %374 = sbr.rel (%p372) target = $region60
        $region59: #{tpu_custom_call.1} parent=47 // pred_region
          %375 = dma.done %s368, 512
        $region60: #{tpu_custom_call.1} parent=47 // pred_fallthru
          _
        %s376 = sand.u32 %s55, 1
        %s377 = scalar_lea.sflag [#allocation3], %s376
        %s378 = sand.u32 %s55, 1
        %s379 = smul.addr %s378, 32
        %s380 = scalar_lea.vmem [#allocation2], %s379
        %p381 = pneg %p68
        %p382 = pneg %p65
        %s383 = sand.u32 %s27, 1
        %s384 = scalar_lea.sflag [#allocation6], %s383
        %s385 = sand.u32 %s83, 1
        %s386 = smul.addr %s385, 32
        %s387 = scalar_lea.vmem [#allocation5], %s386
        %p388 = pneg %p96
        %p389 = pneg %p93
        %s390 = sand.u32 %s27, 1
        %s391 = scalar_lea.sflag [#allocation6], %s390
        %s392 = sand.u32 %s117, 1
        %s393 = smul.addr %s392, 32
        %s394 = scalar_lea.vmem [#allocation7], %s393
        %p395 = pneg %p130
        %p396 = pneg %p127
        %p397 = pneg %p151
        %p398 = pneg %p148
        %p399 = pneg %p172
        %p400 = pneg %p169
        %p401 = pneg %p193
        %p402 = pneg %p190
        %p403 = pneg %p214
        %p404 = pneg %p211
        %p405 = pneg %p242
        %p406 = pneg %p239
        %s407 = sand.u32 %s229, 1
        %s408 = scalar_lea.sflag [#allocation4], %s407
        %s409 = sand.u32 %s229, 1
        %s410 = smul.addr %s409, 32
        %s411 = scalar_lea.vmem [#allocation8], %s410
        %s412 = ssub.s32 %s32, 1
        %p413 = scmp.gt.s32.totalorder %s412, 0
        %s414 = scalar_select %p413, %s412, 0
        %s415 = smul.u32 4, %s414
        %s416 = smul.u32 4, %s32
        %s417 = sadd.s32 %s32, 1
        %p418 = scmp.lt.s32.totalorder %s417, 1
        %s419 = scalar_select %p418, %s417, 1
        %s420 = smul.u32 4, %s419
        %s421 = smul.u32 4, %s32
        %p422 = scmp.eq.s32.totalorder %s32, 0
        %p423 = scmp.eq.s32.totalorder %s32, 1
        %v424 = vlaneseq
        %v425 = vand.u32 %v424, 127
        %v426 = vadd.s32 %v425, 128
        %v427 = vadd.s32 %v425, 256
        %v428 = vadd.s32 %v425, 384
        %v429 = vadd.s32 %v425, 512
        %v430 = vadd.s32 %v425, 640
        %v431 = vadd.s32 %v425, 768
        %v432 = vadd.s32 %v425, 896
        %vm433 = vcmp.lt.s32.totalorder %v425, 0
        %v434 = vsub.s32 0, %v425
        %v435 = vsel %vm433, %v434, %v425
        %v436 = vshrl.u32 %v435, 7
        %v437 = vand.u32 %v435, 127
        %v438 = vsub.s32 0, %v437
        %v439 = vsel %vm433, %v438, %v437
        %vm440 = vcmp.lt.s32.totalorder %v426, 0
        %v441 = vsub.s32 0, %v426
        %v442 = vsel %vm440, %v441, %v426
        %v443 = vshrl.u32 %v442, 7
        %v444 = vand.u32 %v442, 127
        %v445 = vsub.s32 0, %v444
        %v446 = vsel %vm440, %v445, %v444
        %vm447 = vcmp.lt.s32.totalorder %v427, 0
        %v448 = vsub.s32 0, %v427
        %v449 = vsel %vm447, %v448, %v427
        %v450 = vshrl.u32 %v449, 7
        %v451 = vand.u32 %v449, 127
        %v452 = vsub.s32 0, %v451
        %v453 = vsel %vm447, %v452, %v451
        %vm454 = vcmp.lt.s32.totalorder %v428, 0
        %v455 = vsub.s32 0, %v428
        %v456 = vsel %vm454, %v455, %v428
        %v457 = vshrl.u32 %v456, 7
        %v458 = vand.u32 %v456, 127
        %v459 = vsub.s32 0, %v458
        %v460 = vsel %vm454, %v459, %v458
        %vm461 = vcmp.lt.s32.totalorder %v429, 0
        %v462 = vsub.s32 0, %v429
        %v463 = vsel %vm461, %v462, %v429
        %v464 = vshrl.u32 %v463, 7
        %v465 = vand.u32 %v463, 127
        %v466 = vsub.s32 0, %v465
        %v467 = vsel %vm461, %v466, %v465
        %vm468 = vcmp.lt.s32.totalorder %v430, 0
        %v469 = vsub.s32 0, %v430
        %v470 = vsel %vm468, %v469, %v430
        %v471 = vshrl.u32 %v470, 7
        %v472 = vand.u32 %v470, 127
        %v473 = vsub.s32 0, %v472
        %v474 = vsel %vm468, %v473, %v472
        %vm475 = vcmp.lt.s32.totalorder %v431, 0
        %v476 = vsub.s32 0, %v431
        %v477 = vsel %vm475, %v476, %v431
        %v478 = vshrl.u32 %v477, 7
        %v479 = vand.u32 %v477, 127
        %v480 = vsub.s32 0, %v479
        %v481 = vsel %vm475, %v480, %v479
        %vm482 = vcmp.lt.s32.totalorder %v432, 0
        %v483 = vsub.s32 0, %v432
        %v484 = vsel %vm482, %v483, %v432
        %v485 = vshrl.u32 %v484, 7
        %v486 = vand.u32 %v484, 127
        %v487 = vsub.s32 0, %v486
        %v488 = vsel %vm482, %v487, %v486
        %vm489 = vcmp.ne.s32.totalorder %v439, 0
        %vm490 = vcmp.ne.s32.totalorder %v446, 0
        %vm491 = vcmp.ne.s32.totalorder %v453, 0
        %vm492 = vcmp.ne.s32.totalorder %v460, 0
        %vm493 = vcmp.ne.s32.totalorder %v467, 0
        %vm494 = vcmp.ne.s32.totalorder %v474, 0
        %vm495 = vcmp.ne.s32.totalorder %v481, 0
        %vm496 = vcmp.ne.s32.totalorder %v488, 0
        %vm497 = vcmp.lt.s32.totalorder %v439, 0
        %vm498 = vcmp.lt.s32.totalorder %v446, 0
        %vm499 = vcmp.lt.s32.totalorder %v453, 0
        %vm500 = vcmp.lt.s32.totalorder %v460, 0
        %vm501 = vcmp.lt.s32.totalorder %v467, 0
        %vm502 = vcmp.lt.s32.totalorder %v474, 0
        %vm503 = vcmp.lt.s32.totalorder %v481, 0
        %vm504 = vcmp.lt.s32.totalorder %v488, 0
        %vm505 = vmand %vm497, %vm489
        %vm506 = vmand %vm498, %vm490
        %vm507 = vmand %vm499, %vm491
        %vm508 = vmand %vm500, %vm492
        %vm509 = vmand %vm501, %vm493
        %vm510 = vmand %vm502, %vm494
        %vm511 = vmand %vm503, %vm495
        %vm512 = vmand %vm504, %vm496
        %v513 = vadd.s32 %v439, 128
        %v514 = vadd.s32 %v446, 128
        %v515 = vadd.s32 %v453, 128
        %v516 = vadd.s32 %v460, 128
        %v517 = vadd.s32 %v467, 128
        %v518 = vadd.s32 %v474, 128
        %v519 = vadd.s32 %v481, 128
        %v520 = vadd.s32 %v488, 128
        %v521 = vsel %vm505, %v513, %v439
        %v522 = vsel %vm506, %v514, %v446
        %v523 = vsel %vm507, %v515, %v453
        %v524 = vsel %vm508, %v516, %v460
        %v525 = vsel %vm509, %v517, %v467
        %v526 = vsel %vm510, %v518, %v474
        %v527 = vsel %vm511, %v519, %v481
        %v528 = vsel %vm512, %v520, %v488
        %vm529 = vcmp.ge.s32.totalorder %v521, 1
        %vm530 = vcmp.ge.s32.totalorder %v522, 1
        %vm531 = vcmp.ge.s32.totalorder %v523, 1
        %vm532 = vcmp.ge.s32.totalorder %v524, 1
        %vm533 = vcmp.ge.s32.totalorder %v525, 1
        %vm534 = vcmp.ge.s32.totalorder %v526, 1
        %vm535 = vcmp.ge.s32.totalorder %v527, 1
        %vm536 = vcmp.ge.s32.totalorder %v528, 1
        %vm537 = vcmp.le.s32.totalorder %v521, 126
        %vm538 = vcmp.le.s32.totalorder %v522, 126
        %vm539 = vcmp.le.s32.totalorder %v523, 126
        %vm540 = vcmp.le.s32.totalorder %v524, 126
        %vm541 = vcmp.le.s32.totalorder %v525, 126
        %vm542 = vcmp.le.s32.totalorder %v526, 126
        %vm543 = vcmp.le.s32.totalorder %v527, 126
        %vm544 = vcmp.le.s32.totalorder %v528, 126
        %vm545 = vcmp.ge.s32.totalorder %v425, 128
        %vm546 = vcmp.ge.s32.totalorder %v426, 128
        %vm547 = vcmp.ge.s32.totalorder %v427, 128
        %vm548 = vcmp.ge.s32.totalorder %v428, 128
        %vm549 = vcmp.ge.s32.totalorder %v429, 128
        %vm550 = vcmp.ge.s32.totalorder %v430, 128
        %vm551 = vcmp.ge.s32.totalorder %v431, 128
        %vm552 = vcmp.ge.s32.totalorder %v432, 128
        %vm553 = vcmp.lt.s32.totalorder %v425, 256
        %vm554 = vcmp.lt.s32.totalorder %v426, 256
        %vm555 = vcmp.lt.s32.totalorder %v427, 256
        %vm556 = vcmp.lt.s32.totalorder %v428, 256
        %vm557 = vcmp.lt.s32.totalorder %v429, 256
        %vm558 = vcmp.lt.s32.totalorder %v430, 256
        %vm559 = vcmp.lt.s32.totalorder %v431, 256
        %vm560 = vcmp.lt.s32.totalorder %v432, 256
        %vm561 = vmand %vm545, %vm553
        %vm562 = vmand %vm546, %vm554
        %vm563 = vmand %vm547, %vm555
        %vm564 = vmand %vm548, %vm556
        %vm565 = vmand %vm549, %vm557
        %vm566 = vmand %vm550, %vm558
        %vm567 = vmand %vm551, %vm559
        %vm568 = vmand %vm552, %vm560
        %vm569 = vcmp.ge.s32.totalorder %v425, 768
        %vm570 = vcmp.ge.s32.totalorder %v426, 768
        %vm571 = vcmp.ge.s32.totalorder %v427, 768
        %vm572 = vcmp.ge.s32.totalorder %v428, 768
        %vm573 = vcmp.ge.s32.totalorder %v429, 768
        %vm574 = vcmp.ge.s32.totalorder %v430, 768
        %vm575 = vcmp.ge.s32.totalorder %v431, 768
        %vm576 = vcmp.ge.s32.totalorder %v432, 768
        %vm577 = vcmp.lt.s32.totalorder %v425, 896
        %vm578 = vcmp.lt.s32.totalorder %v426, 896
        %vm579 = vcmp.lt.s32.totalorder %v427, 896
        %vm580 = vcmp.lt.s32.totalorder %v428, 896
        %vm581 = vcmp.lt.s32.totalorder %v429, 896
        %vm582 = vcmp.lt.s32.totalorder %v430, 896
        %vm583 = vcmp.lt.s32.totalorder %v431, 896
        %vm584 = vcmp.lt.s32.totalorder %v432, 896
        %vm585 = vmand %vm569, %vm577
        %vm586 = vmand %vm570, %vm578
        %vm587 = vmand %vm571, %vm579
        %vm588 = vmand %vm572, %vm580
        %vm589 = vmand %vm573, %vm581
        %vm590 = vmand %vm574, %vm582
        %vm591 = vmand %vm575, %vm583
        %vm592 = vmand %vm576, %vm584
        %s593 = scalar_select %p422, 1, 0
        %v594 = vstv %s593
        %vm595 = vcmp.eq.s32.totalorder %v594, 1
        %vm596 = vmand %vm595, %vm561
        %vm597 = vmand %vm595, %vm562
        %vm598 = vmand %vm595, %vm563
        %vm599 = vmand %vm595, %vm564
        %vm600 = vmand %vm595, %vm565
        %vm601 = vmand %vm595, %vm566
        %vm602 = vmand %vm595, %vm567
        %vm603 = vmand %vm595, %vm568
        %s604 = scalar_select %p423, 1, 0
        %v605 = vstv %s604
        %vm606 = vcmp.eq.s32.totalorder %v605, 1
        %vm607 = vmand %vm606, %vm585
        %vm608 = vmand %vm606, %vm586
        %vm609 = vmand %vm606, %vm587
        %vm610 = vmand %vm606, %vm588
        %vm611 = vmand %vm606, %vm589
        %vm612 = vmand %vm606, %vm590
        %vm613 = vmand %vm606, %vm591
        %vm614 = vmand %vm606, %vm592
        %vm615 = vmor %vm596, %vm607
        %vm616 = vmor %vm597, %vm608
        %vm617 = vmor %vm598, %vm609
        %vm618 = vmor %vm599, %vm610
        %vm619 = vmor %vm600, %vm611
        %vm620 = vmor %vm601, %vm612
        %vm621 = vmor %vm602, %vm613
        %vm622 = vmor %vm603, %vm614
        %v623 = vld [vmem:[%s353 + $0x10] sm:$0xff]
        %v624 = vld [vmem:[%s353 + $0x18] sm:$0xff]
        %v625 = vld [vmem:[%s371] sm:$0xff]
        %v626 = vld [vmem:[%s371 + $0x8] sm:$0xff]
        %v627 = vsel %vm595, 0.0, %v623
        %v628 = vsel %vm595, 0.0, %v624
        %v629 = vsel %vm606, 0.0, %v625
        %v630 = vsel %vm606, 0.0, %v626
        %v631 = vld [vmem:[%s362] sm:$0xff]
        %v632 = vld [vmem:[%s362 + $0x8] sm:$0xff]
        %v633 = vld [vmem:[%s362 + $0x10] sm:$0xff]
        %v634 = vld [vmem:[%s362 + $0x18] sm:$0xff]
        %635 = vrot.lane.b32.xlu0 %v627, 1
        %v636 = vpop.permute.xlu0 %635
        %637 = vrot.lane.b32.xlu0 %v628, 1
        %v638 = vpop.permute.xlu0 %637
        %639 = vrot.lane.b32.xlu0 %v631, 1
        %v640 = vpop.permute.xlu0 %639
        %641 = vrot.lane.b32.xlu0 %v632, 1
        %v642 = vpop.permute.xlu0 %641
        %643 = vrot.lane.b32.xlu0 %v633, 1
        %v644 = vpop.permute.xlu0 %643
        %645 = vrot.lane.b32.xlu0 %v634, 1
        %v646 = vpop.permute.xlu0 %645
        %647 = vrot.lane.b32.xlu0 %v629, 1
        %v648 = vpop.permute.xlu0 %647
        %649 = vrot.lane.b32.xlu0 %v630, 1
        %v650 = vpop.permute.xlu0 %649
        %vm651 = vcmp.lt.s32.totalorder %v425, 1
        %v652 = vsel %vm651, %v648, %v650
        %v653 = vsel %vm651, %v646, %v648
        %v654 = vsel %vm651, %v644, %v646
        %v655 = vsel %vm651, %v642, %v644
        %v656 = vsel %vm651, %v640, %v642
        %v657 = vsel %vm651, %v638, %v640
        %v658 = vsel %vm651, %v636, %v638
        %v659 = vsel %vm651, %v650, %v636
        %v660 = vsel %vm529, 1, 0
        %v661 = vsel %vm530, 1, 0
        %v662 = vsel %vm531, 1, 0
        %v663 = vsel %vm532, 1, 0
        %v664 = vsel %vm533, 1, 0
        %v665 = vsel %vm534, 1, 0
        %v666 = vsel %vm535, 1, 0
        %v667 = vsel %vm536, 1, 0
        %vm668 = vcmp.eq.s32.totalorder %v660, 1
        %vm669 = vcmp.eq.s32.totalorder %v661, 1
        %vm670 = vcmp.eq.s32.totalorder %v662, 1
        %vm671 = vcmp.eq.s32.totalorder %v663, 1
        %vm672 = vcmp.eq.s32.totalorder %v664, 1
        %vm673 = vcmp.eq.s32.totalorder %v665, 1
        %vm674 = vcmp.eq.s32.totalorder %v666, 1
        %vm675 = vcmp.eq.s32.totalorder %v667, 1
        %v676 = vsel %vm668, %v652, 0.0
        %v677 = vsel %vm669, %v659, 0.0
        %v678 = vsel %vm670, %v658, 0.0
        %v679 = vsel %vm671, %v657, 0.0
        %v680 = vsel %vm672, %v656, 0.0
        %v681 = vsel %vm673, %v655, 0.0
        %v682 = vsel %vm674, %v654, 0.0
        %v683 = vsel %vm675, %v653, 0.0
        %684 = vrot.lane.b32.xlu0 %v627, 127
        %v685 = vpop.permute.xlu0 %684
        %686 = vrot.lane.b32.xlu0 %v628, 127
        %v687 = vpop.permute.xlu0 %686
        %688 = vrot.lane.b32.xlu0 %v631, 127
        %v689 = vpop.permute.xlu0 %688
        %690 = vrot.lane.b32.xlu0 %v632, 127
        %v691 = vpop.permute.xlu0 %690
        %692 = vrot.lane.b32.xlu0 %v633, 127
        %v693 = vpop.permute.xlu0 %692
        %694 = vrot.lane.b32.xlu0 %v634, 127
        %v695 = vpop.permute.xlu0 %694
        %696 = vrot.lane.b32.xlu0 %v629, 127
        %v697 = vpop.permute.xlu0 %696
        %698 = vrot.lane.b32.xlu0 %v630, 127
        %v699 = vpop.permute.xlu0 %698
        %vm700 = vcmp.lt.s32.totalorder %v425, 127
        %v701 = vsel %vm700, %v697, %v699
        %v702 = vsel %vm700, %v695, %v697
        %v703 = vsel %vm700, %v693, %v695
        %v704 = vsel %vm700, %v691, %v693
        %v705 = vsel %vm700, %v689, %v691
        %v706 = vsel %vm700, %v687, %v689
        %v707 = vsel %vm700, %v685, %v687
        %v708 = vsel %vm700, %v699, %v685
        %v709 = vsel %vm537, 1, 0
        %v710 = vsel %vm538, 1, 0
        %v711 = vsel %vm539, 1, 0
        %v712 = vsel %vm540, 1, 0
        %v713 = vsel %vm541, 1, 0
        %v714 = vsel %vm542, 1, 0
        %v715 = vsel %vm543, 1, 0
        %v716 = vsel %vm544, 1, 0
        %vm717 = vcmp.eq.s32.totalorder %v709, 1
        %vm718 = vcmp.eq.s32.totalorder %v710, 1
        %vm719 = vcmp.eq.s32.totalorder %v711, 1
        %vm720 = vcmp.eq.s32.totalorder %v712, 1
        %vm721 = vcmp.eq.s32.totalorder %v713, 1
        %vm722 = vcmp.eq.s32.totalorder %v714, 1
        %vm723 = vcmp.eq.s32.totalorder %v715, 1
        %vm724 = vcmp.eq.s32.totalorder %v716, 1
        %v725 = vsel %vm717, %v708, 0.0
        %v726 = vsel %vm718, %v707, 0.0
        %v727 = vsel %vm719, %v706, 0.0
        %v728 = vsel %vm720, %v705, 0.0
        %v729 = vsel %vm721, %v704, 0.0
        %v730 = vsel %vm722, %v703, 0.0
        %v731 = vsel %vm723, %v702, 0.0
        %v732 = vsel %vm724, %v701, 0.0
        %v733 = vsel %vm668, %v659, 0.0
        %v734 = vsel %vm669, %v658, 0.0
        %v735 = vsel %vm670, %v657, 0.0
        %v736 = vsel %vm671, %v656, 0.0
        %v737 = vsel %vm672, %v655, 0.0
        %v738 = vsel %vm673, %v654, 0.0
        %v739 = vsel %vm674, %v653, 0.0
        %v740 = vsel %vm675, %v652, 0.0
        %v741 = vsel %vm717, %v707, 0.0
        %v742 = vsel %vm718, %v706, 0.0
        %v743 = vsel %vm719, %v705, 0.0
        %v744 = vsel %vm720, %v704, 0.0
        %v745 = vsel %vm721, %v703, 0.0
        %v746 = vsel %vm722, %v702, 0.0
        %v747 = vsel %vm723, %v701, 0.0
        %v748 = vsel %vm724, %v708, 0.0
        %v749 = vsel %vm668, %v658, 0.0
        %v750 = vsel %vm669, %v657, 0.0
        %v751 = vsel %vm670, %v656, 0.0
        %v752 = vsel %vm671, %v655, 0.0
        %v753 = vsel %vm672, %v654, 0.0
        %v754 = vsel %vm673, %v653, 0.0
        %v755 = vsel %vm674, %v652, 0.0
        %v756 = vsel %vm675, %v659, 0.0
        %v757 = vsel %vm717, %v706, 0.0
        %v758 = vsel %vm718, %v705, 0.0
        %v759 = vsel %vm719, %v704, 0.0
        %v760 = vsel %vm720, %v703, 0.0
        %v761 = vsel %vm721, %v702, 0.0
        %v762 = vsel %vm722, %v701, 0.0
        %v763 = vsel %vm723, %v708, 0.0
        %v764 = vsel %vm724, %v707, 0.0
        %v765 = vld [vmem:[%s3] sm:$0xff]
        %v766 = vld [vmem:[%s4] sm:$0xff]
        %768 = vset.pattern.permute.xlu0 0
        %769 = vperm.xlu0 %768, %v766
        %v770 = vpop.permute.xlu0 %769
        %vm772 = vcmask 588800
        %v774 = vsel %vm772, %v765, 0
        %776 = vmatprep.subr.mxu0 0.0
        %777 = vmatpush1.msra.mxu0 0.0
        %778 = vmatprep.subr.mxu0 0.0
        %779 = vmatpush1.msra.mxu0 0.0
        %780 = vmatprep.subr.mxu0 0.0
        %781 = vmatpush1.msra.mxu0 0.0
        %782 = vmatprep.subr.mxu0 0.0
        %783 = vmatpush1.msra.mxu0 0.0
        %784 = vmatprep.subr.mxu0 0.0
        %785 = vmatpush1.msra.mxu0 0.0
        %786 = vmatprep.subr.mxu0 0.0
        %787 = vmatpush1.msra.mxu0 0.0
        %788 = vmatprep.subr.mxu0 0.0
        %789 = vmatpush1.msra.mxu0 0.0
        %790 = vmatprep.subr.mxu0 %v758
        %791 = vmatpush1.msra.mxu0 %v757
        %792 = vmatprep.subr.mxu0 %v631
        %793 = vmatpush1.msra.mxu0 %v628
        %794 = vmatprep.subr.mxu0 %v750
        %795 = vmatpush1.msra.mxu0 %v749
        %796 = vmatprep.subr.mxu0 %v742
        %797 = vmatpush1.msra.mxu0 %v741
        %798 = vmatprep.subr.mxu0 %v628
        %799 = vmatpush1.msra.mxu0 %v627
        %800 = vmatprep.subr.mxu0 %v734
        %801 = vmatpush1.msra.mxu0 %v733
        %802 = vmatprep.subr.mxu0 %v726
        %803 = vmatpush1.msra.mxu0 %v725
        %804 = vmatprep.subr.mxu0 %v627
        %805 = vmatpush1.msra.mxu0 %v630
        %806 = vmatprep.subr.mxu0 %v677
        %807 = vmatpush1.msra.mxu0 %v676
        %808 = vmatprep.subr.mxu0 0.0
        %809 = vmatpush2.msra.mxu0 0.0
        %810 = vmatprep.subr.mxu0 0.0
        %811 = vmatpush2.msra.mxu0 0.0
        %812 = vmatprep.subr.mxu0 0.0
        %813 = vmatpush2.msra.mxu0 0.0
        %814 = vmatprep.subr.mxu0 0.0
        %815 = vmatpush2.msra.mxu0 0.0
        %816 = vmatprep.subr.mxu0 0.0
        %817 = vmatpush2.msra.mxu0 0.0
        %818 = vmatprep.subr.mxu0 0.0
        %819 = vmatpush2.msra.mxu0 0.0
        %820 = vmatprep.subr.mxu0 0.0
        %821 = vmatpush2.msra.mxu0 0.0
        %822 = vmatprep.subr.mxu0 0.0
        %823 = vmatpush2.msra.mxu0 0.0
        %824 = vmatprep.subr.mxu0 0.0
        %825 = vmatpush2.msra.mxu0 0.0
        %826 = vmatprep.subr.mxu0 0.0
        %827 = vmatpush2.msra.mxu0 0.0
        %828 = vmatprep.subr.mxu0 0.0
        %829 = vmatpush2.msra.mxu0 0.0
        %830 = vmatprep.subr.mxu0 0.0
        %831 = vmatpush2.msra.mxu0 0.0
        %832 = vmatprep.subr.mxu0 0.0
        %833 = vmatpush2.msra.mxu0 0.0
        %834 = vmatprep.subr.mxu0 0.0
        %835 = vmatpush2.msra.mxu0 0.0
        %836 = vmatprep.subr.mxu0 0.0
        %837 = vmatpush2.msra.mxu0 0.0
        %838 = vmatprep.subr.mxu0 0.0
        %839 = vmatpush2.msra.mxu0 0.0
        %840 = vmatprep.mubr.f32.mxu0 0.0
        %841 = vmatmul.mubr.f32.gmra.mxu0 %v774
        %v842 = vpop.f32.mrf.mxu0
        %v843 = vadd.f32 %v770, %v842
        %v844 = vpop.f32.mrf.mxu0
        %v845 = vadd.f32 %v770, %v844
        %846 = vdwg.mxu0
        %847 = vmatprep.subr.mxu0 0.0
        %848 = vmatpush1.msra.mxu0 0.0
        %849 = vmatprep.subr.mxu0 0.0
        %850 = vmatpush1.msra.mxu0 0.0
        %851 = vmatprep.subr.mxu0 0.0
        %852 = vmatpush1.msra.mxu0 0.0
        %853 = vmatprep.subr.mxu0 0.0
        %854 = vmatpush1.msra.mxu0 0.0
        %855 = vmatprep.subr.mxu0 0.0
        %856 = vmatpush1.msra.mxu0 0.0
        %857 = vmatprep.subr.mxu0 0.0
        %858 = vmatpush1.msra.mxu0 0.0
        %859 = vmatprep.subr.mxu0 0.0
        %860 = vmatpush1.msra.mxu0 0.0
        %861 = vmatprep.subr.mxu0 %v760
        %862 = vmatpush1.msra.mxu0 %v759
        %863 = vmatprep.subr.mxu0 %v633
        %864 = vmatpush1.msra.mxu0 %v632
        %865 = vmatprep.subr.mxu0 %v752
        %866 = vmatpush1.msra.mxu0 %v751
        %867 = vmatprep.subr.mxu0 %v744
        %868 = vmatpush1.msra.mxu0 %v743
        %869 = vmatprep.subr.mxu0 %v632
        %870 = vmatpush1.msra.mxu0 %v631
        %871 = vmatprep.subr.mxu0 %v736
        %872 = vmatpush1.msra.mxu0 %v735
        %873 = vmatprep.subr.mxu0 %v728
        %874 = vmatpush1.msra.mxu0 %v727
        %875 = vmatprep.subr.mxu0 %v631
        %876 = vmatpush1.msra.mxu0 %v628
        %877 = vmatprep.subr.mxu0 %v679
        %878 = vmatpush1.msra.mxu0 %v678
        %879 = vmatprep.subr.mxu0 0.0
        %880 = vmatpush2.msra.mxu0 0.0
        %881 = vmatprep.subr.mxu0 0.0
        %882 = vmatpush2.msra.mxu0 0.0
        %883 = vmatprep.subr.mxu0 0.0
        %884 = vmatpush2.msra.mxu0 0.0
        %885 = vmatprep.subr.mxu0 0.0
        %886 = vmatpush2.msra.mxu0 0.0
        %887 = vmatprep.subr.mxu0 0.0
        %888 = vmatpush2.msra.mxu0 0.0
        %889 = vmatprep.subr.mxu0 0.0
        %890 = vmatpush2.msra.mxu0 0.0
        %891 = vmatprep.subr.mxu0 0.0
        %892 = vmatpush2.msra.mxu0 0.0
        %893 = vmatprep.subr.mxu0 0.0
        %894 = vmatpush2.msra.mxu0 0.0
        %895 = vmatprep.subr.mxu0 0.0
        %896 = vmatpush2.msra.mxu0 0.0
        %897 = vmatprep.subr.mxu0 0.0
        %898 = vmatpush2.msra.mxu0 0.0
        %899 = vmatprep.subr.mxu0 0.0
        %900 = vmatpush2.msra.mxu0 0.0
        %901 = vmatprep.subr.mxu0 0.0
        %902 = vmatpush2.msra.mxu0 0.0
        %903 = vmatprep.subr.mxu0 0.0
        %904 = vmatpush2.msra.mxu0 0.0
        %905 = vmatprep.subr.mxu0 0.0
        %906 = vmatpush2.msra.mxu0 0.0
        %907 = vmatprep.subr.mxu0 0.0
        %908 = vmatpush2.msra.mxu0 0.0
        %909 = vmatprep.subr.mxu0 0.0
        %910 = vmatpush2.msra.mxu0 0.0
        %911 = vmatprep.mubr.f32.mxu0 0.0
        %912 = vmatmul.mubr.f32.gmra.mxu0 %v774
        %v913 = vpop.f32.mrf.mxu0
        %v914 = vadd.f32 %v770, %v913
        %v915 = vpop.f32.mrf.mxu0
        %v916 = vadd.f32 %v770, %v915
        %917 = vdwg.mxu0
        %918 = vmatprep.subr.mxu0 0.0
        %919 = vmatpush1.msra.mxu0 0.0
        %920 = vmatprep.subr.mxu0 0.0
        %921 = vmatpush1.msra.mxu0 0.0
        %922 = vmatprep.subr.mxu0 0.0
        %923 = vmatpush1.msra.mxu0 0.0
        %924 = vmatprep.subr.mxu0 0.0
        %925 = vmatpush1.msra.mxu0 0.0
        %926 = vmatprep.subr.mxu0 0.0
        %927 = vmatpush1.msra.mxu0 0.0
        %928 = vmatprep.subr.mxu0 0.0
        %929 = vmatpush1.msra.mxu0 0.0
        %930 = vmatprep.subr.mxu0 0.0
        %931 = vmatpush1.msra.mxu0 0.0
        %932 = vmatprep.subr.mxu0 %v762
        %933 = vmatpush1.msra.mxu0 %v761
        %934 = vmatprep.subr.mxu0 %v629
        %935 = vmatpush1.msra.mxu0 %v634
        %936 = vmatprep.subr.mxu0 %v754
        %937 = vmatpush1.msra.mxu0 %v753
        %938 = vmatprep.subr.mxu0 %v746
        %939 = vmatpush1.msra.mxu0 %v745
        %940 = vmatprep.subr.mxu0 %v634
        %941 = vmatpush1.msra.mxu0 %v633
        %942 = vmatprep.subr.mxu0 %v738
        %943 = vmatpush1.msra.mxu0 %v737
        %944 = vmatprep.subr.mxu0 %v730
        %945 = vmatpush1.msra.mxu0 %v729
        %946 = vmatprep.subr.mxu0 %v633
        %947 = vmatpush1.msra.mxu0 %v632
        %948 = vmatprep.subr.mxu0 %v681
        %949 = vmatpush1.msra.mxu0 %v680
        %950 = vmatprep.subr.mxu0 0.0
        %951 = vmatpush2.msra.mxu0 0.0
        %952 = vmatprep.subr.mxu0 0.0
        %953 = vmatpush2.msra.mxu0 0.0
        %954 = vmatprep.subr.mxu0 0.0
        %955 = vmatpush2.msra.mxu0 0.0
        %956 = vmatprep.subr.mxu0 0.0
        %957 = vmatpush2.msra.mxu0 0.0
        %958 = vmatprep.subr.mxu0 0.0
        %959 = vmatpush2.msra.mxu0 0.0
        %960 = vmatprep.subr.mxu0 0.0
        %961 = vmatpush2.msra.mxu0 0.0
        %962 = vmatprep.subr.mxu0 0.0
        %963 = vmatpush2.msra.mxu0 0.0
        %964 = vmatprep.subr.mxu0 0.0
        %965 = vmatpush2.msra.mxu0 0.0
        %966 = vmatprep.subr.mxu0 0.0
        %967 = vmatpush2.msra.mxu0 0.0
        %968 = vmatprep.subr.mxu0 0.0
        %969 = vmatpush2.msra.mxu0 0.0
        %970 = vmatprep.subr.mxu0 0.0
        %971 = vmatpush2.msra.mxu0 0.0
        %972 = vmatprep.subr.mxu0 0.0
        %973 = vmatpush2.msra.mxu0 0.0
        %974 = vmatprep.subr.mxu0 0.0
        %975 = vmatpush2.msra.mxu0 0.0
        %976 = vmatprep.subr.mxu0 0.0
        %977 = vmatpush2.msra.mxu0 0.0
        %978 = vmatprep.subr.mxu0 0.0
        %979 = vmatpush2.msra.mxu0 0.0
        %980 = vmatprep.subr.mxu0 0.0
        %981 = vmatpush2.msra.mxu0 0.0
        %982 = vmatprep.mubr.f32.mxu0 0.0
        %983 = vmatmul.mubr.f32.gmra.mxu0 %v774
        %v984 = vpop.f32.mrf.mxu0
        %v985 = vadd.f32 %v770, %v984
        %v986 = vpop.f32.mrf.mxu0
        %v987 = vadd.f32 %v770, %v986
        %988 = vdwg.mxu0
        %989 = vmatprep.subr.mxu0 0.0
        %990 = vmatpush1.msra.mxu0 0.0
        %991 = vmatprep.subr.mxu0 0.0
        %992 = vmatpush1.msra.mxu0 0.0
        %993 = vmatprep.subr.mxu0 0.0
        %994 = vmatpush1.msra.mxu0 0.0
        %995 = vmatprep.subr.mxu0 0.0
        %996 = vmatpush1.msra.mxu0 0.0
        %997 = vmatprep.subr.mxu0 0.0
        %998 = vmatpush1.msra.mxu0 0.0
        %999 = vmatprep.subr.mxu0 0.0
        %1000 = vmatpush1.msra.mxu0 0.0
        %1001 = vmatprep.subr.mxu0 0.0
        %1002 = vmatpush1.msra.mxu0 0.0
        %1003 = vmatprep.subr.mxu0 %v764
        %1004 = vmatpush1.msra.mxu0 %v763
        %1005 = vmatprep.subr.mxu0 %v627
        %1006 = vmatpush1.msra.mxu0 %v630
        %1007 = vmatprep.subr.mxu0 %v756
        %1008 = vmatpush1.msra.mxu0 %v755
        %1009 = vmatprep.subr.mxu0 %v748
        %1010 = vmatpush1.msra.mxu0 %v747
        %1011 = vmatprep.subr.mxu0 %v630
        %1012 = vmatpush1.msra.mxu0 %v629
        %1013 = vmatprep.subr.mxu0 %v740
        %1014 = vmatpush1.msra.mxu0 %v739
        %1015 = vmatprep.subr.mxu0 %v732
        %1016 = vmatpush1.msra.mxu0 %v731
        %1017 = vmatprep.subr.mxu0 %v629
        %1018 = vmatpush1.msra.mxu0 %v634
        %1019 = vmatprep.subr.mxu0 %v683
        %1020 = vmatpush1.msra.mxu0 %v682
        %1021 = vmatprep.subr.mxu0 0.0
        %1022 = vmatpush2.msra.mxu0 0.0
        %1023 = vmatprep.subr.mxu0 0.0
        %1024 = vmatpush2.msra.mxu0 0.0
        %1025 = vmatprep.subr.mxu0 0.0
        %1026 = vmatpush2.msra.mxu0 0.0
        %1027 = vmatprep.subr.mxu0 0.0
        %1028 = vmatpush2.msra.mxu0 0.0
        %1029 = vmatprep.subr.mxu0 0.0
        %1030 = vmatpush2.msra.mxu0 0.0
        %1031 = vmatprep.subr.mxu0 0.0
        %1032 = vmatpush2.msra.mxu0 0.0
        %1033 = vmatprep.subr.mxu0 0.0
        %1034 = vmatpush2.msra.mxu0 0.0
        %1035 = vmatprep.subr.mxu0 0.0
        %1036 = vmatpush2.msra.mxu0 0.0
        %1037 = vmatprep.subr.mxu0 0.0
        %1038 = vmatpush2.msra.mxu0 0.0
        %1039 = vmatprep.subr.mxu0 0.0
        %1040 = vmatpush2.msra.mxu0 0.0
        %1041 = vmatprep.subr.mxu0 0.0
        %1042 = vmatpush2.msra.mxu0 0.0
        %1043 = vmatprep.subr.mxu0 0.0
        %1044 = vmatpush2.msra.mxu0 0.0
        %1045 = vmatprep.subr.mxu0 0.0
        %1046 = vmatpush2.msra.mxu0 0.0
        %1047 = vmatprep.subr.mxu0 0.0
        %1048 = vmatpush2.msra.mxu0 0.0
        %1049 = vmatprep.subr.mxu0 0.0
        %1050 = vmatpush2.msra.mxu0 0.0
        %1051 = vmatprep.subr.mxu0 0.0
        %1052 = vmatpush2.msra.mxu0 0.0
        %1053 = vmatprep.mubr.f32.mxu0 0.0
        %1054 = vmatmul.mubr.f32.gmra.mxu0 %v774
        %v1055 = vpop.f32.mrf.mxu0
        %v1056 = vadd.f32 %v770, %v1055
        %v1057 = vpop.f32.mrf.mxu0
        %v1058 = vadd.f32 %v770, %v1057
        %1059 = vdwg.mxu0
        %v1060 = vmax.f32 %v843, 0.0
        %v1061 = vmax.f32 %v845, 0.0
        %v1062 = vmax.f32 %v914, 0.0
        %v1063 = vmax.f32 %v916, 0.0
        %v1064 = vmax.f32 %v985, 0.0
        %v1065 = vmax.f32 %v987, 0.0
        %v1066 = vmax.f32 %v1056, 0.0
        %v1067 = vmax.f32 %v1058, 0.0
        %v1068 = vsel %vm615, 1, 0
        %v1069 = vsel %vm616, 1, 0
        %v1070 = vsel %vm617, 1, 0
        %v1071 = vsel %vm618, 1, 0
        %v1072 = vsel %vm619, 1, 0
        %v1073 = vsel %vm620, 1, 0
        %v1074 = vsel %vm621, 1, 0
        %v1075 = vsel %vm622, 1, 0
        %vm1076 = vcmp.eq.s32.totalorder %v1068, 1
        %vm1077 = vcmp.eq.s32.totalorder %v1069, 1
        %vm1078 = vcmp.eq.s32.totalorder %v1070, 1
        %vm1079 = vcmp.eq.s32.totalorder %v1071, 1
        %vm1080 = vcmp.eq.s32.totalorder %v1072, 1
        %vm1081 = vcmp.eq.s32.totalorder %v1073, 1
        %vm1082 = vcmp.eq.s32.totalorder %v1074, 1
        %vm1083 = vcmp.eq.s32.totalorder %v1075, 1
        %v1084 = vsel %vm1076, 0.0, %v1060
        %v1085 = vsel %vm1077, 0.0, %v1061
        %v1086 = vsel %vm1078, 0.0, %v1062
        %v1087 = vsel %vm1079, 0.0, %v1063
        %v1088 = vsel %vm1080, 0.0, %v1064
        %v1089 = vsel %vm1081, 0.0, %v1065
        %v1090 = vsel %vm1082, 0.0, %v1066
        %v1091 = vsel %vm1083, 0.0, %v1067
        %1092 = vrot.lane.b32.xlu0 %v1084, 1
        %v1093 = vpop.permute.xlu0 %1092
        %1094 = vrot.lane.b32.xlu0 %v1085, 1
        %v1095 = vpop.permute.xlu0 %1094
        %1096 = vrot.lane.b32.xlu0 %v1086, 1
        %v1097 = vpop.permute.xlu0 %1096
        %1098 = vrot.lane.b32.xlu0 %v1087, 1
        %v1099 = vpop.permute.xlu0 %1098
        %1100 = vrot.lane.b32.xlu0 %v1088, 1
        %v1101 = vpop.permute.xlu0 %1100
        %v1102 = vsel %vm651, %v1099, %v1101
        %v1103 = vsel %vm651, %v1097, %v1099
        %v1104 = vsel %vm651, %v1095, %v1097
        %v1105 = vsel %vm651, %v1093, %v1095
        %v1106 = vsel %vm670, %v1105, 0.0
        %v1107 = vsel %vm671, %v1104, 0.0
        %v1108 = vsel %vm672, %v1103, 0.0
        %v1109 = vsel %vm673, %v1102, 0.0
        %1110 = vrot.lane.b32.xlu0 %v1085, 127
        %v1111 = vpop.permute.xlu0 %1110
        %1112 = vrot.lane.b32.xlu0 %v1086, 127
        %v1113 = vpop.permute.xlu0 %1112
        %1114 = vrot.lane.b32.xlu0 %v1087, 127
        %v1115 = vpop.permute.xlu0 %1114
        %1116 = vrot.lane.b32.xlu0 %v1088, 127
        %v1117 = vpop.permute.xlu0 %1116
        %1118 = vrot.lane.b32.xlu0 %v1089, 127
        %v1119 = vpop.permute.xlu0 %1118
        %v1120 = vsel %vm700, %v1117, %v1119
        %v1121 = vsel %vm700, %v1115, %v1117
        %v1122 = vsel %vm700, %v1113, %v1115
        %v1123 = vsel %vm700, %v1111, %v1113
        %v1124 = vsel %vm719, %v1123, 0.0
        %v1125 = vsel %vm720, %v1122, 0.0
        %v1126 = vsel %vm721, %v1121, 0.0
        %v1127 = vsel %vm722, %v1120, 0.0
        %1128 = vrot.lane.b32.xlu0 %v1089, 1
        %v1129 = vpop.permute.xlu0 %1128
        %v1130 = vsel %vm651, %v1101, %v1129
        %v1131 = vsel %vm670, %v1104, 0.0
        %v1132 = vsel %vm671, %v1103, 0.0
        %v1133 = vsel %vm672, %v1102, 0.0
        %v1134 = vsel %vm673, %v1130, 0.0
        %1135 = vrot.lane.b32.xlu0 %v1090, 127
        %v1136 = vpop.permute.xlu0 %1135
        %v1137 = vsel %vm700, %v1119, %v1136
        %v1138 = vsel %vm719, %v1122, 0.0
        %v1139 = vsel %vm720, %v1121, 0.0
        %v1140 = vsel %vm721, %v1120, 0.0
        %v1141 = vsel %vm722, %v1137, 0.0
        %1142 = vrot.lane.b32.xlu0 %v1090, 1
        %v1143 = vpop.permute.xlu0 %1142
        %v1144 = vsel %vm651, %v1129, %v1143
        %v1145 = vsel %vm670, %v1103, 0.0
        %v1146 = vsel %vm671, %v1102, 0.0
        %v1147 = vsel %vm672, %v1130, 0.0
        %v1148 = vsel %vm673, %v1144, 0.0
        %1149 = vrot.lane.b32.xlu0 %v1091, 127
        %v1150 = vpop.permute.xlu0 %1149
        %v1151 = vsel %vm700, %v1136, %v1150
        %v1152 = vsel %vm719, %v1121, 0.0
        %v1153 = vsel %vm720, %v1120, 0.0
        %v1154 = vsel %vm721, %v1137, 0.0
        %v1155 = vsel %vm722, %v1151, 0.0
        %v1156 = vld [vmem:[%s5] sm:$0xff]
        %v1157 = vld [vmem:[%s6] sm:$0xff]
        %1159 = vset.pattern.permute.xlu0 0
        %1160 = vperm.xlu0 %1159, %v1157
        %v1161 = vpop.permute.xlu0 %1160
        %v1164 = vsel %vm772, %v1156, 0
        %1166 = vmatprep.subr.mxu0 0.0
        %1167 = vmatpush1.msra.mxu0 0.0
        %1168 = vmatprep.subr.mxu0 0.0
        %1169 = vmatpush1.msra.mxu0 0.0
        %1170 = vmatprep.subr.mxu0 0.0
        %1171 = vmatpush1.msra.mxu0 0.0
        %1172 = vmatprep.subr.mxu0 0.0
        %1173 = vmatpush1.msra.mxu0 0.0
        %1174 = vmatprep.subr.mxu0 0.0
        %1175 = vmatpush1.msra.mxu0 0.0
        %1176 = vmatprep.subr.mxu0 0.0
        %1177 = vmatpush1.msra.mxu0 0.0
        %1178 = vmatprep.subr.mxu0 0.0
        %1179 = vmatpush1.msra.mxu0 0.0
        %1180 = vmatprep.subr.mxu0 %v1153
        %1181 = vmatpush1.msra.mxu0 %v1152
        %1182 = vmatprep.subr.mxu0 %v1088
        %1183 = vmatpush1.msra.mxu0 %v1087
        %1184 = vmatprep.subr.mxu0 %v1146
        %1185 = vmatpush1.msra.mxu0 %v1145
        %1186 = vmatprep.subr.mxu0 %v1139
        %1187 = vmatpush1.msra.mxu0 %v1138
        %1188 = vmatprep.subr.mxu0 %v1087
        %1189 = vmatpush1.msra.mxu0 %v1086
        %1190 = vmatprep.subr.mxu0 %v1132
        %1191 = vmatpush1.msra.mxu0 %v1131
        %1192 = vmatprep.subr.mxu0 %v1125
        %1193 = vmatpush1.msra.mxu0 %v1124
        %1194 = vmatprep.subr.mxu0 %v1086
        %1195 = vmatpush1.msra.mxu0 %v1085
        %1196 = vmatprep.subr.mxu0 %v1107
        %1197 = vmatpush1.msra.mxu0 %v1106
        %1198 = vmatprep.subr.mxu0 0.0
        %1199 = vmatpush2.msra.mxu0 0.0
        %1200 = vmatprep.subr.mxu0 0.0
        %1201 = vmatpush2.msra.mxu0 0.0
        %1202 = vmatprep.subr.mxu0 0.0
        %1203 = vmatpush2.msra.mxu0 0.0
        %1204 = vmatprep.subr.mxu0 0.0
        %1205 = vmatpush2.msra.mxu0 0.0
        %1206 = vmatprep.subr.mxu0 0.0
        %1207 = vmatpush2.msra.mxu0 0.0
        %1208 = vmatprep.subr.mxu0 0.0
        %1209 = vmatpush2.msra.mxu0 0.0
        %1210 = vmatprep.subr.mxu0 0.0
        %1211 = vmatpush2.msra.mxu0 0.0
        %1212 = vmatprep.subr.mxu0 0.0
        %1213 = vmatpush2.msra.mxu0 0.0
        %1214 = vmatprep.subr.mxu0 0.0
        %1215 = vmatpush2.msra.mxu0 0.0
        %1216 = vmatprep.subr.mxu0 0.0
        %1217 = vmatpush2.msra.mxu0 0.0
        %1218 = vmatprep.subr.mxu0 0.0
        %1219 = vmatpush2.msra.mxu0 0.0
        %1220 = vmatprep.subr.mxu0 0.0
        %1221 = vmatpush2.msra.mxu0 0.0
        %1222 = vmatprep.subr.mxu0 0.0
        %1223 = vmatpush2.msra.mxu0 0.0
        %1224 = vmatprep.subr.mxu0 0.0
        %1225 = vmatpush2.msra.mxu0 0.0
        %1226 = vmatprep.subr.mxu0 0.0
        %1227 = vmatpush2.msra.mxu0 0.0
        %1228 = vmatprep.subr.mxu0 0.0
        %1229 = vmatpush2.msra.mxu0 0.0
        %1230 = vmatprep.mubr.f32.mxu0 0.0
        %1231 = vmatmul.mubr.f32.gmra.mxu0 %v1164
        %v1232 = vpop.f32.mrf.mxu0
        %v1233 = vadd.f32 %v1161, %v1232
        %v1234 = vpop.f32.mrf.mxu0
        %v1235 = vadd.f32 %v1161, %v1234
        %1236 = vdwg.mxu0
        %1237 = vmatprep.subr.mxu0 0.0
        %1238 = vmatpush1.msra.mxu0 0.0
        %1239 = vmatprep.subr.mxu0 0.0
        %1240 = vmatpush1.msra.mxu0 0.0
        %1241 = vmatprep.subr.mxu0 0.0
        %1242 = vmatpush1.msra.mxu0 0.0
        %1243 = vmatprep.subr.mxu0 0.0
        %1244 = vmatpush1.msra.mxu0 0.0
        %1245 = vmatprep.subr.mxu0 0.0
        %1246 = vmatpush1.msra.mxu0 0.0
        %1247 = vmatprep.subr.mxu0 0.0
        %1248 = vmatpush1.msra.mxu0 0.0
        %1249 = vmatprep.subr.mxu0 0.0
        %1250 = vmatpush1.msra.mxu0 0.0
        %1251 = vmatprep.subr.mxu0 %v1155
        %1252 = vmatpush1.msra.mxu0 %v1154
        %1253 = vmatprep.subr.mxu0 %v1090
        %1254 = vmatpush1.msra.mxu0 %v1089
        %1255 = vmatprep.subr.mxu0 %v1148
        %1256 = vmatpush1.msra.mxu0 %v1147
        %1257 = vmatprep.subr.mxu0 %v1141
        %1258 = vmatpush1.msra.mxu0 %v1140
        %1259 = vmatprep.subr.mxu0 %v1089
        %1260 = vmatpush1.msra.mxu0 %v1088
        %1261 = vmatprep.subr.mxu0 %v1134
        %1262 = vmatpush1.msra.mxu0 %v1133
        %1263 = vmatprep.subr.mxu0 %v1127
        %1264 = vmatpush1.msra.mxu0 %v1126
        %1265 = vmatprep.subr.mxu0 %v1088
        %1266 = vmatpush1.msra.mxu0 %v1087
        %1267 = vmatprep.subr.mxu0 %v1109
        %1268 = vmatpush1.msra.mxu0 %v1108
        %1269 = vmatprep.subr.mxu0 0.0
        %1270 = vmatpush2.msra.mxu0 0.0
        %1271 = vmatprep.subr.mxu0 0.0
        %1272 = vmatpush2.msra.mxu0 0.0
        %1273 = vmatprep.subr.mxu0 0.0
        %1274 = vmatpush2.msra.mxu0 0.0
        %1275 = vmatprep.subr.mxu0 0.0
        %1276 = vmatpush2.msra.mxu0 0.0
        %1277 = vmatprep.subr.mxu0 0.0
        %1278 = vmatpush2.msra.mxu0 0.0
        %1279 = vmatprep.subr.mxu0 0.0
        %1280 = vmatpush2.msra.mxu0 0.0
        %1281 = vmatprep.subr.mxu0 0.0
        %1282 = vmatpush2.msra.mxu0 0.0
        %1283 = vmatprep.subr.mxu0 0.0
        %1284 = vmatpush2.msra.mxu0 0.0
        %1285 = vmatprep.subr.mxu0 0.0
        %1286 = vmatpush2.msra.mxu0 0.0
        %1287 = vmatprep.subr.mxu0 0.0
        %1288 = vmatpush2.msra.mxu0 0.0
        %1289 = vmatprep.subr.mxu0 0.0
        %1290 = vmatpush2.msra.mxu0 0.0
        %1291 = vmatprep.subr.mxu0 0.0
        %1292 = vmatpush2.msra.mxu0 0.0
        %1293 = vmatprep.subr.mxu0 0.0
        %1294 = vmatpush2.msra.mxu0 0.0
        %1295 = vmatprep.subr.mxu0 0.0
        %1296 = vmatpush2.msra.mxu0 0.0
        %1297 = vmatprep.subr.mxu0 0.0
        %1298 = vmatpush2.msra.mxu0 0.0
        %1299 = vmatprep.subr.mxu0 0.0
        %1300 = vmatpush2.msra.mxu0 0.0
        %1301 = vmatprep.mubr.f32.mxu0 0.0
        %1302 = vmatmul.mubr.f32.gmra.mxu0 %v1164
        %v1303 = vpop.f32.mrf.mxu0
        %v1304 = vadd.f32 %v1161, %v1303
        %v1305 = vpop.f32.mrf.mxu0
        %v1306 = vadd.f32 %v1161, %v1305
        %1307 = vdwg.mxu0
        %v1308 = vmax.f32 %v1233, 0.0
        %v1309 = vmax.f32 %v1235, 0.0
        %v1310 = vmax.f32 %v1304, 0.0
        %v1311 = vmax.f32 %v1306, 0.0
        %1312 = vst [vmem:[%s411] sm:$0xff] %v1308
        %1313 = vst [vmem:[%s411 + $0x8] sm:$0xff] %v1309
        %1314 = vst [vmem:[%s411 + $0x10] sm:$0xff] %v1310
        %1315 = vst [vmem:[%s411 + $0x18] sm:$0xff] %v1311
        %s1316 = sand.u32 %s229, 1
        %s1317 = scalar_lea.sflag [#allocation4], %s1316
        %s1318 = sand.u32 %s229, 1
        %s1319 = smul.addr %s1318, 32
        %s1320 = scalar_lea.vmem [#allocation8], %s1319
        // Predicated region
        $region61: #{tpu_custom_call.1} parent=47 // pred_check
          %p1321 = pneg %p239
        $region62: #{tpu_custom_call.1} parent=47 // pred_check_branch
          %1323 = sbr.rel (%p1321) target = $region64
        $region63: #{tpu_custom_call.1} parent=47 // pred_region
          %s1324 = smul.u32 4, %s32
          %s1326 = ssub.s32 512, 512
          %1327 = vsyncadd %s1317, %s1326
          %s1328 = smul.addr %s31, 8
          %s1329 = sadd.s32 %s1324, %s1328
          %s1330 = smul.addr %s1329, 128
          %s1331 = scalar_lea.hbm %s7, %s1330
          %s1333 = sshll.u32 %s1320, 4
          %s1334 = int_to_ptr.vmem [resolvable:$true] %s1333
          %1336 = dma.vmem_to_hbm [thread:$0]  %s1334, 512, %s1331, %s1317
        $region64: #{tpu_custom_call.1} parent=47 // pred_fallthru
          _
      $region48: #{tpu_custom_call.1} parent=5 // pred_fallthru
        _
      %p1337 = scmp.le.s32.totalorder 2, %s22
      // Predicated region
      $region65: #{tpu_custom_call.1} parent=5 // pred_check
        %p1338 = pneg %p1337
      $region66: #{tpu_custom_call.1} parent=5 // pred_check_branch
        %1340 = sbr.rel (%p1338) target = $region68
      $region67: #{tpu_custom_call.1} parent=5 // pred_region
        %s1341 = ssub.s32 %s22, 2
        // Predicated region
        $region69: #{tpu_custom_call.1} parent=67 // pred_check
          %p1342 = pneg %p245
        $region70: #{tpu_custom_call.1} parent=67 // pred_check_branch
          %1344 = sbr.rel (%p1342) target = $region72
        $region71: #{tpu_custom_call.1} parent=67 // pred_region
          %s1345 = sand.u32 %s230, 1
          %s1346 = scalar_lea.sflag [#allocation4], %s1345
          %s1347 = sand.u32 %s230, 1
          %s1348 = smul.addr %s1347, 32
          %s1349 = scalar_lea.vmem [#allocation8], %s1348
          %1350 = dma.done %s1346, 512
        $region72: #{tpu_custom_call.1} parent=67 // pred_fallthru
          _
      $region68: #{tpu_custom_call.1} parent=5 // pred_fallthru
        _
    $region6: #{tpu_custom_call.1} parent=1 // loop_footer
      %s26 = sadd.s32 1, %s22
    $region7: #{tpu_custom_call.1} parent=1 // loop_footer_branch
      %21 = sbr.rel target = $region3
    $region8: #{tpu_custom_call.1} parent=1 // loop_exit
      _
    %1351 = vsyncpa [#allocation3], 1
    %s1352 = scalar_lea.sflag [#allocation3], 1
    %1353 = vsyncpa %s1352, 1
    %1354 = vsyncpa [#allocation6], 1
    %s1355 = scalar_lea.sflag [#allocation6], 1
    %1356 = vsyncpa %s1355, 1
    %1357 = vsyncpa [#allocation4], 1
    %s1358 = scalar_lea.sflag [#allocation4], 1
    %1359 = vsyncpa %s1358, 1

// kernel: tpu_custom_call.1
$region0: #{tpu_custom_call.1}
  #allocation0 [shape = 'u32[]', space=smem, size = 0x4, offset = 0x4, fixed_abs, tag = 'smem constant byte address 0x4 - core index']
  #allocation1 [shape = 'u32[144,128]{1,0:T(1,128)}', space=vmem, size = 0x12000, scoped, tag = 'internal scratch']
  %s0 = inlined_call_operand.hbm [shape: f32[1,8,1024], index: 0, kind: input, shape index: {}]
  %s1 = inlined_call_operand.hbm [shape: f32[1,8,1024], index: 1, kind: input, shape index: {}]
  %s2 = inlined_call_operand.hbm [shape: f32[1,8,1024], index: 2, kind: input, shape index: {}]
  %s3 = inlined_call_operand.vmem [shape: f32[8,72], index: 3, kind: input, shape index: {}]
  %s4 = inlined_call_operand.vmem [shape: f32[8,1], index: 4, kind: input, shape index: {}]
  %s5 = inlined_call_operand.vmem [shape: f32[8,72], index: 5, kind: input, shape index: {}]
  %s6 = inlined_call_operand.vmem [shape: f32[8,1], index: 6, kind: input, shape index: {}]
  %s7 = inlined_call_operand.hbm [shape: f32[1,8,1024], index: 7, kind: output, shape index: {}]
  %s8 = sld [smem:[#allocation0]]
  $region73: #{tpu_custom_call.1} parent=0
    _
  %s10 = ssub.s32 1, %s8
  %s11 = scalar_select 0, %s10, %s8
  $region1: #{tpu_custom_call.1} parent=0
    #allocation2 [shape = 'u8[32768]{0}', space=vmem, size = 0x8000, scoped, tag = 'input window, operand 0']
    #allocation3 [shape = 's32[2]{0}', space=sflag, size = 0x8, scoped, tag = 'scoped memory for tpu_custom_call.1']
    #allocation4 [shape = 's32[2]{0}', space=sflag, size = 0x8, scoped, tag = 'scoped memory for tpu_custom_call.1']
    #allocation5 [shape = 'u8[32768]{0}', space=vmem, size = 0x8000, scoped, tag = 'input window, operand 1']
    #allocation6 [shape = 's32[2]{0}', space=sflag, size = 0x8, scoped, tag = 'scoped memory for tpu_custom_call.1']
    #allocation7 [shape = 'u8[32768]{0}', space=vmem, size = 0x8000, scoped, tag = 'input window, operand 2']
    #allocation8 [shape = 'u8[32768]{0}', space=vmem, size = 0x8000, scoped, tag = 'output window, operand 0']
    %12 = vsyncpa [#allocation3], 0
    %s13 = scalar_lea.sflag [#allocation3], 1
    %14 = vsyncpa %s13, 0
    %15 = vsyncpa [#allocation6], 0
    %s16 = scalar_lea.sflag [#allocation6], 1
    %17 = vsyncpa %s16, 0
    %18 = vsyncpa [#allocation4], 0
    %s19 = scalar_lea.sflag [#allocation4], 1
    %20 = vsyncpa %s19, 0
    loop: start=0, step=1, limit=4
    $region2: #{tpu_custom_call.1} parent=1 // loop_pre_header
      _
    $region3: #{tpu_custom_call.1} parent=1 // loop_header
      %s22 = sphi 0, %s26
      %p23 = scmp.ge.s32.totalorder %s22, 4
      %s29 = sphi 0, %s41
      %s30 = sphi 0, %s37
      %s31 = sphi 0, %s29
      %s32 = sphi 0, %s30
      %s33 = sphi 0, %s31
      %s34 = sphi 0, %s32
      %s52 = sphi 0, %s54
      %s55 = sphi 0, %s52
      %s56 = sphi 0, %s55
      %s72 = sphi 0, %s56
      %s80 = sphi 0, %s82
      %s83 = sphi 0, %s80
      %s84 = sphi 0, %s83
      %s100 = sphi 0, %s84
      %s114 = sphi 0, %s116
      %s117 = sphi 0, %s114
      %s118 = sphi 0, %s117
      %s134 = sphi 0, %s118
      %s138 = sphi 0, %s138
      %s140 = sphi 0, %s138
      %s141 = sphi 0, %s140
      %s155 = sphi 0, %s141
      %s159 = sphi 0, %s159
      %s161 = sphi 0, %s159
      %s162 = sphi 0, %s161
      %s176 = sphi 0, %s162
      %s180 = sphi 0, %s180
      %s182 = sphi 0, %s180
      %s183 = sphi 0, %s182
      %s197 = sphi 0, %s183
      %s201 = sphi 0, %s201
      %s203 = sphi 0, %s201
      %s204 = sphi 0, %s203
      %s218 = sphi 0, %s204
      %s226 = sphi 0, %s228
      %s229 = sphi 0, %s226
      %s230 = sphi 0, %s229
      %s246 = sphi 0, %s230
    $region4: #{tpu_custom_call.1} parent=1 // loop_header_branch
      %25 = sbr.rel (%p23) target = $region8
    $region5: #{tpu_custom_call.1} parent=1 // loop_body
      %s27 = ssub.s32 %s22, 1
      %s28 = ssub.s32 %s22, 2
      %s35 = sadd.s32 1, %s30
      %p36 = scmp.ge.s32.totalorder %s35, 2
      %s37 = scalar_select %p36, 0, %s35
      %s38 = sadd.s32 1, %s29
      %s39 = scalar_select %p36, %s38, %s29
      %p40 = scmp.ge.s32.totalorder %s39, 1
      %s41 = scalar_select %p40, 0, %s39
      %s42 = ssub.s32 %s30, 1
      %p43 = scmp.gt.s32.totalorder %s42, 0
      %s44 = scalar_select %p43, %s42, 0
      %s45 = ssub.s32 %s37, 1
      %p46 = scmp.gt.s32.totalorder %s45, 0
      %s47 = scalar_select %p46, %s45, 0
      %s48 = ssub.s32 %s29, %s41
      %s49 = ssub.s32 %s44, %s47
      %s50 = sor.u32 %s48, %s49
      %p51 = scmp.eq.s32.totalorder %s50, 0
      %s53 = sadd.s32 %s52, 1
      %s54 = scalar_select %p51, %s52, %s53
      %p57 = pneg %p51
      %p58 = scmp.eq.s32.totalorder %s22, 1
      %p59 = por %p57, %p58
      %p60 = scmp.ne.s32.totalorder %s52, %s55
      %p61 = scmp.eq.s32.totalorder %s22, 0
      %p62 = por %p60, %p61
      %p63 = scmp.ne.s32.totalorder %s52, %s55
      %p64 = scmp.eq.s32.totalorder %s27, 1
      %p65 = por %p63, %p64
      %p66 = scmp.ne.s32.totalorder %s55, %s56
      %p67 = scmp.eq.s32.totalorder %s27, 0
      %p68 = por %p66, %p67
      %p69 = scmp.ne.s32.totalorder %s55, %s56
      %p70 = scmp.eq.s32.totalorder %s28, 1
      %p71 = por %p69, %p70
      %p73 = scmp.ne.s32.totalorder %s56, %s72
      %p74 = scmp.eq.s32.totalorder %s28, 0
      %p75 = por %p73, %p74
      %s76 = ssub.s32 %s29, %s41
      %s77 = ssub.s32 %s30, %s37
      %s78 = sor.u32 %s76, %s77
      %p79 = scmp.eq.s32.totalorder %s78, 0
      %s81 = sadd.s32 %s80, 1
      %s82 = scalar_select %p79, %s80, %s81
      %p85 = pneg %p79
      %p86 = scmp.eq.s32.totalorder %s22, 1
      %p87 = por %p85, %p86
      %p88 = scmp.ne.s32.totalorder %s80, %s83
      %p89 = scmp.eq.s32.totalorder %s22, 0
      %p90 = por %p88, %p89
      %p91 = scmp.ne.s32.totalorder %s80, %s83
      %p92 = scmp.eq.s32.totalorder %s27, 1
      %p93 = por %p91, %p92
      %p94 = scmp.ne.s32.totalorder %s83, %s84
      %p95 = scmp.eq.s32.totalorder %s27, 0
      %p96 = por %p94, %p95
      %p97 = scmp.ne.s32.totalorder %s83, %s84
      %p98 = scmp.eq.s32.totalorder %s28, 1
      %p99 = por %p97, %p98
      %p101 = scmp.ne.s32.totalorder %s84, %s100
      %p102 = scmp.eq.s32.totalorder %s28, 0
      %p103 = por %p101, %p102
      %s104 = sadd.s32 %s30, 1
      %p105 = scmp.lt.s32.totalorder %s104, 1
      %s106 = scalar_select %p105, %s104, 1
      %s107 = sadd.s32 %s37, 1
      %p108 = scmp.lt.s32.totalorder %s107, 1
      %s109 = scalar_select %p108, %s107, 1
      %s110 = ssub.s32 %s29, %s41
      %s111 = ssub.s32 %s106, %s109
      %s112 = sor.u32 %s110, %s111
      %p113 = scmp.eq.s32.totalorder %s112, 0
      %s115 = sadd.s32 %s114, 1
      %s116 = scalar_select %p113, %s114, %s115
      %p119 = pneg %p113
      %p120 = scmp.eq.s32.totalorder %s22, 1
      %p121 = por %p119, %p120
      %p122 = scmp.ne.s32.totalorder %s114, %s117
      %p123 = scmp.eq.s32.totalorder %s22, 0
      %p124 = por %p122, %p123
      %p125 = scmp.ne.s32.totalorder %s114, %s117
      %p126 = scmp.eq.s32.totalorder %s27, 1
      %p127 = por %p125, %p126
      %p128 = scmp.ne.s32.totalorder %s117, %s118
      %p129 = scmp.eq.s32.totalorder %s27, 0
      %p130 = por %p128, %p129
      %p131 = scmp.ne.s32.totalorder %s117, %s118
      %p132 = scmp.eq.s32.totalorder %s28, 1
      %p133 = por %p131, %p132
      %p135 = scmp.ne.s32.totalorder %s118, %s134
      %p136 = scmp.eq.s32.totalorder %s28, 0
      %p137 = por %p135, %p136
      %s139 = sadd.s32 %s138, 1
      %p142 = scmp.eq.s32.totalorder %s22, 1
      %p143 = scmp.ne.s32.totalorder %s138, %s140
      %p144 = scmp.eq.s32.totalorder %s22, 0
      %p145 = por %p143, %p144
      %p146 = scmp.ne.s32.totalorder %s138, %s140
      %p147 = scmp.eq.s32.totalorder %s27, 1
      %p148 = por %p146, %p147
      %p149 = scmp.ne.s32.totalorder %s140, %s141
      %p150 = scmp.eq.s32.totalorder %s27, 0
      %p151 = por %p149, %p150
      %p152 = scmp.ne.s32.totalorder %s140, %s141
      %p153 = scmp.eq.s32.totalorder %s28, 1
      %p154 = por %p152, %p153
      %p156 = scmp.ne.s32.totalorder %s141, %s155
      %p157 = scmp.eq.s32.totalorder %s28, 0
      %p158 = por %p156, %p157
      %s160 = sadd.s32 %s159, 1
      %p163 = scmp.eq.s32.totalorder %s22, 1
      %p164 = scmp.ne.s32.totalorder %s159, %s161
      %p165 = scmp.eq.s32.totalorder %s22, 0
      %p166 = por %p164, %p165
      %p167 = scmp.ne.s32.totalorder %s159, %s161
      %p168 = scmp.eq.s32.totalorder %s27, 1
      %p169 = por %p167, %p168
      %p170 = scmp.ne.s32.totalorder %s161, %s162
      %p171 = scmp.eq.s32.totalorder %s27, 0
      %p172 = por %p170, %p171
      %p173 = scmp.ne.s32.totalorder %s161, %s162
      %p174 = scmp.eq.s32.totalorder %s28, 1
      %p175 = por %p173, %p174
      %p177 = scmp.ne.s32.totalorder %s162, %s176
      %p178 = scmp.eq.s32.totalorder %s28, 0
      %p179 = por %p177, %p178
      %s181 = sadd.s32 %s180, 1
      %p184 = scmp.eq.s32.totalorder %s22, 1
      %p185 = scmp.ne.s32.totalorder %s180, %s182
      %p186 = scmp.eq.s32.totalorder %s22, 0
      %p187 = por %p185, %p186
      %p188 = scmp.ne.s32.totalorder %s180, %s182
      %p189 = scmp.eq.s32.totalorder %s27, 1
      %p190 = por %p188, %p189
      %p191 = scmp.ne.s32.totalorder %s182, %s183
      %p192 = scmp.eq.s32.totalorder %s27, 0
      %p193 = por %p191, %p192
      %p194 = scmp.ne.s32.totalorder %s182, %s183
      %p195 = scmp.eq.s32.totalorder %s28, 1
      %p196 = por %p194, %p195
      %p198 = scmp.ne.s32.totalorder %s183, %s197
      %p199 = scmp.eq.s32.totalorder %s28, 0
      %p200 = por %p198, %p199
      %s202 = sadd.s32 %s201, 1
      %p205 = scmp.eq.s32.totalorder %s22, 1
      %p206 = scmp.ne.s32.totalorder %s201, %s203
      %p207 = scmp.eq.s32.totalorder %s22, 0
      %p208 = por %p206, %p207
      %p209 = scmp.ne.s32.totalorder %s201, %s203
      %p210 = scmp.eq.s32.totalorder %s27, 1
      %p211 = por %p209, %p210
      %p212 = scmp.ne.s32.totalorder %s203, %s204
      %p213 = scmp.eq.s32.totalorder %s27, 0
      %p214 = por %p212, %p213
      %p215 = scmp.ne.s32.totalorder %s203, %s204
      %p216 = scmp.eq.s32.totalorder %s28, 1
      %p217 = por %p215, %p216
      %p219 = scmp.ne.s32.totalorder %s204, %s218
      %p220 = scmp.eq.s32.totalorder %s28, 0
      %p221 = por %p219, %p220
      %s222 = ssub.s32 %s29, %s41
      %s223 = ssub.s32 %s30, %s37
      %s224 = sor.u32 %s222, %s223
      %p225 = scmp.eq.s32.totalorder %s224, 0
      %s227 = sadd.s32 %s226, 1
      %s228 = scalar_select %p225, %s226, %s227
      %p231 = pneg %p225
      %p232 = scmp.eq.s32.totalorder %s22, 1
      %p233 = por %p231, %p232
      %p234 = scmp.ne.s32.totalorder %s226, %s229
      %p235 = scmp.eq.s32.totalorder %s22, 0
      %p236 = por %p234, %p235
      %p237 = scmp.ne.s32.totalorder %s226, %s229
      %p238 = scmp.eq.s32.totalorder %s27, 1
      %p239 = por %p237, %p238
      %p240 = scmp.ne.s32.totalorder %s229, %s230
      %p241 = scmp.eq.s32.totalorder %s27, 0
      %p242 = por %p240, %p241
      %p243 = scmp.ne.s32.totalorder %s229, %s230
      %p244 = scmp.eq.s32.totalorder %s28, 1
      %p245 = por %p243, %p244
      %p247 = scmp.ne.s32.totalorder %s230, %s246
      %p248 = scmp.eq.s32.totalorder %s28, 0
      %p249 = por %p247, %p248
      %p250 = scmp.le.s32.totalorder 1, %s22
      %p251 = scmp.lt.s32.totalorder %s22, 3
      %p252 = pnand %p250, %p251
      %p253 = pneg %p252
      // Predicated region
      $region9: #{tpu_custom_call.1} parent=5 // pred_check
        _
      $region10: #{tpu_custom_call.1} parent=5 // pred_check_branch
        %255 = sbr.rel (%p252) target = $region12
      $region11: #{tpu_custom_call.1} parent=5 // pred_region
        %s256 = ssub.s32 %s22, 1
        // Predicated region
        $region13: #{tpu_custom_call.1} parent=11 // pred_check
          %p257 = pneg %p151
        $region14: #{tpu_custom_call.1} parent=11 // pred_check_branch
          %259 = sbr.rel (%p257) target = $region16
        $region15: #{tpu_custom_call.1} parent=11 // pred_region
          _
        $region16: #{tpu_custom_call.1} parent=11 // pred_fallthru
          _
        // Predicated region
        $region17: #{tpu_custom_call.1} parent=11 // pred_check
          %p260 = pneg %p172
        $region18: #{tpu_custom_call.1} parent=11 // pred_check_branch
          %262 = sbr.rel (%p260) target = $region20
        $region19: #{tpu_custom_call.1} parent=11 // pred_region
          _
        $region20: #{tpu_custom_call.1} parent=11 // pred_fallthru
          _
        // Predicated region
        $region21: #{tpu_custom_call.1} parent=11 // pred_check
          %p263 = pneg %p193
        $region22: #{tpu_custom_call.1} parent=11 // pred_check_branch
          %265 = sbr.rel (%p263) target = $region24
        $region23: #{tpu_custom_call.1} parent=11 // pred_region
          _
        $region24: #{tpu_custom_call.1} parent=11 // pred_fallthru
          _
        // Predicated region
        $region25: #{tpu_custom_call.1} parent=11 // pred_check
          %p266 = pneg %p214
        $region26: #{tpu_custom_call.1} parent=11 // pred_check_branch
          %268 = sbr.rel (%p266) target = $region28
        $region27: #{tpu_custom_call.1} parent=11 // pred_region
          _
        $region28: #{tpu_custom_call.1} parent=11 // pred_fallthru
          _
      $region12: #{tpu_custom_call.1} parent=5 // pred_fallthru
        _
      %p269 = scmp.lt.s32.totalorder %s22, 2
      // Predicated region
      $region29: #{tpu_custom_call.1} parent=5 // pred_check
        %p270 = pneg %p269
      $region30: #{tpu_custom_call.1} parent=5 // pred_check_branch
        %272 = sbr.rel (%p270) target = $region32
      $region31: #{tpu_custom_call.1} parent=5 // pred_region
        // Predicated region
        $region33: #{tpu_custom_call.1} parent=31 // pred_check
          %p273 = pneg %p62
        $region34: #{tpu_custom_call.1} parent=31 // pred_check_branch
          %275 = sbr.rel (%p273) target = $region36
        $region35: #{tpu_custom_call.1} parent=31 // pred_region
          %s276 = sand.u32 %s52, 1
          %s277 = scalar_lea.sflag [#allocation3], %s276
          %s278 = sand.u32 %s52, 1
          %s279 = smul.addr %s278, 32
          %s280 = scalar_lea.vmem [#allocation2], %s279
          %s281 = ssub.s32 %s30, 1
          %p282 = scmp.gt.s32.totalorder %s281, 0
          %s283 = scalar_select %p282, %s281, 0
          %s284 = smul.u32 4, %s283
          %s286 = ssub.s32 512, 512
          %287 = vsyncadd %s277, %s286
          %s288 = smul.addr %s29, 8
          %s289 = sadd.s32 %s284, %s288
          %s290 = smul.addr %s289, 128
          %s291 = scalar_lea.hbm %s0, %s290
          %s293 = sshll.u32 %s280, 4
          %s294 = int_to_ptr.vmem [resolvable:$true] %s293
          %296 = dma.hbm_to_vmem [thread:$0]  %s291, 512, %s294, %s277
        $region36: #{tpu_custom_call.1} parent=31 // pred_fallthru
          _
        // Predicated region
        $region37: #{tpu_custom_call.1} parent=31 // pred_check
          %p297 = pneg %p90
        $region38: #{tpu_custom_call.1} parent=31 // pred_check_branch
          %299 = sbr.rel (%p297) target = $region40
        $region39: #{tpu_custom_call.1} parent=31 // pred_region
          %s300 = sand.u32 %s22, 1
          %s301 = scalar_lea.sflag [#allocation6], %s300
          %s302 = sand.u32 %s80, 1
          %s303 = smul.addr %s302, 32
          %s304 = scalar_lea.vmem [#allocation5], %s303
          %s305 = smul.u32 4, %s30
          %s307 = ssub.s32 512, 512
          %308 = vsyncadd %s301, %s307
          %s309 = smul.addr %s29, 8
          %s310 = sadd.s32 %s305, %s309
          %s311 = smul.addr %s310, 128
          %s312 = scalar_lea.hbm %s1, %s311
          %s314 = sshll.u32 %s304, 4
          %s315 = int_to_ptr.vmem [resolvable:$true] %s314
          %317 = dma.hbm_to_vmem [thread:$0]  %s312, 512, %s315, %s301
        $region40: #{tpu_custom_call.1} parent=31 // pred_fallthru
          _
        // Predicated region
        $region41: #{tpu_custom_call.1} parent=31 // pred_check
          %p318 = pneg %p124
        $region42: #{tpu_custom_call.1} parent=31 // pred_check_branch
          %320 = sbr.rel (%p318) target = $region44
        $region43: #{tpu_custom_call.1} parent=31 // pred_region
          %s321 = sand.u32 %s22, 1
          %s322 = scalar_lea.sflag [#allocation6], %s321
          %s323 = sand.u32 %s114, 1
          %s324 = smul.addr %s323, 32
          %s325 = scalar_lea.vmem [#allocation7], %s324
          %s326 = sadd.s32 %s30, 1
          %p327 = scmp.lt.s32.totalorder %s326, 1
          %s328 = scalar_select %p327, %s326, 1
          %s329 = smul.u32 4, %s328
          %s331 = ssub.s32 512, 512
          %332 = vsyncadd %s322, %s331
          %s333 = smul.addr %s29, 8
          %s334 = sadd.s32 %s329, %s333
          %s335 = smul.addr %s334, 128
          %s336 = scalar_lea.hbm %s2, %s335
          %s338 = sshll.u32 %s325, 4
          %s339 = int_to_ptr.vmem [resolvable:$true] %s338
          %341 = dma.hbm_to_vmem [thread:$0]  %s336, 512, %s339, %s322
        $region44: #{tpu_custom_call.1} parent=31 // pred_fallthru
          _
      $region32: #{tpu_custom_call.1} parent=5 // pred_fallthru
        _
      %p342 = scmp.le.s32.totalorder 1, %s22
      %p343 = scmp.lt.s32.totalorder %s22, 3
      %p344 = pnand %p342, %p343
      %p345 = pneg %p344
      // Predicated region
      $region45: #{tpu_custom_call.1} parent=5 // pred_check
        _
      $region46: #{tpu_custom_call.1} parent=5 // pred_check_branch
        %347 = sbr.rel (%p344) target = $region48
      $region47: #{tpu_custom_call.1} parent=5 // pred_region
        %s348 = ssub.s32 %s22, 1
        %s349 = sand.u32 %s55, 1
        %s350 = scalar_lea.sflag [#allocation3], %s349
        %s351 = sand.u32 %s55, 1
        %s352 = smul.addr %s351, 32
        %s353 = scalar_lea.vmem [#allocation2], %s352
        // Predicated region
        $region49: #{tpu_custom_call.1} parent=47 // pred_check
          %p354 = pneg %p68
        $region50: #{tpu_custom_call.1} parent=47 // pred_check_branch
          %356 = sbr.rel (%p354) target = $region52
        $region51: #{tpu_custom_call.1} parent=47 // pred_region
          %357 = dma.done %s350, 512
        $region52: #{tpu_custom_call.1} parent=47 // pred_fallthru
          _
        %s358 = sand.u32 %s27, 1
        %s359 = scalar_lea.sflag [#allocation6], %s358
        %s360 = sand.u32 %s83, 1
        %s361 = smul.addr %s360, 32
        %s362 = scalar_lea.vmem [#allocation5], %s361
        // Predicated region
        $region53: #{tpu_custom_call.1} parent=47 // pred_check
          %p363 = pneg %p96
        $region54: #{tpu_custom_call.1} parent=47 // pred_check_branch
          %365 = sbr.rel (%p363) target = $region56
        $region55: #{tpu_custom_call.1} parent=47 // pred_region
          %366 = dma.done %s359, 512
        $region56: #{tpu_custom_call.1} parent=47 // pred_fallthru
          _
        %s367 = sand.u32 %s27, 1
        %s368 = scalar_lea.sflag [#allocation6], %s367
        %s369 = sand.u32 %s117, 1
        %s370 = smul.addr %s369, 32
        %s371 = scalar_lea.vmem [#allocation7], %s370
        // Predicated region
        $region57: #{tpu_custom_call.1} parent=47 // pred_check
          %p372 = pneg %p130
        $region58: #{tpu_custom_call.1} parent=47 // pred_check_branch
          %374 = sbr.rel (%p372) target = $region60
        $region59: #{tpu_custom_call.1} parent=47 // pred_region
          %375 = dma.done %s368, 512
        $region60: #{tpu_custom_call.1} parent=47 // pred_fallthru
          _
        %s376 = sand.u32 %s55, 1
        %s377 = scalar_lea.sflag [#allocation3], %s376
        %s378 = sand.u32 %s55, 1
        %s379 = smul.addr %s378, 32
        %s380 = scalar_lea.vmem [#allocation2], %s379
        %p381 = pneg %p68
        %p382 = pneg %p65
        %s383 = sand.u32 %s27, 1
        %s384 = scalar_lea.sflag [#allocation6], %s383
        %s385 = sand.u32 %s83, 1
        %s386 = smul.addr %s385, 32
        %s387 = scalar_lea.vmem [#allocation5], %s386
        %p388 = pneg %p96
        %p389 = pneg %p93
        %s390 = sand.u32 %s27, 1
        %s391 = scalar_lea.sflag [#allocation6], %s390
        %s392 = sand.u32 %s117, 1
        %s393 = smul.addr %s392, 32
        %s394 = scalar_lea.vmem [#allocation7], %s393
        %p395 = pneg %p130
        %p396 = pneg %p127
        %p397 = pneg %p151
        %p398 = pneg %p148
        %p399 = pneg %p172
        %p400 = pneg %p169
        %p401 = pneg %p193
        %p402 = pneg %p190
        %p403 = pneg %p214
        %p404 = pneg %p211
        %p405 = pneg %p242
        %p406 = pneg %p239
        %s407 = sand.u32 %s229, 1
        %s408 = scalar_lea.sflag [#allocation4], %s407
        %s409 = sand.u32 %s229, 1
        %s410 = smul.addr %s409, 32
        %s411 = scalar_lea.vmem [#allocation8], %s410
        %s412 = ssub.s32 %s32, 1
        %p413 = scmp.gt.s32.totalorder %s412, 0
        %s414 = scalar_select %p413, %s412, 0
        %s415 = smul.u32 4, %s414
        %s416 = smul.u32 4, %s32
        %s417 = sadd.s32 %s32, 1
        %p418 = scmp.lt.s32.totalorder %s417, 1
        %s419 = scalar_select %p418, %s417, 1
        %s420 = smul.u32 4, %s419
        %s421 = smul.u32 4, %s32
        %p422 = scmp.eq.s32.totalorder %s32, 0
        %p423 = scmp.eq.s32.totalorder %s32, 1
        %v424 = vlaneseq
        %v425 = vand.u32 %v424, 127
        %v426 = vadd.s32 %v425, 128
        %v427 = vadd.s32 %v425, 256
        %v428 = vadd.s32 %v425, 384
        %v429 = vadd.s32 %v425, 512
        %v430 = vadd.s32 %v425, 640
        %v431 = vadd.s32 %v425, 768
        %v432 = vadd.s32 %v425, 896
        %vm433 = vcmp.lt.s32.totalorder %v425, 0
        %v434 = vsub.s32 0, %v425
        %v435 = vsel %vm433, %v434, %v425
        %v436 = vshrl.u32 %v435, 7
        %v437 = vand.u32 %v435, 127
        %v438 = vsub.s32 0, %v437
        %v439 = vsel %vm433, %v438, %v437
        %vm440 = vcmp.lt.s32.totalorder %v426, 0
        %v441 = vsub.s32 0, %v426
        %v442 = vsel %vm440, %v441, %v426
        %v443 = vshrl.u32 %v442, 7
        %v444 = vand.u32 %v442, 127
        %v445 = vsub.s32 0, %v444
        %v446 = vsel %vm440, %v445, %v444
        %vm447 = vcmp.lt.s32.totalorder %v427, 0
        %v448 = vsub.s32 0, %v427
        %v449 = vsel %vm447, %v448, %v427
        %v450 = vshrl.u32 %v449, 7
        %v451 = vand.u32 %v449, 127
        %v452 = vsub.s32 0, %v451
        %v453 = vsel %vm447, %v452, %v451
        %vm454 = vcmp.lt.s32.totalorder %v428, 0
        %v455 = vsub.s32 0, %v428
        %v456 = vsel %vm454, %v455, %v428
        %v457 = vshrl.u32 %v456, 7
        %v458 = vand.u32 %v456, 127
        %v459 = vsub.s32 0, %v458
        %v460 = vsel %vm454, %v459, %v458
        %vm461 = vcmp.lt.s32.totalorder %v429, 0
        %v462 = vsub.s32 0, %v429
        %v463 = vsel %vm461, %v462, %v429
        %v464 = vshrl.u32 %v463, 7
        %v465 = vand.u32 %v463, 127
        %v466 = vsub.s32 0, %v465
        %v467 = vsel %vm461, %v466, %v465
        %vm468 = vcmp.lt.s32.totalorder %v430, 0
        %v469 = vsub.s32 0, %v430
        %v470 = vsel %vm468, %v469, %v430
        %v471 = vshrl.u32 %v470, 7
        %v472 = vand.u32 %v470, 127
        %v473 = vsub.s32 0, %v472
        %v474 = vsel %vm468, %v473, %v472
        %vm475 = vcmp.lt.s32.totalorder %v431, 0
        %v476 = vsub.s32 0, %v431
        %v477 = vsel %vm475, %v476, %v431
        %v478 = vshrl.u32 %v477, 7
        %v479 = vand.u32 %v477, 127
        %v480 = vsub.s32 0, %v479
        %v481 = vsel %vm475, %v480, %v479
        %vm482 = vcmp.lt.s32.totalorder %v432, 0
        %v483 = vsub.s32 0, %v432
        %v484 = vsel %vm482, %v483, %v432
        %v485 = vshrl.u32 %v484, 7
        %v486 = vand.u32 %v484, 127
        %v487 = vsub.s32 0, %v486
        %v488 = vsel %vm482, %v487, %v486
        %vm489 = vcmp.ne.s32.totalorder %v439, 0
        %vm490 = vcmp.ne.s32.totalorder %v446, 0
        %vm491 = vcmp.ne.s32.totalorder %v453, 0
        %vm492 = vcmp.ne.s32.totalorder %v460, 0
        %vm493 = vcmp.ne.s32.totalorder %v467, 0
        %vm494 = vcmp.ne.s32.totalorder %v474, 0
        %vm495 = vcmp.ne.s32.totalorder %v481, 0
        %vm496 = vcmp.ne.s32.totalorder %v488, 0
        %vm497 = vcmp.lt.s32.totalorder %v439, 0
        %vm498 = vcmp.lt.s32.totalorder %v446, 0
        %vm499 = vcmp.lt.s32.totalorder %v453, 0
        %vm500 = vcmp.lt.s32.totalorder %v460, 0
        %vm501 = vcmp.lt.s32.totalorder %v467, 0
        %vm502 = vcmp.lt.s32.totalorder %v474, 0
        %vm503 = vcmp.lt.s32.totalorder %v481, 0
        %vm504 = vcmp.lt.s32.totalorder %v488, 0
        %vm505 = vmand %vm497, %vm489
        %vm506 = vmand %vm498, %vm490
        %vm507 = vmand %vm499, %vm491
        %vm508 = vmand %vm500, %vm492
        %vm509 = vmand %vm501, %vm493
        %vm510 = vmand %vm502, %vm494
        %vm511 = vmand %vm503, %vm495
        %vm512 = vmand %vm504, %vm496
        %v513 = vadd.s32 %v439, 128
        %v514 = vadd.s32 %v446, 128
        %v515 = vadd.s32 %v453, 128
        %v516 = vadd.s32 %v460, 128
        %v517 = vadd.s32 %v467, 128
        %v518 = vadd.s32 %v474, 128
        %v519 = vadd.s32 %v481, 128
        %v520 = vadd.s32 %v488, 128
        %v521 = vsel %vm505, %v513, %v439
        %v522 = vsel %vm506, %v514, %v446
        %v523 = vsel %vm507, %v515, %v453
        %v524 = vsel %vm508, %v516, %v460
        %v525 = vsel %vm509, %v517, %v467
        %v526 = vsel %vm510, %v518, %v474
        %v527 = vsel %vm511, %v519, %v481
        %v528 = vsel %vm512, %v520, %v488
        %vm529 = vcmp.ge.s32.totalorder %v521, 1
        %vm530 = vcmp.ge.s32.totalorder %v522, 1
        %vm531 = vcmp.ge.s32.totalorder %v523, 1
        %vm532 = vcmp.ge.s32.totalorder %v524, 1
        %vm533 = vcmp.ge.s32.totalorder %v525, 1
        %vm534 = vcmp.ge.s32.totalorder %v526, 1
        %vm535 = vcmp.ge.s32.totalorder %v527, 1
        %vm536 = vcmp.ge.s32.totalorder %v528, 1
        %vm537 = vcmp.le.s32.totalorder %v521, 126
        %vm538 = vcmp.le.s32.totalorder %v522, 126
        %vm539 = vcmp.le.s32.totalorder %v523, 126
        %vm540 = vcmp.le.s32.totalorder %v524, 126
        %vm541 = vcmp.le.s32.totalorder %v525, 126
        %vm542 = vcmp.le.s32.totalorder %v526, 126
        %vm543 = vcmp.le.s32.totalorder %v527, 126
        %vm544 = vcmp.le.s32.totalorder %v528, 126
        %vm545 = vcmp.ge.s32.totalorder %v425, 128
        %vm546 = vcmp.ge.s32.totalorder %v426, 128
        %vm547 = vcmp.ge.s32.totalorder %v427, 128
        %vm548 = vcmp.ge.s32.totalorder %v428, 128
        %vm549 = vcmp.ge.s32.totalorder %v429, 128
        %vm550 = vcmp.ge.s32.totalorder %v430, 128
        %vm551 = vcmp.ge.s32.totalorder %v431, 128
        %vm552 = vcmp.ge.s32.totalorder %v432, 128
        %vm553 = vcmp.lt.s32.totalorder %v425, 256
        %vm554 = vcmp.lt.s32.totalorder %v426, 256
        %vm555 = vcmp.lt.s32.totalorder %v427, 256
        %vm556 = vcmp.lt.s32.totalorder %v428, 256
        %vm557 = vcmp.lt.s32.totalorder %v429, 256
        %vm558 = vcmp.lt.s32.totalorder %v430, 256
        %vm559 = vcmp.lt.s32.totalorder %v431, 256
        %vm560 = vcmp.lt.s32.totalorder %v432, 256
        %vm561 = vmand %vm545, %vm553
        %vm562 = vmand %vm546, %vm554
        %vm563 = vmand %vm547, %vm555
        %vm564 = vmand %vm548, %vm556
        %vm565 = vmand %vm549, %vm557
        %vm566 = vmand %vm550, %vm558
        %vm567 = vmand %vm551, %vm559
        %vm568 = vmand %vm552, %vm560
        %vm569 = vcmp.ge.s32.totalorder %v425, 768
        %vm570 = vcmp.ge.s32.totalorder %v426, 768
        %vm571 = vcmp.ge.s32.totalorder %v427, 768
        %vm572 = vcmp.ge.s32.totalorder %v428, 768
        %vm573 = vcmp.ge.s32.totalorder %v429, 768
        %vm574 = vcmp.ge.s32.totalorder %v430, 768
        %vm575 = vcmp.ge.s32.totalorder %v431, 768
        %vm576 = vcmp.ge.s32.totalorder %v432, 768
        %vm577 = vcmp.lt.s32.totalorder %v425, 896
        %vm578 = vcmp.lt.s32.totalorder %v426, 896
        %vm579 = vcmp.lt.s32.totalorder %v427, 896
        %vm580 = vcmp.lt.s32.totalorder %v428, 896
        %vm581 = vcmp.lt.s32.totalorder %v429, 896
        %vm582 = vcmp.lt.s32.totalorder %v430, 896
        %vm583 = vcmp.lt.s32.totalorder %v431, 896
        %vm584 = vcmp.lt.s32.totalorder %v432, 896
        %vm585 = vmand %vm569, %vm577
        %vm586 = vmand %vm570, %vm578
        %vm587 = vmand %vm571, %vm579
        %vm588 = vmand %vm572, %vm580
        %vm589 = vmand %vm573, %vm581
        %vm590 = vmand %vm574, %vm582
        %vm591 = vmand %vm575, %vm583
        %vm592 = vmand %vm576, %vm584
        %s593 = scalar_select %p422, 1, 0
        %v594 = vstv %s593
        %vm595 = vcmp.eq.s32.totalorder %v594, 1
        %vm596 = vmand %vm595, %vm561
        %vm597 = vmand %vm595, %vm562
        %vm598 = vmand %vm595, %vm563
        %vm599 = vmand %vm595, %vm564
        %vm600 = vmand %vm595, %vm565
        %vm601 = vmand %vm595, %vm566
        %vm602 = vmand %vm595, %vm567
        %vm603 = vmand %vm595, %vm568
        %s604 = scalar_select %p423, 1, 0
        %v605 = vstv %s604
        %vm606 = vcmp.eq.s32.totalorder %v605, 1
        %vm607 = vmand %vm606, %vm585
        %vm608 = vmand %vm606, %vm586
        %vm609 = vmand %vm606, %vm587
        %vm610 = vmand %vm606, %vm588
        %vm611 = vmand %vm606, %vm589
        %vm612 = vmand %vm606, %vm590
        %vm613 = vmand %vm606, %vm591
        %vm614 = vmand %vm606, %vm592
        %vm615 = vmor %vm596, %vm607
        %vm616 = vmor %vm597, %vm608
        %vm617 = vmor %vm598, %vm609
        %vm618 = vmor %vm599, %vm610
        %vm619 = vmor %vm600, %vm611
        %vm620 = vmor %vm601, %vm612
        %vm621 = vmor %vm602, %vm613
        %vm622 = vmor %vm603, %vm614
        %v623 = vld [vmem:[%s353 + $0x10] sm:$0xff]
        %v624 = vld [vmem:[%s353 + $0x18] sm:$0xff]
        %v625 = vld [vmem:[%s371] sm:$0xff]
        %v626 = vld [vmem:[%s371 + $0x8] sm:$0xff]
        %v627 = vsel %vm595, 0.0, %v623
        %v628 = vsel %vm595, 0.0, %v624
        %v629 = vsel %vm606, 0.0, %v625
        %v630 = vsel %vm606, 0.0, %v626
        %v631 = vld [vmem:[%s362] sm:$0xff]
        %v632 = vld [vmem:[%s362 + $0x8] sm:$0xff]
        %v633 = vld [vmem:[%s362 + $0x10] sm:$0xff]
        %v634 = vld [vmem:[%s362 + $0x18] sm:$0xff]
        %642 = vrot.lane.b32.xlu0 %v627, 1
        %v643 = vpop.permute.xlu0 %642
        %644 = vrot.lane.b32.xlu0 %v628, 1
        %v645 = vpop.permute.xlu0 %644
        %646 = vrot.lane.b32.xlu0 %v631, 1
        %v647 = vpop.permute.xlu0 %646
        %648 = vrot.lane.b32.xlu0 %v632, 1
        %v649 = vpop.permute.xlu0 %648
        %650 = vrot.lane.b32.xlu0 %v633, 1
        %v651 = vpop.permute.xlu0 %650
        %652 = vrot.lane.b32.xlu0 %v634, 1
        %v653 = vpop.permute.xlu0 %652
        %654 = vrot.lane.b32.xlu0 %v629, 1
        %v655 = vpop.permute.xlu0 %654
        %vm656 = vcmask 7168
        %v657 = vsel %vm656, %v643, %v645
        %v658 = vsel %vm656, %v645, %v647
        %v659 = vsel %vm656, %v647, %v649
        %v660 = vsel %vm656, %v649, %v651
        %v661 = vsel %vm656, %v651, %v653
        %v662 = vsel %vm656, %v653, %v655
        %v670 = vsel %vm656, 0.0, %v643
        %v671 = vsel %vm529, 1, 0
        %v672 = vsel %vm530, 1, 0
        %v673 = vsel %vm531, 1, 0
        %v674 = vsel %vm532, 1, 0
        %v675 = vsel %vm533, 1, 0
        %v676 = vsel %vm534, 1, 0
        %v677 = vsel %vm535, 1, 0
        %v678 = vsel %vm536, 1, 0
        %vm679 = vcmp.eq.s32.totalorder %v671, 1
        %vm680 = vcmp.eq.s32.totalorder %v672, 1
        %vm681 = vcmp.eq.s32.totalorder %v673, 1
        %vm682 = vcmp.eq.s32.totalorder %v674, 1
        %vm683 = vcmp.eq.s32.totalorder %v675, 1
        %vm684 = vcmp.eq.s32.totalorder %v676, 1
        %vm685 = vcmp.eq.s32.totalorder %v677, 1
        %vm686 = vcmp.eq.s32.totalorder %v678, 1
        %v687 = vsel %vm680, %v670, 0.0
        %v688 = vsel %vm681, %v657, 0.0
        %v689 = vsel %vm682, %v658, 0.0
        %v690 = vsel %vm683, %v659, 0.0
        %v691 = vsel %vm684, %v660, 0.0
        %v692 = vsel %vm685, %v661, 0.0
        %v693 = vsel %vm686, %v662, 0.0
        %695 = vrot.lane.b32.xlu0 %v627, 127
        %v696 = vpop.permute.xlu0 %695
        %697 = vrot.lane.b32.xlu0 %v628, 127
        %v698 = vpop.permute.xlu0 %697
        %699 = vrot.lane.b32.xlu0 %v631, 127
        %v700 = vpop.permute.xlu0 %699
        %701 = vrot.lane.b32.xlu0 %v632, 127
        %v702 = vpop.permute.xlu0 %701
        %703 = vrot.lane.b32.xlu0 %v633, 127
        %v704 = vpop.permute.xlu0 %703
        %705 = vrot.lane.b32.xlu0 %v634, 127
        %v706 = vpop.permute.xlu0 %705
        %707 = vrot.lane.b32.xlu0 %v629, 127
        %v708 = vpop.permute.xlu0 %707
        %709 = vrot.lane.b32.xlu0 %v630, 127
        %v710 = vpop.permute.xlu0 %709
        %vm711 = vcmask 1039360
        %v712 = vsel %vm711, %v696, %v698
        %v713 = vsel %vm711, %v698, %v700
        %v714 = vsel %vm711, %v700, %v702
        %v715 = vsel %vm711, %v702, %v704
        %v716 = vsel %vm711, %v704, %v706
        %v717 = vsel %vm711, %v706, %v708
        %v718 = vsel %vm711, %v708, %v710
        %v727 = vsel %vm711, 0.0, %v696
        %v728 = vsel %vm537, 1, 0
        %v729 = vsel %vm538, 1, 0
        %v730 = vsel %vm539, 1, 0
        %v731 = vsel %vm540, 1, 0
        %v732 = vsel %vm541, 1, 0
        %v733 = vsel %vm542, 1, 0
        %v734 = vsel %vm543, 1, 0
        %v735 = vsel %vm544, 1, 0
        %vm736 = vcmp.eq.s32.totalorder %v728, 1
        %vm737 = vcmp.eq.s32.totalorder %v729, 1
        %vm738 = vcmp.eq.s32.totalorder %v730, 1
        %vm739 = vcmp.eq.s32.totalorder %v731, 1
        %vm740 = vcmp.eq.s32.totalorder %v732, 1
        %vm741 = vcmp.eq.s32.totalorder %v733, 1
        %vm742 = vcmp.eq.s32.totalorder %v734, 1
        %vm743 = vcmp.eq.s32.totalorder %v735, 1
        %v744 = vsel %vm736, %v727, 0.0
        %v745 = vsel %vm737, %v712, 0.0
        %v746 = vsel %vm738, %v713, 0.0
        %v747 = vsel %vm739, %v714, 0.0
        %v748 = vsel %vm740, %v715, 0.0
        %v749 = vsel %vm741, %v716, 0.0
        %v750 = vsel %vm742, %v717, 0.0
        %v751 = vsel %vm743, %v718, 0.0
        %752 = vrot.lane.b32.xlu0 %v630, 1
        %v753 = vpop.permute.xlu0 %752
        %v754 = vsel %vm656, %v655, %v753
        %v756 = vsel %vm679, %v670, 0.0
        %v757 = vsel %vm680, %v657, 0.0
        %v758 = vsel %vm681, %v658, 0.0
        %v759 = vsel %vm682, %v659, 0.0
        %v760 = vsel %vm683, %v660, 0.0
        %v761 = vsel %vm684, %v661, 0.0
        %v762 = vsel %vm685, %v662, 0.0
        %v763 = vsel %vm686, %v754, 0.0
        %v765 = vsel %vm711, %v710, 0.0
        %v766 = vsel %vm736, %v712, 0.0
        %v767 = vsel %vm737, %v713, 0.0
        %v768 = vsel %vm738, %v714, 0.0
        %v769 = vsel %vm739, %v715, 0.0
        %v770 = vsel %vm740, %v716, 0.0
        %v771 = vsel %vm741, %v717, 0.0
        %v772 = vsel %vm742, %v718, 0.0
        %v773 = vsel %vm743, %v765, 0.0
        %v775 = vsel %vm656, %v753, 0.0
        %v776 = vsel %vm679, %v657, 0.0
        %v777 = vsel %vm680, %v658, 0.0
        %v778 = vsel %vm681, %v659, 0.0
        %v779 = vsel %vm682, %v660, 0.0
        %v780 = vsel %vm683, %v661, 0.0
        %v781 = vsel %vm684, %v662, 0.0
        %v782 = vsel %vm685, %v754, 0.0
        %v783 = vsel %vm686, %v775, 0.0
        %v784 = vsel %vm736, %v713, 0.0
        %v785 = vsel %vm737, %v714, 0.0
        %v786 = vsel %vm738, %v715, 0.0
        %v787 = vsel %vm739, %v716, 0.0
        %v788 = vsel %vm740, %v717, 0.0
        %v789 = vsel %vm741, %v718, 0.0
        %v790 = vsel %vm742, %v765, 0.0
        %v791 = vld [vmem:[%s3] sm:$0xff]
        %v792 = vld [vmem:[%s4] sm:$0xff]
        %794 = vset.pattern.permute.xlu0 0
        %795 = vperm.xlu0 %794, %v792
        %v796 = vpop.permute.xlu0 %795
        %vm798 = vcmask 588800
        %v800 = vsel %vm798, %v791, 0
        %802 = vmatprep.subr.mxu0 0.0
        %803 = vmatpush1.msra.mxu0 0.0
        %804 = vmatprep.subr.mxu0 0.0
        %805 = vmatpush1.msra.mxu0 0.0
        %806 = vmatprep.subr.mxu0 0.0
        %807 = vmatpush1.msra.mxu0 0.0
        %808 = vmatprep.subr.mxu0 0.0
        %809 = vmatpush1.msra.mxu0 0.0
        %810 = vmatprep.subr.mxu0 0.0
        %811 = vmatpush1.msra.mxu0 0.0
        %812 = vmatprep.subr.mxu0 0.0
        %813 = vmatpush1.msra.mxu0 0.0
        %814 = vmatprep.subr.mxu0 0.0
        %815 = vmatpush1.msra.mxu0 0.0
        %816 = vmatprep.subr.mxu0 %v785
        %817 = vmatpush1.msra.mxu0 %v784
        %818 = vmatprep.subr.mxu0 %v631
        %819 = vmatpush1.msra.mxu0 %v628
        %820 = vmatprep.subr.mxu0 %v777
        %821 = vmatpush1.msra.mxu0 %v776
        %822 = vmatprep.subr.mxu0 %v767
        %823 = vmatpush1.msra.mxu0 %v766
        %824 = vmatprep.subr.mxu0 %v628
        %825 = vmatpush1.msra.mxu0 %v627
        %826 = vmatprep.subr.mxu0 %v757
        %827 = vmatpush1.msra.mxu0 %v756
        %828 = vmatprep.subr.mxu0 %v745
        %829 = vmatpush1.msra.mxu0 %v744
        %830 = vmatprep.subr.mxu0 %v627
        %831 = vmatpush1.msra.mxu0 0.0
        %832 = vmatprep.subr.mxu0 %v687
        %833 = vmatpush1.msra.mxu0 0.0
        %834 = vmatprep.subr.mxu0 0.0
        %835 = vmatpush2.msra.mxu0 0.0
        %836 = vmatprep.subr.mxu0 0.0
        %837 = vmatpush2.msra.mxu0 0.0
        %838 = vmatprep.subr.mxu0 0.0
        %839 = vmatpush2.msra.mxu0 0.0
        %840 = vmatprep.subr.mxu0 0.0
        %841 = vmatpush2.msra.mxu0 0.0
        %842 = vmatprep.subr.mxu0 0.0
        %843 = vmatpush2.msra.mxu0 0.0
        %844 = vmatprep.subr.mxu0 0.0
        %845 = vmatpush2.msra.mxu0 0.0
        %846 = vmatprep.subr.mxu0 0.0
        %847 = vmatpush2.msra.mxu0 0.0
        %848 = vmatprep.subr.mxu0 0.0
        %849 = vmatpush2.msra.mxu0 0.0
        %850 = vmatprep.subr.mxu0 0.0
        %851 = vmatpush2.msra.mxu0 0.0
        %852 = vmatprep.subr.mxu0 0.0
        %853 = vmatpush2.msra.mxu0 0.0
        %854 = vmatprep.subr.mxu0 0.0
        %855 = vmatpush2.msra.mxu0 0.0
        %856 = vmatprep.subr.mxu0 0.0
        %857 = vmatpush2.msra.mxu0 0.0
        %858 = vmatprep.subr.mxu0 0.0
        %859 = vmatpush2.msra.mxu0 0.0
        %860 = vmatprep.subr.mxu0 0.0
        %861 = vmatpush2.msra.mxu0 0.0
        %862 = vmatprep.subr.mxu0 0.0
        %863 = vmatpush2.msra.mxu0 0.0
        %864 = vmatprep.subr.mxu0 0.0
        %865 = vmatpush2.msra.mxu0 0.0
        %866 = vmatprep.mubr.f32.mxu0 0.0
        %867 = vmatmul.mubr.f32.gmra.mxu0 %v800
        %v868 = vpop.f32.mrf.mxu0
        %v869 = vadd.f32 %v796, %v868
        %v870 = vpop.f32.mrf.mxu0
        %v871 = vadd.f32 %v796, %v870
        %872 = vdwg.mxu0
        %873 = vmatprep.subr.mxu0 0.0
        %874 = vmatpush1.msra.mxu0 0.0
        %875 = vmatprep.subr.mxu0 0.0
        %876 = vmatpush1.msra.mxu0 0.0
        %877 = vmatprep.subr.mxu0 0.0
        %878 = vmatpush1.msra.mxu0 0.0
        %879 = vmatprep.subr.mxu0 0.0
        %880 = vmatpush1.msra.mxu0 0.0
        %881 = vmatprep.subr.mxu0 0.0
        %882 = vmatpush1.msra.mxu0 0.0
        %883 = vmatprep.subr.mxu0 0.0
        %884 = vmatpush1.msra.mxu0 0.0
        %885 = vmatprep.subr.mxu0 0.0
        %886 = vmatpush1.msra.mxu0 0.0
        %887 = vmatprep.subr.mxu0 %v787
        %888 = vmatpush1.msra.mxu0 %v786
        %889 = vmatprep.subr.mxu0 %v633
        %890 = vmatpush1.msra.mxu0 %v632
        %891 = vmatprep.subr.mxu0 %v779
        %892 = vmatpush1.msra.mxu0 %v778
        %893 = vmatprep.subr.mxu0 %v769
        %894 = vmatpush1.msra.mxu0 %v768
        %895 = vmatprep.subr.mxu0 %v632
        %896 = vmatpush1.msra.mxu0 %v631
        %897 = vmatprep.subr.mxu0 %v759
        %898 = vmatpush1.msra.mxu0 %v758
        %899 = vmatprep.subr.mxu0 %v747
        %900 = vmatpush1.msra.mxu0 %v746
        %901 = vmatprep.subr.mxu0 %v631
        %902 = vmatpush1.msra.mxu0 %v628
        %903 = vmatprep.subr.mxu0 %v689
        %904 = vmatpush1.msra.mxu0 %v688
        %905 = vmatprep.subr.mxu0 0.0
        %906 = vmatpush2.msra.mxu0 0.0
        %907 = vmatprep.subr.mxu0 0.0
        %908 = vmatpush2.msra.mxu0 0.0
        %909 = vmatprep.subr.mxu0 0.0
        %910 = vmatpush2.msra.mxu0 0.0
        %911 = vmatprep.subr.mxu0 0.0
        %912 = vmatpush2.msra.mxu0 0.0
        %913 = vmatprep.subr.mxu0 0.0
        %914 = vmatpush2.msra.mxu0 0.0
        %915 = vmatprep.subr.mxu0 0.0
        %916 = vmatpush2.msra.mxu0 0.0
        %917 = vmatprep.subr.mxu0 0.0
        %918 = vmatpush2.msra.mxu0 0.0
        %919 = vmatprep.subr.mxu0 0.0
        %920 = vmatpush2.msra.mxu0 0.0
        %921 = vmatprep.subr.mxu0 0.0
        %922 = vmatpush2.msra.mxu0 0.0
        %923 = vmatprep.subr.mxu0 0.0
        %924 = vmatpush2.msra.mxu0 0.0
        %925 = vmatprep.subr.mxu0 0.0
        %926 = vmatpush2.msra.mxu0 0.0
        %927 = vmatprep.subr.mxu0 0.0
        %928 = vmatpush2.msra.mxu0 0.0
        %929 = vmatprep.subr.mxu0 0.0
        %930 = vmatpush2.msra.mxu0 0.0
        %931 = vmatprep.subr.mxu0 0.0
        %932 = vmatpush2.msra.mxu0 0.0
        %933 = vmatprep.subr.mxu0 0.0
        %934 = vmatpush2.msra.mxu0 0.0
        %935 = vmatprep.subr.mxu0 0.0
        %936 = vmatpush2.msra.mxu0 0.0
        %937 = vmatprep.mubr.f32.mxu0 0.0
        %938 = vmatmul.mubr.f32.gmra.mxu0 %v800
        %v939 = vpop.f32.mrf.mxu0
        %v940 = vadd.f32 %v796, %v939
        %v941 = vpop.f32.mrf.mxu0
        %v942 = vadd.f32 %v796, %v941
        %943 = vdwg.mxu0
        %944 = vmatprep.subr.mxu0 0.0
        %945 = vmatpush1.msra.mxu0 0.0
        %946 = vmatprep.subr.mxu0 0.0
        %947 = vmatpush1.msra.mxu0 0.0
        %948 = vmatprep.subr.mxu0 0.0
        %949 = vmatpush1.msra.mxu0 0.0
        %950 = vmatprep.subr.mxu0 0.0
        %951 = vmatpush1.msra.mxu0 0.0
        %952 = vmatprep.subr.mxu0 0.0
        %953 = vmatpush1.msra.mxu0 0.0
        %954 = vmatprep.subr.mxu0 0.0
        %955 = vmatpush1.msra.mxu0 0.0
        %956 = vmatprep.subr.mxu0 0.0
        %957 = vmatpush1.msra.mxu0 0.0
        %958 = vmatprep.subr.mxu0 %v789
        %959 = vmatpush1.msra.mxu0 %v788
        %960 = vmatprep.subr.mxu0 %v629
        %961 = vmatpush1.msra.mxu0 %v634
        %962 = vmatprep.subr.mxu0 %v781
        %963 = vmatpush1.msra.mxu0 %v780
        %964 = vmatprep.subr.mxu0 %v771
        %965 = vmatpush1.msra.mxu0 %v770
        %966 = vmatprep.subr.mxu0 %v634
        %967 = vmatpush1.msra.mxu0 %v633
        %968 = vmatprep.subr.mxu0 %v761
        %969 = vmatpush1.msra.mxu0 %v760
        %970 = vmatprep.subr.mxu0 %v749
        %971 = vmatpush1.msra.mxu0 %v748
        %972 = vmatprep.subr.mxu0 %v633
        %973 = vmatpush1.msra.mxu0 %v632
        %974 = vmatprep.subr.mxu0 %v691
        %975 = vmatpush1.msra.mxu0 %v690
        %976 = vmatprep.subr.mxu0 0.0
        %977 = vmatpush2.msra.mxu0 0.0
        %978 = vmatprep.subr.mxu0 0.0
        %979 = vmatpush2.msra.mxu0 0.0
        %980 = vmatprep.subr.mxu0 0.0
        %981 = vmatpush2.msra.mxu0 0.0
        %982 = vmatprep.subr.mxu0 0.0
        %983 = vmatpush2.msra.mxu0 0.0
        %984 = vmatprep.subr.mxu0 0.0
        %985 = vmatpush2.msra.mxu0 0.0
        %986 = vmatprep.subr.mxu0 0.0
        %987 = vmatpush2.msra.mxu0 0.0
        %988 = vmatprep.subr.mxu0 0.0
        %989 = vmatpush2.msra.mxu0 0.0
        %990 = vmatprep.subr.mxu0 0.0
        %991 = vmatpush2.msra.mxu0 0.0
        %992 = vmatprep.subr.mxu0 0.0
        %993 = vmatpush2.msra.mxu0 0.0
        %994 = vmatprep.subr.mxu0 0.0
        %995 = vmatpush2.msra.mxu0 0.0
        %996 = vmatprep.subr.mxu0 0.0
        %997 = vmatpush2.msra.mxu0 0.0
        %998 = vmatprep.subr.mxu0 0.0
        %999 = vmatpush2.msra.mxu0 0.0
        %1000 = vmatprep.subr.mxu0 0.0
        %1001 = vmatpush2.msra.mxu0 0.0
        %1002 = vmatprep.subr.mxu0 0.0
        %1003 = vmatpush2.msra.mxu0 0.0
        %1004 = vmatprep.subr.mxu0 0.0
        %1005 = vmatpush2.msra.mxu0 0.0
        %1006 = vmatprep.subr.mxu0 0.0
        %1007 = vmatpush2.msra.mxu0 0.0
        %1008 = vmatprep.mubr.f32.mxu0 0.0
        %1009 = vmatmul.mubr.f32.gmra.mxu0 %v800
        %v1010 = vpop.f32.mrf.mxu0
        %v1011 = vadd.f32 %v796, %v1010
        %v1012 = vpop.f32.mrf.mxu0
        %v1013 = vadd.f32 %v796, %v1012
        %1014 = vdwg.mxu0
        %1015 = vmatprep.subr.mxu0 0.0
        %1016 = vmatpush1.msra.mxu0 0.0
        %1017 = vmatprep.subr.mxu0 0.0
        %1018 = vmatpush1.msra.mxu0 0.0
        %1019 = vmatprep.subr.mxu0 0.0
        %1020 = vmatpush1.msra.mxu0 0.0
        %1021 = vmatprep.subr.mxu0 0.0
        %1022 = vmatpush1.msra.mxu0 0.0
        %1023 = vmatprep.subr.mxu0 0.0
        %1024 = vmatpush1.msra.mxu0 0.0
        %1025 = vmatprep.subr.mxu0 0.0
        %1026 = vmatpush1.msra.mxu0 0.0
        %1027 = vmatprep.subr.mxu0 0.0
        %1028 = vmatpush1.msra.mxu0 0.0
        %1029 = vmatprep.subr.mxu0 0.0
        %1030 = vmatpush1.msra.mxu0 %v790
        %1031 = vmatprep.subr.mxu0 0.0
        %1032 = vmatpush1.msra.mxu0 %v630
        %1033 = vmatprep.subr.mxu0 %v783
        %1034 = vmatpush1.msra.mxu0 %v782
        %1035 = vmatprep.subr.mxu0 %v773
        %1036 = vmatpush1.msra.mxu0 %v772
        %1037 = vmatprep.subr.mxu0 %v630
        %1038 = vmatpush1.msra.mxu0 %v629
        %1039 = vmatprep.subr.mxu0 %v763
        %1040 = vmatpush1.msra.mxu0 %v762
        %1041 = vmatprep.subr.mxu0 %v751
        %1042 = vmatpush1.msra.mxu0 %v750
        %1043 = vmatprep.subr.mxu0 %v629
        %1044 = vmatpush1.msra.mxu0 %v634
        %1045 = vmatprep.subr.mxu0 %v693
        %1046 = vmatpush1.msra.mxu0 %v692
        %1047 = vmatprep.subr.mxu0 0.0
        %1048 = vmatpush2.msra.mxu0 0.0
        %1049 = vmatprep.subr.mxu0 0.0
        %1050 = vmatpush2.msra.mxu0 0.0
        %1051 = vmatprep.subr.mxu0 0.0
        %1052 = vmatpush2.msra.mxu0 0.0
        %1053 = vmatprep.subr.mxu0 0.0
        %1054 = vmatpush2.msra.mxu0 0.0
        %1055 = vmatprep.subr.mxu0 0.0
        %1056 = vmatpush2.msra.mxu0 0.0
        %1057 = vmatprep.subr.mxu0 0.0
        %1058 = vmatpush2.msra.mxu0 0.0
        %1059 = vmatprep.subr.mxu0 0.0
        %1060 = vmatpush2.msra.mxu0 0.0
        %1061 = vmatprep.subr.mxu0 0.0
        %1062 = vmatpush2.msra.mxu0 0.0
        %1063 = vmatprep.subr.mxu0 0.0
        %1064 = vmatpush2.msra.mxu0 0.0
        %1065 = vmatprep.subr.mxu0 0.0
        %1066 = vmatpush2.msra.mxu0 0.0
        %1067 = vmatprep.subr.mxu0 0.0
        %1068 = vmatpush2.msra.mxu0 0.0
        %1069 = vmatprep.subr.mxu0 0.0
        %1070 = vmatpush2.msra.mxu0 0.0
        %1071 = vmatprep.subr.mxu0 0.0
        %1072 = vmatpush2.msra.mxu0 0.0
        %1073 = vmatprep.subr.mxu0 0.0
        %1074 = vmatpush2.msra.mxu0 0.0
        %1075 = vmatprep.subr.mxu0 0.0
        %1076 = vmatpush2.msra.mxu0 0.0
        %1077 = vmatprep.subr.mxu0 0.0
        %1078 = vmatpush2.msra.mxu0 0.0
        %1079 = vmatprep.mubr.f32.mxu0 0.0
        %1080 = vmatmul.mubr.f32.gmra.mxu0 %v800
        %v1081 = vpop.f32.mrf.mxu0
        %v1082 = vadd.f32 %v796, %v1081
        %v1083 = vpop.f32.mrf.mxu0
        %v1084 = vadd.f32 %v796, %v1083
        %1085 = vdwg.mxu0
        %v1086 = vmax.f32 %v869, 0.0
        %v1087 = vmax.f32 %v871, 0.0
        %v1088 = vmax.f32 %v940, 0.0
        %v1089 = vmax.f32 %v942, 0.0
        %v1090 = vmax.f32 %v1011, 0.0
        %v1091 = vmax.f32 %v1013, 0.0
        %v1092 = vmax.f32 %v1082, 0.0
        %v1093 = vmax.f32 %v1084, 0.0
        %v1094 = vsel %vm615, 1, 0
        %v1095 = vsel %vm616, 1, 0
        %v1096 = vsel %vm617, 1, 0
        %v1097 = vsel %vm618, 1, 0
        %v1098 = vsel %vm619, 1, 0
        %v1099 = vsel %vm620, 1, 0
        %v1100 = vsel %vm621, 1, 0
        %v1101 = vsel %vm622, 1, 0
        %vm1102 = vcmp.eq.s32.totalorder %v1094, 1
        %vm1103 = vcmp.eq.s32.totalorder %v1095, 1
        %vm1104 = vcmp.eq.s32.totalorder %v1096, 1
        %vm1105 = vcmp.eq.s32.totalorder %v1097, 1
        %vm1106 = vcmp.eq.s32.totalorder %v1098, 1
        %vm1107 = vcmp.eq.s32.totalorder %v1099, 1
        %vm1108 = vcmp.eq.s32.totalorder %v1100, 1
        %vm1109 = vcmp.eq.s32.totalorder %v1101, 1
        %v1110 = vsel %vm1102, 0.0, %v1086
        %v1111 = vsel %vm1103, 0.0, %v1087
        %v1112 = vsel %vm1104, 0.0, %v1088
        %v1113 = vsel %vm1105, 0.0, %v1089
        %v1114 = vsel %vm1106, 0.0, %v1090
        %v1115 = vsel %vm1107, 0.0, %v1091
        %v1116 = vsel %vm1108, 0.0, %v1092
        %v1117 = vsel %vm1109, 0.0, %v1093
        %1123 = vrot.lane.b32.xlu0 %v1110, 1
        %v1124 = vpop.permute.xlu0 %1123
        %1125 = vrot.lane.b32.xlu0 %v1111, 1
        %v1126 = vpop.permute.xlu0 %1125
        %1127 = vrot.lane.b32.xlu0 %v1112, 1
        %v1128 = vpop.permute.xlu0 %1127
        %1129 = vrot.lane.b32.xlu0 %v1113, 1
        %v1130 = vpop.permute.xlu0 %1129
        %1131 = vrot.lane.b32.xlu0 %v1114, 1
        %v1132 = vpop.permute.xlu0 %1131
        %v1133 = vsel %vm656, %v1124, %v1126
        %v1134 = vsel %vm656, %v1126, %v1128
        %v1135 = vsel %vm656, %v1128, %v1130
        %v1136 = vsel %vm656, %v1130, %v1132
        %v1141 = vsel %vm681, %v1133, 0.0
        %v1142 = vsel %vm682, %v1134, 0.0
        %v1143 = vsel %vm683, %v1135, 0.0
        %v1144 = vsel %vm684, %v1136, 0.0
        %1146 = vrot.lane.b32.xlu0 %v1111, 127
        %v1147 = vpop.permute.xlu0 %1146
        %1148 = vrot.lane.b32.xlu0 %v1112, 127
        %v1149 = vpop.permute.xlu0 %1148
        %1150 = vrot.lane.b32.xlu0 %v1113, 127
        %v1151 = vpop.permute.xlu0 %1150
        %1152 = vrot.lane.b32.xlu0 %v1114, 127
        %v1153 = vpop.permute.xlu0 %1152
        %1154 = vrot.lane.b32.xlu0 %v1115, 127
        %v1155 = vpop.permute.xlu0 %1154
        %v1156 = vsel %vm711, %v1147, %v1149
        %v1157 = vsel %vm711, %v1149, %v1151
        %v1158 = vsel %vm711, %v1151, %v1153
        %v1159 = vsel %vm711, %v1153, %v1155
        %v1164 = vsel %vm738, %v1156, 0.0
        %v1165 = vsel %vm739, %v1157, 0.0
        %v1166 = vsel %vm740, %v1158, 0.0
        %v1167 = vsel %vm741, %v1159, 0.0
        %1168 = vrot.lane.b32.xlu0 %v1115, 1
        %v1169 = vpop.permute.xlu0 %1168
        %v1170 = vsel %vm656, %v1132, %v1169
        %v1172 = vsel %vm681, %v1134, 0.0
        %v1173 = vsel %vm682, %v1135, 0.0
        %v1174 = vsel %vm683, %v1136, 0.0
        %v1175 = vsel %vm684, %v1170, 0.0
        %1177 = vrot.lane.b32.xlu0 %v1116, 127
        %v1178 = vpop.permute.xlu0 %1177
        %v1179 = vsel %vm711, %v1155, %v1178
        %v1181 = vsel %vm738, %v1157, 0.0
        %v1182 = vsel %vm739, %v1158, 0.0
        %v1183 = vsel %vm740, %v1159, 0.0
        %v1184 = vsel %vm741, %v1179, 0.0
        %1185 = vrot.lane.b32.xlu0 %v1116, 1
        %v1186 = vpop.permute.xlu0 %1185
        %v1187 = vsel %vm656, %v1169, %v1186
        %v1189 = vsel %vm681, %v1135, 0.0
        %v1190 = vsel %vm682, %v1136, 0.0
        %v1191 = vsel %vm683, %v1170, 0.0
        %v1192 = vsel %vm684, %v1187, 0.0
        %1194 = vrot.lane.b32.xlu0 %v1117, 127
        %v1195 = vpop.permute.xlu0 %1194
        %v1196 = vsel %vm711, %v1178, %v1195
        %v1198 = vsel %vm738, %v1158, 0.0
        %v1199 = vsel %vm739, %v1159, 0.0
        %v1200 = vsel %vm740, %v1179, 0.0
        %v1201 = vsel %vm741, %v1196, 0.0
        %v1202 = vld [vmem:[%s5] sm:$0xff]
        %v1203 = vld [vmem:[%s6] sm:$0xff]
        %1205 = vset.pattern.permute.xlu0 0
        %1206 = vperm.xlu0 %1205, %v1203
        %v1207 = vpop.permute.xlu0 %1206
        %v1210 = vsel %vm798, %v1202, 0
        %1212 = vmatprep.subr.mxu0 0.0
        %1213 = vmatpush1.msra.mxu0 0.0
        %1214 = vmatprep.subr.mxu0 0.0
        %1215 = vmatpush1.msra.mxu0 0.0
        %1216 = vmatprep.subr.mxu0 0.0
        %1217 = vmatpush1.msra.mxu0 0.0
        %1218 = vmatprep.subr.mxu0 0.0
        %1219 = vmatpush1.msra.mxu0 0.0
        %1220 = vmatprep.subr.mxu0 0.0
        %1221 = vmatpush1.msra.mxu0 0.0
        %1222 = vmatprep.subr.mxu0 0.0
        %1223 = vmatpush1.msra.mxu0 0.0
        %1224 = vmatprep.subr.mxu0 0.0
        %1225 = vmatpush1.msra.mxu0 0.0
        %1226 = vmatprep.subr.mxu0 %v1199
        %1227 = vmatpush1.msra.mxu0 %v1198
        %1228 = vmatprep.subr.mxu0 %v1114
        %1229 = vmatpush1.msra.mxu0 %v1113
        %1230 = vmatprep.subr.mxu0 %v1190
        %1231 = vmatpush1.msra.mxu0 %v1189
        %1232 = vmatprep.subr.mxu0 %v1182
        %1233 = vmatpush1.msra.mxu0 %v1181
        %1234 = vmatprep.subr.mxu0 %v1113
        %1235 = vmatpush1.msra.mxu0 %v1112
        %1236 = vmatprep.subr.mxu0 %v1173
        %1237 = vmatpush1.msra.mxu0 %v1172
        %1238 = vmatprep.subr.mxu0 %v1165
        %1239 = vmatpush1.msra.mxu0 %v1164
        %1240 = vmatprep.subr.mxu0 %v1112
        %1241 = vmatpush1.msra.mxu0 %v1111
        %1242 = vmatprep.subr.mxu0 %v1142
        %1243 = vmatpush1.msra.mxu0 %v1141
        %1244 = vmatprep.subr.mxu0 0.0
        %1245 = vmatpush2.msra.mxu0 0.0
        %1246 = vmatprep.subr.mxu0 0.0
        %1247 = vmatpush2.msra.mxu0 0.0
        %1248 = vmatprep.subr.mxu0 0.0
        %1249 = vmatpush2.msra.mxu0 0.0
        %1250 = vmatprep.subr.mxu0 0.0
        %1251 = vmatpush2.msra.mxu0 0.0
        %1252 = vmatprep.subr.mxu0 0.0
        %1253 = vmatpush2.msra.mxu0 0.0
        %1254 = vmatprep.subr.mxu0 0.0
        %1255 = vmatpush2.msra.mxu0 0.0
        %1256 = vmatprep.subr.mxu0 0.0
        %1257 = vmatpush2.msra.mxu0 0.0
        %1258 = vmatprep.subr.mxu0 0.0
        %1259 = vmatpush2.msra.mxu0 0.0
        %1260 = vmatprep.subr.mxu0 0.0
        %1261 = vmatpush2.msra.mxu0 0.0
        %1262 = vmatprep.subr.mxu0 0.0
        %1263 = vmatpush2.msra.mxu0 0.0
        %1264 = vmatprep.subr.mxu0 0.0
        %1265 = vmatpush2.msra.mxu0 0.0
        %1266 = vmatprep.subr.mxu0 0.0
        %1267 = vmatpush2.msra.mxu0 0.0
        %1268 = vmatprep.subr.mxu0 0.0
        %1269 = vmatpush2.msra.mxu0 0.0
        %1270 = vmatprep.subr.mxu0 0.0
        %1271 = vmatpush2.msra.mxu0 0.0
        %1272 = vmatprep.subr.mxu0 0.0
        %1273 = vmatpush2.msra.mxu0 0.0
        %1274 = vmatprep.subr.mxu0 0.0
        %1275 = vmatpush2.msra.mxu0 0.0
        %1276 = vmatprep.mubr.f32.mxu0 0.0
        %1277 = vmatmul.mubr.f32.gmra.mxu0 %v1210
        %v1278 = vpop.f32.mrf.mxu0
        %v1279 = vadd.f32 %v1207, %v1278
        %v1280 = vpop.f32.mrf.mxu0
        %v1281 = vadd.f32 %v1207, %v1280
        %1282 = vdwg.mxu0
        %1283 = vmatprep.subr.mxu0 0.0
        %1284 = vmatpush1.msra.mxu0 0.0
        %1285 = vmatprep.subr.mxu0 0.0
        %1286 = vmatpush1.msra.mxu0 0.0
        %1287 = vmatprep.subr.mxu0 0.0
        %1288 = vmatpush1.msra.mxu0 0.0
        %1289 = vmatprep.subr.mxu0 0.0
        %1290 = vmatpush1.msra.mxu0 0.0
        %1291 = vmatprep.subr.mxu0 0.0
        %1292 = vmatpush1.msra.mxu0 0.0
        %1293 = vmatprep.subr.mxu0 0.0
        %1294 = vmatpush1.msra.mxu0 0.0
        %1295 = vmatprep.subr.mxu0 0.0
        %1296 = vmatpush1.msra.mxu0 0.0
        %1297 = vmatprep.subr.mxu0 %v1201
        %1298 = vmatpush1.msra.mxu0 %v1200
        %1299 = vmatprep.subr.mxu0 %v1116
        %1300 = vmatpush1.msra.mxu0 %v1115
        %1301 = vmatprep.subr.mxu0 %v1192
        %1302 = vmatpush1.msra.mxu0 %v1191
        %1303 = vmatprep.subr.mxu0 %v1184
        %1304 = vmatpush1.msra.mxu0 %v1183
        %1305 = vmatprep.subr.mxu0 %v1115
        %1306 = vmatpush1.msra.mxu0 %v1114
        %1307 = vmatprep.subr.mxu0 %v1175
        %1308 = vmatpush1.msra.mxu0 %v1174
        %1309 = vmatprep.subr.mxu0 %v1167
        %1310 = vmatpush1.msra.mxu0 %v1166
        %1311 = vmatprep.subr.mxu0 %v1114
        %1312 = vmatpush1.msra.mxu0 %v1113
        %1313 = vmatprep.subr.mxu0 %v1144
        %1314 = vmatpush1.msra.mxu0 %v1143
        %1315 = vmatprep.subr.mxu0 0.0
        %1316 = vmatpush2.msra.mxu0 0.0
        %1317 = vmatprep.subr.mxu0 0.0
        %1318 = vmatpush2.msra.mxu0 0.0
        %1319 = vmatprep.subr.mxu0 0.0
        %1320 = vmatpush2.msra.mxu0 0.0
        %1321 = vmatprep.subr.mxu0 0.0
        %1322 = vmatpush2.msra.mxu0 0.0
        %1323 = vmatprep.subr.mxu0 0.0
        %1324 = vmatpush2.msra.mxu0 0.0
        %1325 = vmatprep.subr.mxu0 0.0
        %1326 = vmatpush2.msra.mxu0 0.0
        %1327 = vmatprep.subr.mxu0 0.0
        %1328 = vmatpush2.msra.mxu0 0.0
        %1329 = vmatprep.subr.mxu0 0.0
        %1330 = vmatpush2.msra.mxu0 0.0
        %1331 = vmatprep.subr.mxu0 0.0
        %1332 = vmatpush2.msra.mxu0 0.0
        %1333 = vmatprep.subr.mxu0 0.0
        %1334 = vmatpush2.msra.mxu0 0.0
        %1335 = vmatprep.subr.mxu0 0.0
        %1336 = vmatpush2.msra.mxu0 0.0
        %1337 = vmatprep.subr.mxu0 0.0
        %1338 = vmatpush2.msra.mxu0 0.0
        %1339 = vmatprep.subr.mxu0 0.0
        %1340 = vmatpush2.msra.mxu0 0.0
        %1341 = vmatprep.subr.mxu0 0.0
        %1342 = vmatpush2.msra.mxu0 0.0
        %1343 = vmatprep.subr.mxu0 0.0
        %1344 = vmatpush2.msra.mxu0 0.0
        %1345 = vmatprep.subr.mxu0 0.0
        %1346 = vmatpush2.msra.mxu0 0.0
        %1347 = vmatprep.mubr.f32.mxu0 0.0
        %1348 = vmatmul.mubr.f32.gmra.mxu0 %v1210
        %v1349 = vpop.f32.mrf.mxu0
        %v1350 = vadd.f32 %v1207, %v1349
        %v1351 = vpop.f32.mrf.mxu0
        %v1352 = vadd.f32 %v1207, %v1351
        %1353 = vdwg.mxu0
        %v1354 = vmax.f32 %v1279, 0.0
        %v1355 = vmax.f32 %v1281, 0.0
        %v1356 = vmax.f32 %v1350, 0.0
        %v1357 = vmax.f32 %v1352, 0.0
        %1358 = vst [vmem:[%s411] sm:$0xff] %v1354
        %1359 = vst [vmem:[%s411 + $0x8] sm:$0xff] %v1355
        %1360 = vst [vmem:[%s411 + $0x10] sm:$0xff] %v1356
        %1361 = vst [vmem:[%s411 + $0x18] sm:$0xff] %v1357
        %s1362 = sand.u32 %s229, 1
        %s1363 = scalar_lea.sflag [#allocation4], %s1362
        %s1364 = sand.u32 %s229, 1
        %s1365 = smul.addr %s1364, 32
        %s1366 = scalar_lea.vmem [#allocation8], %s1365
        // Predicated region
        $region61: #{tpu_custom_call.1} parent=47 // pred_check
          %p1367 = pneg %p239
        $region62: #{tpu_custom_call.1} parent=47 // pred_check_branch
          %1369 = sbr.rel (%p1367) target = $region64
        $region63: #{tpu_custom_call.1} parent=47 // pred_region
          %s1370 = smul.u32 4, %s32
          %s1372 = ssub.s32 512, 512
          %1373 = vsyncadd %s1363, %s1372
          %s1374 = smul.addr %s31, 8
          %s1375 = sadd.s32 %s1370, %s1374
          %s1376 = smul.addr %s1375, 128
          %s1377 = scalar_lea.hbm %s7, %s1376
          %s1379 = sshll.u32 %s1366, 4
          %s1380 = int_to_ptr.vmem [resolvable:$true] %s1379
          %1382 = dma.vmem_to_hbm [thread:$0]  %s1380, 512, %s1377, %s1363
        $region64: #{tpu_custom_call.1} parent=47 // pred_fallthru
          _
      $region48: #{tpu_custom_call.1} parent=5 // pred_fallthru
        _
      %p1383 = scmp.le.s32.totalorder 2, %s22
      // Predicated region
      $region65: #{tpu_custom_call.1} parent=5 // pred_check
        %p1384 = pneg %p1383
      $region66: #{tpu_custom_call.1} parent=5 // pred_check_branch
        %1386 = sbr.rel (%p1384) target = $region68
      $region67: #{tpu_custom_call.1} parent=5 // pred_region
        %s1387 = ssub.s32 %s22, 2
        // Predicated region
        $region69: #{tpu_custom_call.1} parent=67 // pred_check
          %p1388 = pneg %p245
        $region70: #{tpu_custom_call.1} parent=67 // pred_check_branch
          %1390 = sbr.rel (%p1388) target = $region72
        $region71: #{tpu_custom_call.1} parent=67 // pred_region
          %s1391 = sand.u32 %s230, 1
          %s1392 = scalar_lea.sflag [#allocation4], %s1391
          %s1393 = sand.u32 %s230, 1
          %s1394 = smul.addr %s1393, 32
          %s1395 = scalar_lea.vmem [#allocation8], %s1394
          %1396 = dma.done %s1392, 512
        $region72: #{tpu_custom_call.1} parent=67 // pred_fallthru
          _
      $region68: #{tpu_custom_call.1} parent=5 // pred_fallthru
        _
    $region6: #{tpu_custom_call.1} parent=1 // loop_footer
      %s26 = sadd.s32 1, %s22
    $region7: #{tpu_custom_call.1} parent=1 // loop_footer_branch
      %21 = sbr.rel target = $region3
    $region8: #{tpu_custom_call.1} parent=1 // loop_exit
      _
    %1397 = vsyncpa [#allocation3], 1
    %s1398 = scalar_lea.sflag [#allocation3], 1
    %1399 = vsyncpa %s1398, 1
    %1400 = vsyncpa [#allocation6], 1
    %s1401 = scalar_lea.sflag [#allocation6], 1
    %1402 = vsyncpa %s1401, 1
    %1403 = vsyncpa [#allocation4], 1
    %s1404 = scalar_lea.sflag [#allocation4], 1
    %1405 = vsyncpa %s1404, 1

</llo_original>
